<compile_context>
chip_gen: v7x
topology: tpu7x:2x2x1
jax: 0.10.0
libtpu: 0.0.40
codegen_flags: <defaults>
</compile_context>

<pallas_src>
import functools

import jax
import jax.numpy as jnp
from jax import lax
from jax.experimental import pallas as pl
from jax.experimental.pallas import tpu as pltpu


# ----------------------------- fused attention kernel ------------------------------
def attn_fused_kernel(x_ref, wq_ref, wkv_ref, wout_ref, bout_ref, o_ref,
                      k_scr, v_scr, *, heads, dim_head, scale):
    """x:(N, D) resident per batch element; o:(tq, D) per query tile."""
    t = pl.program_id(1)
    H, dh = heads, dim_head
    inner = H * dh
    tq = o_ref.shape[0]

    # ---- K/V projection: once per batch element, stays resident in VMEM scratch ----
    @pl.when(t == 0)
    def _():
        xb = x_ref[...].astype(jnp.bfloat16)                                  # (N, D)
        kv = jnp.dot(xb, wkv_ref[...],
                     preferred_element_type=jnp.float32).astype(jnp.bfloat16)  # (N, 2*inner)
        # Head split: static 32-lane slices of the wide result, stacked over heads.
        k_scr[...] = jnp.stack(
            [kv[:, h * dh:(h + 1) * dh] for h in range(H)], axis=0)           # (H, N, dh)
        v_scr[...] = jnp.stack(
            [kv[:, inner + h * dh:inner + (h + 1) * dh] for h in range(H)], axis=0)

    # ---- Q projection for this query tile (softmax scale folded into Q) ----
    row = pl.multiple_of(t * tq, tq)
    xq = x_ref[pl.ds(row, tq), :].astype(jnp.bfloat16)                        # (tq, D)
    qw = (jnp.dot(xq, wq_ref[...], preferred_element_type=jnp.float32)
          * scale).astype(jnp.bfloat16)                                       # (tq, inner)
    q3 = jnp.stack([qw[:, h * dh:(h + 1) * dh] for h in range(H)], axis=0)    # (H, tq, dh)

    # ---- scaled dot-product attention (batched over heads) ----
    k3 = k_scr[...]                                                           # (H, N, dh)
    v3 = v_scr[...]                                                           # (H, N, dh)
    dots = lax.dot_general(q3, k3, (((2,), (2,)), ((0,), (0,))),
                           preferred_element_type=jnp.float32)                # (H, tq, N) f32
    m = jnp.max(dots, axis=-1, keepdims=True)
    e = jnp.exp(dots - m)
    s = jnp.sum(e, axis=-1, keepdims=True)
    p = (e * pl.reciprocal(s, approx=True)).astype(jnp.bfloat16)              # (H, tq, N)
    ctx = lax.dot_general(p, v3, (((2,), (1,)), ((0,), (0,))),
                          preferred_element_type=jnp.float32)                 # (H, tq, dh)
    ctx = ctx.astype(jnp.bfloat16)

    # ---- to_out: concat heads along lanes -> ONE matmul with K = inner contraction ----
    ctx_flat = jnp.concatenate([ctx[h] for h in range(H)], axis=-1)           # (tq, inner)
    y = jnp.dot(ctx_flat, wout_ref[...],
                preferred_element_type=jnp.float32) + bout_ref[...]           # (tq, D)
    o_ref[...] = y.astype(o_ref.dtype)


# --------------------------------- Pallas wrapper -----------------------------------
def attention_forward(x, w_qkv, w_out, b_out, *, heads, dim_head, q_tile=None):
    B, N, D = x.shape
    inner = heads * dim_head
    assert w_qkv.shape == (3 * inner, D)
    assert w_out.shape == (D, inner)
    assert b_out.shape == (D,)

    tq = q_tile or min(N, 128)
    assert N % tq == 0 and tq % 8 == 0

    # Weight rearrangement OUTSIDE the kernel (PyTorch Linear layout -> matmul slabs).
    # w_qkv rows are ordered [Q(h0 d0..), ..., K(...), V(...)]  (chunk(3, dim=-1)).
    wq = w_qkv[:inner].T.astype(jnp.bfloat16)          # (D, inner)
    wkv = w_qkv[inner:].T.astype(jnp.bfloat16)         # (D, 2*inner): K cols then V cols
    wout = w_out.T.astype(jnp.bfloat16)                # (inner, D)
    bout = b_out.reshape(1, D).astype(jnp.float32)
    scale = float(dim_head) ** -0.5

    # Explicit VMEM budget: resident x block + double-buffered weights/out + K/V scratch
    # (lane-padded bf16) + f32 softmax intermediates + slack.
    lane = 128
    pad = lambda c: ((c + lane - 1) // lane) * lane
    vmem_bytes = int(
        2 * N * D * 4                          # x block (double-buffered, f32)
        + 2 * D * pad(inner) * 2               # wq
        + 2 * D * pad(2 * inner) * 2           # wkv
        + 2 * inner * pad(D) * 2               # wout
        + 2 * tq * pad(D) * 4                  # output block
        + 2 * heads * N * pad(dim_head) * 2    # K/V scratch (lane-padded bf16)
        + 6 * heads * tq * N * 4               # f32 (H, tq, N) softmax intermediates
        + (4 << 20))                           # slack
    vmem_bytes = min(vmem_bytes, 64 * 1024 * 1024)

    kernel = functools.partial(attn_fused_kernel,
                               heads=heads, dim_head=dim_head, scale=scale)
    return pl.pallas_call(
        kernel,
        out_shape=jax.ShapeDtypeStruct((B, N, D), x.dtype),
        grid=(B, N // tq),
        in_specs=[
            # x: full (N, D) slab per batch element, constant over the q-tile axis
            # -> stays VMEM-resident; the q tile is a sublane slice inside the kernel.
            pl.BlockSpec((None, N, D), lambda b, t: (b, 0, 0)),
            pl.BlockSpec((D, inner), lambda b, t: (0, 0)),
            pl.BlockSpec((D, 2 * inner), lambda b, t: (0, 0)),
            pl.BlockSpec((inner, D), lambda b, t: (0, 0)),
            pl.BlockSpec((1, D), lambda b, t: (0, 0)),
        ],
        out_specs=pl.BlockSpec((None, tq, D), lambda b, t: (b, t, 0)),
        scratch_shapes=[
            pltpu.VMEM((heads, N, dim_head), jnp.bfloat16),   # K (per-head layout)
            pltpu.VMEM((heads, N, dim_head), jnp.bfloat16),   # V
        ],
        compiler_params=pltpu.CompilerParams(
            dimension_semantics=("parallel", "arbitrary"),
            vmem_limit_bytes=vmem_bytes),
    )(x, wq, wkv, wout, bout)


# ------------------------- Pure-JAX reference (f32, PyTorch semantics) ---------------
def attention_reference(x, w_qkv, w_out, b_out, *, heads, dim_head):
    B, N, D = x.shape
    inner = heads * dim_head
    scale = float(dim_head) ** -0.5
    qkv = x @ w_qkv.T                                         # (B, N, 3*inner)
    q, k, v = jnp.split(qkv, 3, axis=-1)
    rearr = lambda t: t.reshape(B, N, heads, dim_head).transpose(0, 2, 1, 3)
    q, k, v = rearr(q), rearr(k), rearr(v)
    dots = jnp.einsum("bhnd,bhmd->bhnm", q, k) * scale
    attn = jax.nn.softmax(dots, axis=-1)
    out = jnp.einsum("bhnm,bhmd->bhnd", attn, v)
    out = out.transpose(0, 2, 1, 3).reshape(B, N, inner)
    return out @ w_out.T + b_out                              # Dropout(0.0) == identity


if __name__ == "__main__":
    # Small, TPU-friendly config: dim=128, heads=4, dim_head=32 -> inner=128.
    # N=256 with q_tile=128 exercises the K/V-resident multi-tile path.
    B, N, DIM = 2, 256, 128
    HEADS, DIM_HEAD = 4, 32
    INNER = HEADS * DIM_HEAD

    key = jax.random.PRNGKey(0)
    kx, kq, ko, kb = jax.random.split(key, 4)
    x = jax.random.normal(kx, (B, N, DIM), dtype=jnp.float32)
    # Parameters stored in PyTorch Linear layout (out_features, in_features).
    w_qkv = 0.02 * jax.random.normal(kq, (3 * INNER, DIM), dtype=jnp.float32)
    w_out = 0.02 * jax.random.normal(ko, (DIM, INNER), dtype=jnp.float32)
    b_out = 0.02 * jax.random.normal(kb, (DIM,), dtype=jnp.float32)

    out = attention_forward(x, w_qkv, w_out, b_out,
                            heads=HEADS, dim_head=DIM_HEAD, q_tile=128)
    out = jax.block_until_ready(out)

    ref = attention_reference(x, w_qkv, w_out, b_out, heads=HEADS, dim_head=DIM_HEAD)
    assert out.shape == (B, N, DIM)
    # bf16 MXU inputs / f32 accumulation + approx softmax reciprocal -> relaxed tolerance.
    assert jnp.allclose(out, ref, atol=1e-2, rtol=1e-2), \
        float(jnp.max(jnp.abs(out - ref)))

    print("KERNEL_OK")
</pallas_src>

<mosaic_0001>
module attributes {stable_mosaic.version = 11 : i64} {
  func.func @attn_fused_kernel(%arg0: i32, %arg1: i32, %arg2: memref<1x256x128xf32, #tpu.memory_space<vmem>>, %arg3: memref<128x128xbf16, #tpu.memory_space<vmem>>, %arg4: memref<128x256xbf16, #tpu.memory_space<vmem>>, %arg5: memref<128x128xbf16, #tpu.memory_space<vmem>>, %arg6: memref<1x128xf32, #tpu.memory_space<vmem>>, %arg7: memref<1x128x128xf32, #tpu.memory_space<vmem>>, %arg8: memref<4x256x32xbf16, #tpu.memory_space<vmem>>, %arg9: memref<4x256x32xbf16, #tpu.memory_space<vmem>>) attributes {dimension_semantics = [#tpu.dimension_semantics<parallel>, #tpu.dimension_semantics<arbitrary>], iteration_bounds = array<i64: 2, 2>, scalar_prefetch = 0 : i64, scratch_operands = 2 : i64, tpu.core_type = #tpu.core_type<tc>, window_params = [{transform_indices = @transform_0, window_bounds = array<i64: 1, 256, 128>}, {pipeline_mode = #tpu.pipeline_mode<synchronous>, transform_indices = @transform_1, window_bounds = array<i64: 128, 128>}, {pipeline_mode = #tpu.pipeline_mode<synchronous>, transform_indices = @transform_2, window_bounds = array<i64: 128, 256>}, {pipeline_mode = #tpu.pipeline_mode<synchronous>, transform_indices = @transform_3, window_bounds = array<i64: 128, 128>}, {pipeline_mode = #tpu.pipeline_mode<synchronous>, transform_indices = @transform_4, window_bounds = array<i64: 1, 128>}, {transform_indices = @transform_5, window_bounds = array<i64: 1, 128, 128>}]} {
    %c0_i32 = arith.constant 0 : i32
    %0 = arith.cmpi eq, %arg1, %c0_i32 : i32
    %1 = arith.extui %0 : i1 to i32
    %c0_i32_0 = arith.constant 0 : i32
    %2 = arith.cmpi ne, %1, %c0_i32_0 : i32
    scf.if %2 {
      %c0_23 = arith.constant 0 : index
      %c0_24 = arith.constant 0 : index
      %c0_25 = arith.constant 0 : index
      %56 = vector.load %arg2[%c0_23, %c0_24, %c0_25] : memref<1x256x128xf32, #tpu.memory_space<vmem>>, vector<1x256x128xf32>
      %57 = vector.shape_cast %56 : vector<1x256x128xf32> to vector<256x128xf32>
      %58 = arith.truncf %57 : vector<256x128xf32> to vector<256x128xbf16>
      %c0_26 = arith.constant 0 : index
      %c0_27 = arith.constant 0 : index
      %59 = vector.load %arg4[%c0_26, %c0_27] : memref<128x256xbf16, #tpu.memory_space<vmem>>, vector<128x256xbf16>
      %cst_28 = arith.constant dense<0.000000e+00> : vector<256x256xf32>
      %60 = tpu.matmul %58, %59, %cst_28 {dimension_numbers = #tpu.dot_dimension_numbers<[1], [0], [0], [1], [0, 0, 1, 1], [], []>} : vector<256x128xbf16>, vector<128x256xbf16>, vector<256x256xf32> -> vector<256x256xf32>
      %61 = arith.truncf %60 : vector<256x256xf32> to vector<256x256xbf16>
      %62 = vector.extract_strided_slice %61 {offsets = [0, 0], sizes = [256, 32], strides = [1, 1]} : vector<256x256xbf16> to vector<256x32xbf16>
      %63 = vector.extract_strided_slice %61 {offsets = [0, 32], sizes = [256, 32], strides = [1, 1]} : vector<256x256xbf16> to vector<256x32xbf16>
      %64 = vector.extract_strided_slice %61 {offsets = [0, 64], sizes = [256, 32], strides = [1, 1]} : vector<256x256xbf16> to vector<256x32xbf16>
      %65 = vector.extract_strided_slice %61 {offsets = [0, 96], sizes = [256, 32], strides = [1, 1]} : vector<256x256xbf16> to vector<256x32xbf16>
      %66 = vector.shape_cast %62 : vector<256x32xbf16> to vector<1x256x32xbf16>
      %67 = vector.shape_cast %63 : vector<256x32xbf16> to vector<1x256x32xbf16>
      %68 = vector.shape_cast %64 : vector<256x32xbf16> to vector<1x256x32xbf16>
      %69 = vector.shape_cast %65 : vector<256x32xbf16> to vector<1x256x32xbf16>
      %70 = tpu.concatenate %66, %67, %68, %69 in 0 : vector<1x256x32xbf16>, vector<1x256x32xbf16>, vector<1x256x32xbf16>, vector<1x256x32xbf16> -> vector<4x256x32xbf16>
      %c0_29 = arith.constant 0 : index
      %c0_30 = arith.constant 0 : index
      %c0_31 = arith.constant 0 : index
      %71 = vector.load %arg8[%c0_29, %c0_30, %c0_31] : memref<4x256x32xbf16, #tpu.memory_space<vmem>>, vector<4x256x32xbf16>
      tpu.vector_store %arg8[%c0_29, %c0_30, %c0_31], %70 {strides = array<i32>} : memref<4x256x32xbf16, #tpu.memory_space<vmem>>, vector<4x256x32xbf16>,
      %72 = vector.extract_strided_slice %61 {offsets = [0, 128], sizes = [256, 32], strides = [1, 1]} : vector<256x256xbf16> to vector<256x32xbf16>
      %73 = vector.extract_strided_slice %61 {offsets = [0, 160], sizes = [256, 32], strides = [1, 1]} : vector<256x256xbf16> to vector<256x32xbf16>
      %74 = vector.extract_strided_slice %61 {offsets = [0, 192], sizes = [256, 32], strides = [1, 1]} : vector<256x256xbf16> to vector<256x32xbf16>
      %75 = vector.extract_strided_slice %61 {offsets = [0, 224], sizes = [256, 32], strides = [1, 1]} : vector<256x256xbf16> to vector<256x32xbf16>
      %76 = vector.shape_cast %72 : vector<256x32xbf16> to vector<1x256x32xbf16>
      %77 = vector.shape_cast %73 : vector<256x32xbf16> to vector<1x256x32xbf16>
      %78 = vector.shape_cast %74 : vector<256x32xbf16> to vector<1x256x32xbf16>
      %79 = vector.shape_cast %75 : vector<256x32xbf16> to vector<1x256x32xbf16>
      %80 = tpu.concatenate %76, %77, %78, %79 in 0 : vector<1x256x32xbf16>, vector<1x256x32xbf16>, vector<1x256x32xbf16>, vector<1x256x32xbf16> -> vector<4x256x32xbf16>
      %c0_32 = arith.constant 0 : index
      %c0_33 = arith.constant 0 : index
      %c0_34 = arith.constant 0 : index
      %81 = vector.load %arg9[%c0_32, %c0_33, %c0_34] : memref<4x256x32xbf16, #tpu.memory_space<vmem>>, vector<4x256x32xbf16>
      tpu.vector_store %arg9[%c0_32, %c0_33, %c0_34], %80 {strides = array<i32>} : memref<4x256x32xbf16, #tpu.memory_space<vmem>>, vector<4x256x32xbf16>,
    } else {
    }
    %c128_i32 = arith.constant 128 : i32
    %3 = arith.muli %arg1, %c128_i32 : i32
    %4 = tpu.assume_multiple %3, 128 : i32
    %c0 = arith.constant 0 : index
    %5 = arith.index_cast %4 : i32 to index
    %c0_1 = arith.constant 0 : index
    %6 = vector.load %arg2[%c0, %5, %c0_1] : memref<1x256x128xf32, #tpu.memory_space<vmem>>, vector<1x128x128xf32>
    %7 = vector.shape_cast %6 : vector<1x128x128xf32> to vector<128x128xf32>
    %8 = arith.truncf %7 : vector<128x128xf32> to vector<128x128xbf16>
    %c0_2 = arith.constant 0 : index
    %c0_3 = arith.constant 0 : index
    %9 = vector.load %arg3[%c0_2, %c0_3] : memref<128x128xbf16, #tpu.memory_space<vmem>>, vector<128x128xbf16>
    %cst = arith.constant dense<0.000000e+00> : vector<128x128xf32>
    %10 = tpu.matmul %8, %9, %cst {dimension_numbers = #tpu.dot_dimension_numbers<[1], [0], [0], [1], [0, 0, 1, 1], [], []>} : vector<128x128xbf16>, vector<128x128xbf16>, vector<128x128xf32> -> vector<128x128xf32>
    %cst_4 = arith.constant 0.176776692 : f32
    %11 = vector.broadcast %cst_4 : f32 to vector<128x128xf32>
    %12 = arith.mulf %10, %11 : vector<128x128xf32>
    %13 = arith.truncf %12 : vector<128x128xf32> to vector<128x128xbf16>
    %14 = vector.extract_strided_slice %13 {offsets = [0, 0], sizes = [128, 32], strides = [1, 1]} : vector<128x128xbf16> to vector<128x32xbf16>
    %15 = vector.extract_strided_slice %13 {offsets = [0, 32], sizes = [128, 32], strides = [1, 1]} : vector<128x128xbf16> to vector<128x32xbf16>
    %16 = vector.extract_strided_slice %13 {offsets = [0, 64], sizes = [128, 32], strides = [1, 1]} : vector<128x128xbf16> to vector<128x32xbf16>
    %17 = vector.extract_strided_slice %13 {offsets = [0, 96], sizes = [128, 32], strides = [1, 1]} : vector<128x128xbf16> to vector<128x32xbf16>
    %18 = vector.shape_cast %14 : vector<128x32xbf16> to vector<1x128x32xbf16>
    %19 = vector.shape_cast %15 : vector<128x32xbf16> to vector<1x128x32xbf16>
    %20 = vector.shape_cast %16 : vector<128x32xbf16> to vector<1x128x32xbf16>
    %21 = vector.shape_cast %17 : vector<128x32xbf16> to vector<1x128x32xbf16>
    %22 = tpu.concatenate %18, %19, %20, %21 in 0 : vector<1x128x32xbf16>, vector<1x128x32xbf16>, vector<1x128x32xbf16>, vector<1x128x32xbf16> -> vector<4x128x32xbf16>
    %c0_5 = arith.constant 0 : index
    %c0_6 = arith.constant 0 : index
    %c0_7 = arith.constant 0 : index
    %23 = vector.load %arg8[%c0_5, %c0_6, %c0_7] : memref<4x256x32xbf16, #tpu.memory_space<vmem>>, vector<4x256x32xbf16>
    %c0_8 = arith.constant 0 : index
    %c0_9 = arith.constant 0 : index
    %c0_10 = arith.constant 0 : index
    %24 = vector.load %arg9[%c0_8, %c0_9, %c0_10] : memref<4x256x32xbf16, #tpu.memory_space<vmem>>, vector<4x256x32xbf16>
    %cst_11 = arith.constant dense<0.000000e+00> : vector<4x128x256xf32>
    %25 = tpu.matmul %22, %23, %cst_11 {dimension_numbers = #tpu.dot_dimension_numbers<[2], [2], [1], [1], [0, 0, 0, 1, 1, 1], [0], [0]>} : vector<4x128x32xbf16>, vector<4x256x32xbf16>, vector<4x128x256xf32> -> vector<4x128x256xf32>
    %cst_12 = arith.constant dense<0xFF800000> : vector<4x128xf32>
    %26 = vector.multi_reduction <maximumf>, %25, %cst_12 [2] : vector<4x128x256xf32> to vector<4x128xf32>
    %27 = vector.shape_cast %26 : vector<4x128xf32> to vector<4x128x1xf32>
    %28 = vector.broadcast %27 : vector<4x128x1xf32> to vector<4x128x256xf32>
    %29 = arith.subf %25, %28 : vector<4x128x256xf32>
    %30 = math.exp %29 : vector<4x128x256xf32>
    %cst_13 = arith.constant dense<0.000000e+00> : vector<4x128xf32>
    %31 = vector.multi_reduction <add>, %30, %cst_13 [2] : vector<4x128x256xf32> to vector<4x128xf32>
    %32 = vector.shape_cast %31 : vector<4x128xf32> to vector<4x128x1xf32>
    %33 = tpu.reciprocal %32 {approx = true} : vector<4x128x1xf32> -> vector<4x128x1xf32>
    %34 = vector.broadcast %33 : vector<4x128x1xf32> to vector<4x128x256xf32>
    %35 = arith.mulf %30, %34 : vector<4x128x256xf32>
    %36 = arith.truncf %35 : vector<4x128x256xf32> to vector<4x128x256xbf16>
    %cst_14 = arith.constant dense<0.000000e+00> : vector<4x128x32xf32>
    %37 = tpu.matmul %36, %24, %cst_14 {dimension_numbers = #tpu.dot_dimension_numbers<[2], [1], [1], [2], [0, 0, 0, 1, 1, 2], [0], [0]>} : vector<4x128x256xbf16>, vector<4x256x32xbf16>, vector<4x128x32xf32> -> vector<4x128x32xf32>
    %38 = arith.truncf %37 : vector<4x128x32xf32> to vector<4x128x32xbf16>
    %39 = vector.extract_strided_slice %38 {offsets = [0, 0, 0], sizes = [1, 128, 32], strides = [1, 1, 1]} : vector<4x128x32xbf16> to vector<1x128x32xbf16>
    %40 = vector.shape_cast %39 : vector<1x128x32xbf16> to vector<128x32xbf16>
    %41 = vector.extract_strided_slice %38 {offsets = [1, 0, 0], sizes = [1, 128, 32], strides = [1, 1, 1]} : vector<4x128x32xbf16> to vector<1x128x32xbf16>
    %42 = vector.shape_cast %41 : vector<1x128x32xbf16> to vector<128x32xbf16>
    %43 = vector.extract_strided_slice %38 {offsets = [2, 0, 0], sizes = [1, 128, 32], strides = [1, 1, 1]} : vector<4x128x32xbf16> to vector<1x128x32xbf16>
    %44 = vector.shape_cast %43 : vector<1x128x32xbf16> to vector<128x32xbf16>
    %45 = vector.extract_strided_slice %38 {offsets = [3, 0, 0], sizes = [1, 128, 32], strides = [1, 1, 1]} : vector<4x128x32xbf16> to vector<1x128x32xbf16>
    %46 = vector.shape_cast %45 : vector<1x128x32xbf16> to vector<128x32xbf16>
    %47 = tpu.concatenate %40, %42, %44, %46 in 1 : vector<128x32xbf16>, vector<128x32xbf16>, vector<128x32xbf16>, vector<128x32xbf16> -> vector<128x128xbf16>
    %c0_15 = arith.constant 0 : index
    %c0_16 = arith.constant 0 : index
    %48 = vector.load %arg5[%c0_15, %c0_16] : memref<128x128xbf16, #tpu.memory_space<vmem>>, vector<128x128xbf16>
    %cst_17 = arith.constant dense<0.000000e+00> : vector<128x128xf32>
    %49 = tpu.matmul %47, %48, %cst_17 {dimension_numbers = #tpu.dot_dimension_numbers<[1], [0], [0], [1], [0, 0, 1, 1], [], []>} : vector<128x128xbf16>, vector<128x128xbf16>, vector<128x128xf32> -> vector<128x128xf32>
    %c0_18 = arith.constant 0 : index
    %c0_19 = arith.constant 0 : index
    %50 = vector.load %arg6[%c0_18, %c0_19] : memref<1x128xf32, #tpu.memory_space<vmem>>, vector<1x128xf32>
    %51 = vector.broadcast %50 : vector<1x128xf32> to vector<128x128xf32>
    %52 = arith.addf %49, %51 : vector<128x128xf32>
    %c0_20 = arith.constant 0 : index
    %c0_21 = arith.constant 0 : index
    %c0_22 = arith.constant 0 : index
    %53 = vector.load %arg7[%c0_20, %c0_21, %c0_22] : memref<1x128x128xf32, #tpu.memory_space<vmem>>, vector<1x128x128xf32>
    %54 = vector.shape_cast %53 : vector<1x128x128xf32> to vector<128x128xf32>
    %55 = vector.shape_cast %52 : vector<128x128xf32> to vector<1x128x128xf32>
    tpu.vector_store %arg7[%c0_20, %c0_21, %c0_22], %55 {strides = array<i32>} : memref<1x128x128xf32, #tpu.memory_space<vmem>>, vector<1x128x128xf32>,
    return
  }
  func.func @transform_0(%arg0: i32, %arg1: i32) -> (i32, i32, i32) {
    %c0_i32 = arith.constant 0 : i32
    %c0_i32_0 = arith.constant 0 : i32
    %c0_i32_1 = arith.constant 0 : i32
    return %arg0, %c0_i32, %c0_i32_0 : i32, i32, i32
  }
  func.func @transform_1(%arg0: i32, %arg1: i32) -> (i32, i32) {
    %c0_i32 = arith.constant 0 : i32
    %c0_i32_0 = arith.constant 0 : i32
    %c0_i32_1 = arith.constant 0 : i32
    return %c0_i32, %c0_i32_0 : i32, i32
  }
  func.func @transform_2(%arg0: i32, %arg1: i32) -> (i32, i32) {
    %c0_i32 = arith.constant 0 : i32
    %c0_i32_0 = arith.constant 0 : i32
    %c0_i32_1 = arith.constant 0 : i32
    return %c0_i32, %c0_i32_0 : i32, i32
  }
  func.func @transform_3(%arg0: i32, %arg1: i32) -> (i32, i32) {
    %c0_i32 = arith.constant 0 : i32
    %c0_i32_0 = arith.constant 0 : i32
    %c0_i32_1 = arith.constant 0 : i32
    return %c0_i32, %c0_i32_0 : i32, i32
  }
  func.func @transform_4(%arg0: i32, %arg1: i32) -> (i32, i32) {
    %c0_i32 = arith.constant 0 : i32
    %c0_i32_0 = arith.constant 0 : i32
    %c0_i32_1 = arith.constant 0 : i32
    return %c0_i32, %c0_i32_0 : i32, i32
  }
  func.func @transform_5(%arg0: i32, %arg1: i32) -> (i32, i32, i32) {
    %c0_i32 = arith.constant 0 : i32
    %c0_i32_0 = arith.constant 0 : i32
    return %arg0, %arg1, %c0_i32 : i32, i32, i32
  }
}

</mosaic_0001>

<llo_original>
// kernel: tpu_custom_call.1
$region0: #{tpu_custom_call.1}
  #allocation0 [shape = 'u32[]', space=smem, size = 0x4, offset = 0x4, fixed_abs, tag = 'smem constant byte address 0x4 - core index']
  #allocation1 [shape = 'u32[144,128]{1,0:T(1,128)}', space=vmem, size = 0x12000, scoped, tag = 'internal scratch']
  #allocation2 [shape = 'bf16[4,256,32]{2,1,0:T(16,128)(2,1)}', space=vmem, size = 0x40000, scoped, tag = 'scratch operand']
  #allocation3 [shape = 'bf16[4,256,32]{2,1,0:T(16,128)(2,1)}', space=vmem, size = 0x40000, scoped, tag = 'scratch operand']
  %s0 = inlined_call_operand.hbm [shape: f32[2,256,128], index: 0, kind: input, shape index: {}]
  %s1 = inlined_call_operand.hbm [shape: bf16[128,128], index: 1, kind: input, shape index: {}]
  %s2 = inlined_call_operand.hbm [shape: bf16[128,256], index: 2, kind: input, shape index: {}]
  %s3 = inlined_call_operand.hbm [shape: bf16[128,128], index: 3, kind: input, shape index: {}]
  %s4 = inlined_call_operand.vmem [shape: f32[1,128], index: 4, kind: input, shape index: {}]
  %s5 = inlined_call_operand.hbm [shape: f32[2,256,128], index: 5, kind: output, shape index: {}]
  %s6 = sld [smem:[#allocation0]]
  $region73: #{tpu_custom_call.1} parent=0
    _
  %s8 = ssub.s32 1, %s6
  %s9 = scalar_select 0, %s8, %s6
  $region1: #{tpu_custom_call.1} parent=0
    #allocation4 [shape = 'u8[262144]{0}', space=vmem, size = 0x40000, scoped, tag = 'input window, operand 0']
    #allocation5 [shape = 's32[2]{0}', space=sflag, size = 0x8, scoped, tag = 'scoped memory for tpu_custom_call.1']
    #allocation6 [shape = 's32[2]{0}', space=sflag, size = 0x8, scoped, tag = 'scoped memory for tpu_custom_call.1']
    #allocation7 [shape = 'u8[32768]{0}', space=vmem, size = 0x8000, scoped, tag = 'input window, operand 1, single buffered']
    #allocation8 [shape = 's32[1]{0}', space=sflag, size = 0x4, scoped, tag = 'scoped memory for tpu_custom_call.1']
    #allocation9 [shape = 'u8[65536]{0}', space=vmem, size = 0x10000, scoped, tag = 'input window, operand 2, single buffered']
    #allocation10 [shape = 'u8[32768]{0}', space=vmem, size = 0x8000, scoped, tag = 'input window, operand 3, single buffered']
    #allocation11 [shape = 's32[1]{0}', space=sflag, size = 0x4, scoped, tag = 'scoped memory for tpu_custom_call.1']
    #allocation12 [shape = 'u8[131072]{0}', space=vmem, size = 0x20000, scoped, tag = 'output window, operand 0']
    %10 = vsyncpa [#allocation5], 0
    %s11 = scalar_lea.sflag [#allocation5], 1
    %12 = vsyncpa %s11, 0
    %13 = vsyncpa [#allocation8], 0
    %14 = vsyncpa [#allocation11], 0
    %15 = vsyncpa [#allocation6], 0
    %s16 = scalar_lea.sflag [#allocation6], 1
    %17 = vsyncpa %s16, 0
    loop: start=0, step=1, limit=6
    $region2: #{tpu_custom_call.1} parent=1 // loop_pre_header
      _
    $region3: #{tpu_custom_call.1} parent=1 // loop_header
      %s19 = sphi 0, %s23
      %p20 = scmp.ge.s32.totalorder %s19, 6
      %s26 = sphi 0, %s38
      %s27 = sphi 0, %s34
      %s28 = sphi 0, %s26
      %s29 = sphi 0, %s27
      %s30 = sphi 0, %s28
      %s31 = sphi 0, %s29
      %s41 = sphi 0, %s43
      %s44 = sphi 0, %s41
      %s45 = sphi 0, %s44
      %s61 = sphi 0, %s45
      %s65 = sphi 0, %s65
      %s67 = sphi 0, %s65
      %s68 = sphi 0, %s67
      %s82 = sphi 0, %s68
      %s86 = sphi 0, %s86
      %s88 = sphi 0, %s86
      %s89 = sphi 0, %s88
      %s103 = sphi 0, %s89
      %s107 = sphi 0, %s107
      %s109 = sphi 0, %s107
      %s110 = sphi 0, %s109
      %s124 = sphi 0, %s110
      %s128 = sphi 0, %s128
      %s130 = sphi 0, %s128
      %s131 = sphi 0, %s130
      %s145 = sphi 0, %s131
      %s153 = sphi 0, %s155
      %s156 = sphi 0, %s153
      %s157 = sphi 0, %s156
      %s173 = sphi 0, %s157
    $region4: #{tpu_custom_call.1} parent=1 // loop_header_branch
      %22 = sbr.rel (%p20) target = $region8
    $region5: #{tpu_custom_call.1} parent=1 // loop_body
      %s24 = ssub.s32 %s19, 1
      %s25 = ssub.s32 %s19, 2
      %s32 = sadd.s32 1, %s27
      %p33 = scmp.ge.s32.totalorder %s32, 2
      %s34 = scalar_select %p33, 0, %s32
      %s35 = sadd.s32 1, %s26
      %s36 = scalar_select %p33, %s35, %s26
      %p37 = scmp.ge.s32.totalorder %s36, 2
      %s38 = scalar_select %p37, 0, %s36
      %s39 = ssub.s32 %s26, %s38
      %p40 = scmp.eq.s32.totalorder %s39, 0
      %s42 = sadd.s32 %s41, 1
      %s43 = scalar_select %p40, %s41, %s42
      %p46 = pneg %p40
      %p47 = scmp.eq.s32.totalorder %s19, 3
      %p48 = por %p46, %p47
      %p49 = scmp.ne.s32.totalorder %s41, %s44
      %p50 = scmp.eq.s32.totalorder %s19, 0
      %p51 = por %p49, %p50
      %p52 = scmp.ne.s32.totalorder %s41, %s44
      %p53 = scmp.eq.s32.totalorder %s24, 3
      %p54 = por %p52, %p53
      %p55 = scmp.ne.s32.totalorder %s44, %s45
      %p56 = scmp.eq.s32.totalorder %s24, 0
      %p57 = por %p55, %p56
      %p58 = scmp.ne.s32.totalorder %s44, %s45
      %p59 = scmp.eq.s32.totalorder %s25, 3
      %p60 = por %p58, %p59
      %p62 = scmp.ne.s32.totalorder %s45, %s61
      %p63 = scmp.eq.s32.totalorder %s25, 0
      %p64 = por %p62, %p63
      %s66 = sadd.s32 %s65, 1
      %p69 = scmp.eq.s32.totalorder %s19, 3
      %p70 = scmp.ne.s32.totalorder %s65, %s67
      %p71 = scmp.eq.s32.totalorder %s19, 0
      %p72 = por %p70, %p71
      %p73 = scmp.ne.s32.totalorder %s65, %s67
      %p74 = scmp.eq.s32.totalorder %s24, 3
      %p75 = por %p73, %p74
      %p76 = scmp.ne.s32.totalorder %s67, %s68
      %p77 = scmp.eq.s32.totalorder %s24, 0
      %p78 = por %p76, %p77
      %p79 = scmp.ne.s32.totalorder %s67, %s68
      %p80 = scmp.eq.s32.totalorder %s25, 3
      %p81 = por %p79, %p80
      %p83 = scmp.ne.s32.totalorder %s68, %s82
      %p84 = scmp.eq.s32.totalorder %s25, 0
      %p85 = por %p83, %p84
      %s87 = sadd.s32 %s86, 1
      %p90 = scmp.eq.s32.totalorder %s19, 3
      %p91 = scmp.ne.s32.totalorder %s86, %s88
      %p92 = scmp.eq.s32.totalorder %s19, 0
      %p93 = por %p91, %p92
      %p94 = scmp.ne.s32.totalorder %s86, %s88
      %p95 = scmp.eq.s32.totalorder %s24, 3
      %p96 = por %p94, %p95
      %p97 = scmp.ne.s32.totalorder %s88, %s89
      %p98 = scmp.eq.s32.totalorder %s24, 0
      %p99 = por %p97, %p98
      %p100 = scmp.ne.s32.totalorder %s88, %s89
      %p101 = scmp.eq.s32.totalorder %s25, 3
      %p102 = por %p100, %p101
      %p104 = scmp.ne.s32.totalorder %s89, %s103
      %p105 = scmp.eq.s32.totalorder %s25, 0
      %p106 = por %p104, %p105
      %s108 = sadd.s32 %s107, 1
      %p111 = scmp.eq.s32.totalorder %s19, 3
      %p112 = scmp.ne.s32.totalorder %s107, %s109
      %p113 = scmp.eq.s32.totalorder %s19, 0
      %p114 = por %p112, %p113
      %p115 = scmp.ne.s32.totalorder %s107, %s109
      %p116 = scmp.eq.s32.totalorder %s24, 3
      %p117 = por %p115, %p116
      %p118 = scmp.ne.s32.totalorder %s109, %s110
      %p119 = scmp.eq.s32.totalorder %s24, 0
      %p120 = por %p118, %p119
      %p121 = scmp.ne.s32.totalorder %s109, %s110
      %p122 = scmp.eq.s32.totalorder %s25, 3
      %p123 = por %p121, %p122
      %p125 = scmp.ne.s32.totalorder %s110, %s124
      %p126 = scmp.eq.s32.totalorder %s25, 0
      %p127 = por %p125, %p126
      %s129 = sadd.s32 %s128, 1
      %p132 = scmp.eq.s32.totalorder %s19, 3
      %p133 = scmp.ne.s32.totalorder %s128, %s130
      %p134 = scmp.eq.s32.totalorder %s19, 0
      %p135 = por %p133, %p134
      %p136 = scmp.ne.s32.totalorder %s128, %s130
      %p137 = scmp.eq.s32.totalorder %s24, 3
      %p138 = por %p136, %p137
      %p139 = scmp.ne.s32.totalorder %s130, %s131
      %p140 = scmp.eq.s32.totalorder %s24, 0
      %p141 = por %p139, %p140
      %p142 = scmp.ne.s32.totalorder %s130, %s131
      %p143 = scmp.eq.s32.totalorder %s25, 3
      %p144 = por %p142, %p143
      %p146 = scmp.ne.s32.totalorder %s131, %s145
      %p147 = scmp.eq.s32.totalorder %s25, 0
      %p148 = por %p146, %p147
      %s149 = ssub.s32 %s26, %s38
      %s150 = ssub.s32 %s27, %s34
      %s151 = sor.u32 %s149, %s150
      %p152 = scmp.eq.s32.totalorder %s151, 0
      %s154 = sadd.s32 %s153, 1
      %s155 = scalar_select %p152, %s153, %s154
      %p158 = pneg %p152
      %p159 = scmp.eq.s32.totalorder %s19, 3
      %p160 = por %p158, %p159
      %p161 = scmp.ne.s32.totalorder %s153, %s156
      %p162 = scmp.eq.s32.totalorder %s19, 0
      %p163 = por %p161, %p162
      %p164 = scmp.ne.s32.totalorder %s153, %s156
      %p165 = scmp.eq.s32.totalorder %s24, 3
      %p166 = por %p164, %p165
      %p167 = scmp.ne.s32.totalorder %s156, %s157
      %p168 = scmp.eq.s32.totalorder %s24, 0
      %p169 = por %p167, %p168
      %p170 = scmp.ne.s32.totalorder %s156, %s157
      %p171 = scmp.eq.s32.totalorder %s25, 3
      %p172 = por %p170, %p171
      %p174 = scmp.ne.s32.totalorder %s157, %s173
      %p175 = scmp.eq.s32.totalorder %s25, 0
      %p176 = por %p174, %p175
      %p177 = scmp.le.s32.totalorder 1, %s19
      %p178 = scmp.lt.s32.totalorder %s19, 5
      %p179 = pnand %p177, %p178
      %p180 = pneg %p179
      // Predicated region
      $region9: #{tpu_custom_call.1} parent=5 // pred_check
        _
      $region10: #{tpu_custom_call.1} parent=5 // pred_check_branch
        %182 = sbr.rel (%p179) target = $region12
      $region11: #{tpu_custom_call.1} parent=5 // pred_region
        %s183 = ssub.s32 %s19, 1
        // Predicated region
        $region13: #{tpu_custom_call.1} parent=11 // pred_check
          %p184 = pneg %p78
        $region14: #{tpu_custom_call.1} parent=11 // pred_check_branch
          %186 = sbr.rel (%p184) target = $region16
        $region15: #{tpu_custom_call.1} parent=11 // pred_region
          %s188 = ssub.s32 1024, 1024
          %189 = vsyncadd [#allocation8], %s188
          %s190 = sshll.u32 [#allocation7], 4
          %s191 = int_to_ptr.vmem [resolvable:$true] %s190
          %196 = dma.hbm_to_vmem [thread:$0]  %s1, 1024, %s191, [#allocation8], 64, 64, 4
        $region16: #{tpu_custom_call.1} parent=11 // pred_fallthru
          _
        // Predicated region
        $region17: #{tpu_custom_call.1} parent=11 // pred_check
          %p197 = pneg %p99
        $region18: #{tpu_custom_call.1} parent=11 // pred_check_branch
          %199 = sbr.rel (%p197) target = $region20
        $region19: #{tpu_custom_call.1} parent=11 // pred_region
          %s201 = ssub.s32 2048, 2048
          %202 = vsyncadd [#allocation8], %s201
          %s203 = sshll.u32 [#allocation9], 4
          %s204 = int_to_ptr.vmem [resolvable:$true] %s203
          %209 = dma.hbm_to_vmem [thread:$0]  %s2, 2048, %s204, [#allocation8], 128, 128, 8
        $region20: #{tpu_custom_call.1} parent=11 // pred_fallthru
          _
        // Predicated region
        $region21: #{tpu_custom_call.1} parent=11 // pred_check
          %p210 = pneg %p120
        $region22: #{tpu_custom_call.1} parent=11 // pred_check_branch
          %212 = sbr.rel (%p210) target = $region24
        $region23: #{tpu_custom_call.1} parent=11 // pred_region
          %s214 = ssub.s32 1024, 1024
          %215 = vsyncadd [#allocation11], %s214
          %s216 = sshll.u32 [#allocation10], 4
          %s217 = int_to_ptr.vmem [resolvable:$true] %s216
          %222 = dma.hbm_to_vmem [thread:$0]  %s3, 1024, %s217, [#allocation11], 64, 64, 4
        $region24: #{tpu_custom_call.1} parent=11 // pred_fallthru
          _
        // Predicated region
        $region25: #{tpu_custom_call.1} parent=11 // pred_check
          %p223 = pneg %p141
        $region26: #{tpu_custom_call.1} parent=11 // pred_check_branch
          %225 = sbr.rel (%p223) target = $region28
        $region27: #{tpu_custom_call.1} parent=11 // pred_region
          _
        $region28: #{tpu_custom_call.1} parent=11 // pred_fallthru
          _
      $region12: #{tpu_custom_call.1} parent=5 // pred_fallthru
        _
      %p226 = scmp.lt.s32.totalorder %s19, 4
      // Predicated region
      $region29: #{tpu_custom_call.1} parent=5 // pred_check
        %p227 = pneg %p226
      $region30: #{tpu_custom_call.1} parent=5 // pred_check_branch
        %229 = sbr.rel (%p227) target = $region32
      $region31: #{tpu_custom_call.1} parent=5 // pred_region
        // Predicated region
        $region33: #{tpu_custom_call.1} parent=31 // pred_check
          %p230 = pneg %p51
        $region34: #{tpu_custom_call.1} parent=31 // pred_check_branch
          %232 = sbr.rel (%p230) target = $region36
        $region35: #{tpu_custom_call.1} parent=31 // pred_region
          %s233 = sand.u32 %s41, 1
          %s234 = scalar_lea.sflag [#allocation5], %s233
          %s235 = sand.u32 %s41, 1
          %s236 = smul.addr %s235, 256
          %s237 = scalar_lea.vmem [#allocation4], %s236
          %s239 = ssub.s32 4096, 4096
          %240 = vsyncadd %s234, %s239
          %s241 = smul.addr %s26, 32
          %s242 = smul.addr %s241, 128
          %s243 = scalar_lea.hbm %s0, %s242
          %s244 = sshll.u32 %s237, 4
          %s245 = int_to_ptr.vmem [resolvable:$true] %s244
          %250 = dma.hbm_to_vmem [thread:$0]  %s243, 4096, %s245, %s234, 128, 128, 8
        $region36: #{tpu_custom_call.1} parent=31 // pred_fallthru
          _
      $region32: #{tpu_custom_call.1} parent=5 // pred_fallthru
        _
      %p251 = scmp.le.s32.totalorder 1, %s19
      %p252 = scmp.lt.s32.totalorder %s19, 5
      %p253 = pnand %p251, %p252
      %p254 = pneg %p253
      // Predicated region
      $region37: #{tpu_custom_call.1} parent=5 // pred_check
        _
      $region38: #{tpu_custom_call.1} parent=5 // pred_check_branch
        %256 = sbr.rel (%p253) target = $region40
      $region39: #{tpu_custom_call.1} parent=5 // pred_region
        %s257 = ssub.s32 %s19, 1
        %s258 = sand.u32 %s44, 1
        %s259 = scalar_lea.sflag [#allocation5], %s258
        %s260 = sand.u32 %s44, 1
        %s261 = smul.addr %s260, 256
        %s262 = scalar_lea.vmem [#allocation4], %s261
        // Predicated region
        $region41: #{tpu_custom_call.1} parent=39 // pred_check
          %p263 = pneg %p57
        $region42: #{tpu_custom_call.1} parent=39 // pred_check_branch
          %265 = sbr.rel (%p263) target = $region44
        $region43: #{tpu_custom_call.1} parent=39 // pred_region
          %266 = dma.done %s259, 4096
        $region44: #{tpu_custom_call.1} parent=39 // pred_fallthru
          _
        // Predicated region
        $region45: #{tpu_custom_call.1} parent=39 // pred_check
          %p267 = pneg %p78
        $region46: #{tpu_custom_call.1} parent=39 // pred_check_branch
          %269 = sbr.rel (%p267) target = $region48
        $region47: #{tpu_custom_call.1} parent=39 // pred_region
          %270 = dma.done [#allocation8], 1024
        $region48: #{tpu_custom_call.1} parent=39 // pred_fallthru
          _
        // Predicated region
        $region49: #{tpu_custom_call.1} parent=39 // pred_check
          %p271 = pneg %p99
        $region50: #{tpu_custom_call.1} parent=39 // pred_check_branch
          %273 = sbr.rel (%p271) target = $region52
        $region51: #{tpu_custom_call.1} parent=39 // pred_region
          %274 = dma.done [#allocation8], 2048
        $region52: #{tpu_custom_call.1} parent=39 // pred_fallthru
          _
        // Predicated region
        $region53: #{tpu_custom_call.1} parent=39 // pred_check
          %p275 = pneg %p120
        $region54: #{tpu_custom_call.1} parent=39 // pred_check_branch
          %277 = sbr.rel (%p275) target = $region56
        $region55: #{tpu_custom_call.1} parent=39 // pred_region
          %278 = dma.done [#allocation11], 1024
        $region56: #{tpu_custom_call.1} parent=39 // pred_fallthru
          _
        %s279 = sand.u32 %s44, 1
        %s280 = scalar_lea.sflag [#allocation5], %s279
        %s281 = sand.u32 %s44, 1
        %s282 = smul.addr %s281, 256
        %s283 = scalar_lea.vmem [#allocation4], %s282
        %p284 = pneg %p57
        %p285 = pneg %p54
        %p286 = pneg %p78
        %p287 = pneg %p75
        %p288 = pneg %p99
        %p289 = pneg %p96
        %p290 = pneg %p120
        %p291 = pneg %p117
        %p292 = pneg %p141
        %p293 = pneg %p138
        %p294 = pneg %p169
        %p295 = pneg %p166
        %s296 = sand.u32 %s156, 1
        %s297 = scalar_lea.sflag [#allocation6], %s296
        %s298 = sand.u32 %s156, 1
        %s299 = smul.addr %s298, 128
        %s300 = scalar_lea.vmem [#allocation12], %s299
        %s301 = smul.u32 16, %s29
        %p303 = scmp.eq.s32.totalorder %s29, 0
        // Predicated region
        $region57: #{tpu_custom_call.1} parent=39 // pred_check
          %p304 = pneg %p303
        $region58: #{tpu_custom_call.1} parent=39 // pred_check_branch
          %306 = sbr.rel (%p304) target = $region60
        $region59: #{tpu_custom_call.1} parent=39 // pred_region
          %v307 = vld [vmem:[%s262] sm:$0xff]
          %v308 = vld [vmem:[%s262 + $0x8] sm:$0xff]
          %v309 = vld [vmem:[%s262 + $0x10] sm:$0xff]
          %v310 = vld [vmem:[%s262 + $0x18] sm:$0xff]
          %v311 = vld [vmem:[%s262 + $0x20] sm:$0xff]
          %v312 = vld [vmem:[%s262 + $0x28] sm:$0xff]
          %v313 = vld [vmem:[%s262 + $0x30] sm:$0xff]
          %v314 = vld [vmem:[%s262 + $0x38] sm:$0xff]
          %v315 = vld [vmem:[%s262 + $0x40] sm:$0xff]
          %v316 = vld [vmem:[%s262 + $0x48] sm:$0xff]
          %v317 = vld [vmem:[%s262 + $0x50] sm:$0xff]
          %v318 = vld [vmem:[%s262 + $0x58] sm:$0xff]
          %v319 = vld [vmem:[%s262 + $0x60] sm:$0xff]
          %v320 = vld [vmem:[%s262 + $0x68] sm:$0xff]
          %v321 = vld [vmem:[%s262 + $0x70] sm:$0xff]
          %v322 = vld [vmem:[%s262 + $0x78] sm:$0xff]
          %v323 = vld [vmem:[%s262 + $0x80] sm:$0xff]
          %v324 = vld [vmem:[%s262 + $0x88] sm:$0xff]
          %v325 = vld [vmem:[%s262 + $0x90] sm:$0xff]
          %v326 = vld [vmem:[%s262 + $0x98] sm:$0xff]
          %v327 = vld [vmem:[%s262 + $0xa0] sm:$0xff]
          %v328 = vld [vmem:[%s262 + $0xa8] sm:$0xff]
          %v329 = vld [vmem:[%s262 + $0xb0] sm:$0xff]
          %v330 = vld [vmem:[%s262 + $0xb8] sm:$0xff]
          %v331 = vld [vmem:[%s262 + $0xc0] sm:$0xff]
          %v332 = vld [vmem:[%s262 + $0xc8] sm:$0xff]
          %v333 = vld [vmem:[%s262 + $0xd0] sm:$0xff]
          %v334 = vld [vmem:[%s262 + $0xd8] sm:$0xff]
          %v335 = vld [vmem:[%s262 + $0xe0] sm:$0xff]
          %v336 = vld [vmem:[%s262 + $0xe8] sm:$0xff]
          %v337 = vld [vmem:[%s262 + $0xf0] sm:$0xff]
          %v338 = vld [vmem:[%s262 + $0xf8] sm:$0xff]
          %v339 = vpack.c.bf16 %v308, %v307
          %v340 = vpack.c.bf16 %v310, %v309
          %v341 = vpack.c.bf16 %v312, %v311
          %v342 = vpack.c.bf16 %v314, %v313
          %v343 = vpack.c.bf16 %v316, %v315
          %v344 = vpack.c.bf16 %v318, %v317
          %v345 = vpack.c.bf16 %v320, %v319
          %v346 = vpack.c.bf16 %v322, %v321
          %v347 = vpack.c.bf16 %v324, %v323
          %v348 = vpack.c.bf16 %v326, %v325
          %v349 = vpack.c.bf16 %v328, %v327
          %v350 = vpack.c.bf16 %v330, %v329
          %v351 = vpack.c.bf16 %v332, %v331
          %v352 = vpack.c.bf16 %v334, %v333
          %v353 = vpack.c.bf16 %v336, %v335
          %v354 = vpack.c.bf16 %v338, %v337
          %v355 = vld [vmem:[#allocation9] sm:$0xff]
          %v356 = vld [vmem:[#allocation9 + $0x8] sm:$0xff]
          %v357 = vld [vmem:[#allocation9 + $0x10] sm:$0xff]
          %v358 = vld [vmem:[#allocation9 + $0x18] sm:$0xff]
          %v359 = vld [vmem:[#allocation9 + $0x20] sm:$0xff]
          %v360 = vld [vmem:[#allocation9 + $0x28] sm:$0xff]
          %v361 = vld [vmem:[#allocation9 + $0x30] sm:$0xff]
          %v362 = vld [vmem:[#allocation9 + $0x38] sm:$0xff]
          %v363 = vld [vmem:[#allocation9 + $0x40] sm:$0xff]
          %v364 = vld [vmem:[#allocation9 + $0x48] sm:$0xff]
          %v365 = vld [vmem:[#allocation9 + $0x50] sm:$0xff]
          %v366 = vld [vmem:[#allocation9 + $0x58] sm:$0xff]
          %v367 = vld [vmem:[#allocation9 + $0x60] sm:$0xff]
          %v368 = vld [vmem:[#allocation9 + $0x68] sm:$0xff]
          %v369 = vld [vmem:[#allocation9 + $0x70] sm:$0xff]
          %v370 = vld [vmem:[#allocation9 + $0x78] sm:$0xff]
          %v387 = vunpack.c.l.b16 %v355
          %v388 = vunpack.c.h.b16 %v355
          %v389 = vunpack.c.l.b16 %v356
          %v390 = vunpack.c.h.b16 %v356
          %v391 = vunpack.c.l.b16 %v357
          %v392 = vunpack.c.h.b16 %v357
          %v393 = vunpack.c.l.b16 %v358
          %v394 = vunpack.c.h.b16 %v358
          %v395 = vunpack.c.l.b16 %v359
          %v396 = vunpack.c.h.b16 %v359
          %v397 = vunpack.c.l.b16 %v360
          %v398 = vunpack.c.h.b16 %v360
          %v399 = vunpack.c.l.b16 %v361
          %v400 = vunpack.c.h.b16 %v361
          %v401 = vunpack.c.l.b16 %v362
          %v402 = vunpack.c.h.b16 %v362
          %v403 = vunpack.c.l.b16 %v363
          %v404 = vunpack.c.h.b16 %v363
          %v405 = vunpack.c.l.b16 %v364
          %v406 = vunpack.c.h.b16 %v364
          %v407 = vunpack.c.l.b16 %v365
          %v408 = vunpack.c.h.b16 %v365
          %v409 = vunpack.c.l.b16 %v366
          %v410 = vunpack.c.h.b16 %v366
          %v411 = vunpack.c.l.b16 %v367
          %v412 = vunpack.c.h.b16 %v367
          %v413 = vunpack.c.l.b16 %v368
          %v414 = vunpack.c.h.b16 %v368
          %v415 = vunpack.c.l.b16 %v369
          %v416 = vunpack.c.h.b16 %v369
          %v417 = vunpack.c.l.b16 %v370
          %v418 = vunpack.c.h.b16 %v370
          %v419 = vpack.c.b16 %v389, %v387
          %v420 = vpack.c.b16 %v390, %v388
          %v421 = vpack.c.b16 %v393, %v391
          %v422 = vpack.c.b16 %v394, %v392
          %v423 = vpack.c.b16 %v397, %v395
          %v424 = vpack.c.b16 %v398, %v396
          %v425 = vpack.c.b16 %v401, %v399
          %v426 = vpack.c.b16 %v402, %v400
          %v427 = vpack.c.b16 %v405, %v403
          %v428 = vpack.c.b16 %v406, %v404
          %v429 = vpack.c.b16 %v409, %v407
          %v430 = vpack.c.b16 %v410, %v408
          %v431 = vpack.c.b16 %v413, %v411
          %v432 = vpack.c.b16 %v414, %v412
          %v433 = vpack.c.b16 %v417, %v415
          %v434 = vpack.c.b16 %v418, %v416
          %451 = vmatprep.subr.bf16.mxu0 %v420
          %452 = vmatpush1.bf16.msra.mxu0 %v419
          %453 = vmatprep.subr.bf16.mxu0 %v422
          %454 = vmatpush1.bf16.msra.mxu0 %v421
          %455 = vmatprep.subr.bf16.mxu0 %v424
          %456 = vmatpush1.bf16.msra.mxu0 %v423
          %457 = vmatprep.subr.bf16.mxu0 %v426
          %458 = vmatpush1.bf16.msra.mxu0 %v425
          %459 = vmatprep.subr.bf16.mxu0 %v428
          %460 = vmatpush1.bf16.msra.mxu0 %v427
          %461 = vmatprep.subr.bf16.mxu0 %v430
          %462 = vmatpush1.bf16.msra.mxu0 %v429
          %463 = vmatprep.subr.bf16.mxu0 %v432
          %464 = vmatpush1.bf16.msra.mxu0 %v431
          %465 = vmatprep.subr.bf16.mxu0 %v434
          %466 = vmatpush1.bf16.msra.mxu0 %v433
          %467 = vmatprep.subr.bf16.mxu0 0
          %468 = vmatpush1.bf16.msra.mxu0 0
          %469 = vmatprep.subr.bf16.mxu0 0
          %470 = vmatpush1.bf16.msra.mxu0 0
          %471 = vmatprep.subr.bf16.mxu0 0
          %472 = vmatpush1.bf16.msra.mxu0 0
          %473 = vmatprep.subr.bf16.mxu0 0
          %474 = vmatpush1.bf16.msra.mxu0 0
          %475 = vmatprep.subr.bf16.mxu0 0
          %476 = vmatpush1.bf16.msra.mxu0 0
          %477 = vmatprep.subr.bf16.mxu0 0
          %478 = vmatpush1.bf16.msra.mxu0 0
          %479 = vmatprep.subr.bf16.mxu0 0
          %480 = vmatpush1.bf16.msra.mxu0 0
          %481 = vmatprep.subr.bf16.mxu0 0
          %482 = vmatpush1.bf16.msra.mxu0 0
          %483 = vmatprep.mubr.bf16.mxu0 0
          %484 = vmatmul.mubr.bf16.gmra.mrb[0].mxu0 %v339
          %v485 = vpop.f32.mrb[0].mxu0
          %v486 = vadd.f32 0.0, %v485
          %v487 = vpop.f32.mrb[0].mxu0
          %v488 = vadd.f32 0.0, %v487
          %v489 = vpop.f32.mrb[0].mxu0
          %v490 = vadd.f32 0.0, %v489
          %v491 = vpop.f32.mrb[0].mxu0
          %v492 = vadd.f32 0.0, %v491
          %493 = vmatprep.mubr.bf16.mxu0 0
          %494 = vmatmul.mubr.bf16.gmra.mrb[0].mxu0 %v340
          %v495 = vpop.f32.mrb[0].mxu0
          %v496 = vadd.f32 0.0, %v495
          %v497 = vpop.f32.mrb[0].mxu0
          %v498 = vadd.f32 0.0, %v497
          %v499 = vpop.f32.mrb[0].mxu0
          %v500 = vadd.f32 0.0, %v499
          %v501 = vpop.f32.mrb[0].mxu0
          %v502 = vadd.f32 0.0, %v501
          %503 = vmatprep.mubr.bf16.mxu0 0
          %504 = vmatmul.mubr.bf16.gmra.mrb[0].mxu0 %v341
          %v505 = vpop.f32.mrb[0].mxu0
          %v506 = vadd.f32 0.0, %v505
          %v507 = vpop.f32.mrb[0].mxu0
          %v508 = vadd.f32 0.0, %v507
          %v509 = vpop.f32.mrb[0].mxu0
          %v510 = vadd.f32 0.0, %v509
          %v511 = vpop.f32.mrb[0].mxu0
          %v512 = vadd.f32 0.0, %v511
          %513 = vmatprep.mubr.bf16.mxu0 0
          %514 = vmatmul.mubr.bf16.gmra.mrb[0].mxu0 %v342
          %v515 = vpop.f32.mrb[0].mxu0
          %v516 = vadd.f32 0.0, %v515
          %v517 = vpop.f32.mrb[0].mxu0
          %v518 = vadd.f32 0.0, %v517
          %v519 = vpop.f32.mrb[0].mxu0
          %v520 = vadd.f32 0.0, %v519
          %v521 = vpop.f32.mrb[0].mxu0
          %v522 = vadd.f32 0.0, %v521
          %523 = vmatprep.mubr.bf16.mxu0 0
          %524 = vmatmul.mubr.bf16.gmra.mrb[0].mxu0 %v343
          %v525 = vpop.f32.mrb[0].mxu0
          %v526 = vadd.f32 0.0, %v525
          %v527 = vpop.f32.mrb[0].mxu0
          %v528 = vadd.f32 0.0, %v527
          %v529 = vpop.f32.mrb[0].mxu0
          %v530 = vadd.f32 0.0, %v529
          %v531 = vpop.f32.mrb[0].mxu0
          %v532 = vadd.f32 0.0, %v531
          %533 = vmatprep.mubr.bf16.mxu0 0
          %534 = vmatmul.mubr.bf16.gmra.mrb[0].mxu0 %v344
          %v535 = vpop.f32.mrb[0].mxu0
          %v536 = vadd.f32 0.0, %v535
          %v537 = vpop.f32.mrb[0].mxu0
          %v538 = vadd.f32 0.0, %v537
          %v539 = vpop.f32.mrb[0].mxu0
          %v540 = vadd.f32 0.0, %v539
          %v541 = vpop.f32.mrb[0].mxu0
          %v542 = vadd.f32 0.0, %v541
          %543 = vmatprep.mubr.bf16.mxu0 0
          %544 = vmatmul.mubr.bf16.gmra.mrb[0].mxu0 %v345
          %v545 = vpop.f32.mrb[0].mxu0
          %v546 = vadd.f32 0.0, %v545
          %v547 = vpop.f32.mrb[0].mxu0
          %v548 = vadd.f32 0.0, %v547
          %v549 = vpop.f32.mrb[0].mxu0
          %v550 = vadd.f32 0.0, %v549
          %v551 = vpop.f32.mrb[0].mxu0
          %v552 = vadd.f32 0.0, %v551
          %553 = vmatprep.mubr.bf16.mxu0 0
          %554 = vmatmul.mubr.bf16.gmra.mrb[0].mxu0 %v346
          %v555 = vpop.f32.mrb[0].mxu0
          %v556 = vadd.f32 0.0, %v555
          %v557 = vpop.f32.mrb[0].mxu0
          %v558 = vadd.f32 0.0, %v557
          %v559 = vpop.f32.mrb[0].mxu0
          %v560 = vadd.f32 0.0, %v559
          %v561 = vpop.f32.mrb[0].mxu0
          %v562 = vadd.f32 0.0, %v561
          %563 = vmatprep.mubr.bf16.mxu0 0
          %564 = vmatmul.mubr.bf16.gmra.mrb[0].mxu0 %v347
          %v565 = vpop.f32.mrb[0].mxu0
          %v566 = vadd.f32 0.0, %v565
          %v567 = vpop.f32.mrb[0].mxu0
          %v568 = vadd.f32 0.0, %v567
          %v569 = vpop.f32.mrb[0].mxu0
          %v570 = vadd.f32 0.0, %v569
          %v571 = vpop.f32.mrb[0].mxu0
          %v572 = vadd.f32 0.0, %v571
          %573 = vmatprep.mubr.bf16.mxu0 0
          %574 = vmatmul.mubr.bf16.gmra.mrb[0].mxu0 %v348
          %v575 = vpop.f32.mrb[0].mxu0
          %v576 = vadd.f32 0.0, %v575
          %v577 = vpop.f32.mrb[0].mxu0
          %v578 = vadd.f32 0.0, %v577
          %v579 = vpop.f32.mrb[0].mxu0
          %v580 = vadd.f32 0.0, %v579
          %v581 = vpop.f32.mrb[0].mxu0
          %v582 = vadd.f32 0.0, %v581
          %583 = vmatprep.mubr.bf16.mxu0 0
          %584 = vmatmul.mubr.bf16.gmra.mrb[0].mxu0 %v349
          %v585 = vpop.f32.mrb[0].mxu0
          %v586 = vadd.f32 0.0, %v585
          %v587 = vpop.f32.mrb[0].mxu0
          %v588 = vadd.f32 0.0, %v587
          %v589 = vpop.f32.mrb[0].mxu0
          %v590 = vadd.f32 0.0, %v589
          %v591 = vpop.f32.mrb[0].mxu0
          %v592 = vadd.f32 0.0, %v591
          %593 = vmatprep.mubr.bf16.mxu0 0
          %594 = vmatmul.mubr.bf16.gmra.mrb[0].mxu0 %v350
          %v595 = vpop.f32.mrb[0].mxu0
          %v596 = vadd.f32 0.0, %v595
          %v597 = vpop.f32.mrb[0].mxu0
          %v598 = vadd.f32 0.0, %v597
          %v599 = vpop.f32.mrb[0].mxu0
          %v600 = vadd.f32 0.0, %v599
          %v601 = vpop.f32.mrb[0].mxu0
          %v602 = vadd.f32 0.0, %v601
          %603 = vmatprep.mubr.bf16.mxu0 0
          %604 = vmatmul.mubr.bf16.gmra.mrb[0].mxu0 %v351
          %v605 = vpop.f32.mrb[0].mxu0
          %v606 = vadd.f32 0.0, %v605
          %v607 = vpop.f32.mrb[0].mxu0
          %v608 = vadd.f32 0.0, %v607
          %v609 = vpop.f32.mrb[0].mxu0
          %v610 = vadd.f32 0.0, %v609
          %v611 = vpop.f32.mrb[0].mxu0
          %v612 = vadd.f32 0.0, %v611
          %613 = vmatprep.mubr.bf16.mxu0 0
          %614 = vmatmul.mubr.bf16.gmra.mrb[0].mxu0 %v352
          %v615 = vpop.f32.mrb[0].mxu0
          %v616 = vadd.f32 0.0, %v615
          %v617 = vpop.f32.mrb[0].mxu0
          %v618 = vadd.f32 0.0, %v617
          %v619 = vpop.f32.mrb[0].mxu0
          %v620 = vadd.f32 0.0, %v619
          %v621 = vpop.f32.mrb[0].mxu0
          %v622 = vadd.f32 0.0, %v621
          %623 = vmatprep.mubr.bf16.mxu0 0
          %624 = vmatmul.mubr.bf16.gmra.mrb[0].mxu0 %v353
          %v625 = vpop.f32.mrb[0].mxu0
          %v626 = vadd.f32 0.0, %v625
          %v627 = vpop.f32.mrb[0].mxu0
          %v628 = vadd.f32 0.0, %v627
          %v629 = vpop.f32.mrb[0].mxu0
          %v630 = vadd.f32 0.0, %v629
          %v631 = vpop.f32.mrb[0].mxu0
          %v632 = vadd.f32 0.0, %v631
          %633 = vmatprep.mubr.bf16.mxu0 0
          %634 = vmatmul.mubr.bf16.gmra.mrb[0].mxu0 %v354
          %v635 = vpop.f32.mrb[0].mxu0
          %v636 = vadd.f32 0.0, %v635
          %v637 = vpop.f32.mrb[0].mxu0
          %v638 = vadd.f32 0.0, %v637
          %v639 = vpop.f32.mrb[0].mxu0
          %v640 = vadd.f32 0.0, %v639
          %v641 = vpop.f32.mrb[0].mxu0
          %v642 = vadd.f32 0.0, %v641
          %643 = vdwg.mxu0
          %v644 = vpack.c.bf16 %v490, %v486
          %v645 = vpack.c.bf16 %v492, %v488
          %v646 = vpack.c.bf16 %v500, %v496
          %v647 = vpack.c.bf16 %v502, %v498
          %v648 = vpack.c.bf16 %v510, %v506
          %v649 = vpack.c.bf16 %v512, %v508
          %v650 = vpack.c.bf16 %v520, %v516
          %v651 = vpack.c.bf16 %v522, %v518
          %v652 = vpack.c.bf16 %v530, %v526
          %v653 = vpack.c.bf16 %v532, %v528
          %v654 = vpack.c.bf16 %v540, %v536
          %v655 = vpack.c.bf16 %v542, %v538
          %v656 = vpack.c.bf16 %v550, %v546
          %v657 = vpack.c.bf16 %v552, %v548
          %v658 = vpack.c.bf16 %v560, %v556
          %v659 = vpack.c.bf16 %v562, %v558
          %v660 = vpack.c.bf16 %v570, %v566
          %v661 = vpack.c.bf16 %v572, %v568
          %v662 = vpack.c.bf16 %v580, %v576
          %v663 = vpack.c.bf16 %v582, %v578
          %v664 = vpack.c.bf16 %v590, %v586
          %v665 = vpack.c.bf16 %v592, %v588
          %v666 = vpack.c.bf16 %v600, %v596
          %v667 = vpack.c.bf16 %v602, %v598
          %v668 = vpack.c.bf16 %v610, %v606
          %v669 = vpack.c.bf16 %v612, %v608
          %v670 = vpack.c.bf16 %v620, %v616
          %v671 = vpack.c.bf16 %v622, %v618
          %v672 = vpack.c.bf16 %v630, %v626
          %v673 = vpack.c.bf16 %v632, %v628
          %v674 = vpack.c.bf16 %v640, %v636
          %v675 = vpack.c.bf16 %v642, %v638
          %692 = vrot.lane.b32.xlu0 %v644, 96
          %v693 = vpop.permute.xlu0 %692
          %694 = vrot.lane.b32.xlu0 %v646, 96
          %v695 = vpop.permute.xlu0 %694
          %696 = vrot.lane.b32.xlu0 %v648, 96
          %v697 = vpop.permute.xlu0 %696
          %698 = vrot.lane.b32.xlu0 %v650, 96
          %v699 = vpop.permute.xlu0 %698
          %700 = vrot.lane.b32.xlu0 %v652, 96
          %v701 = vpop.permute.xlu0 %700
          %702 = vrot.lane.b32.xlu0 %v654, 96
          %v703 = vpop.permute.xlu0 %702
          %704 = vrot.lane.b32.xlu0 %v656, 96
          %v705 = vpop.permute.xlu0 %704
          %706 = vrot.lane.b32.xlu0 %v658, 96
          %v707 = vpop.permute.xlu0 %706
          %708 = vrot.lane.b32.xlu0 %v660, 96
          %v709 = vpop.permute.xlu0 %708
          %710 = vrot.lane.b32.xlu0 %v662, 96
          %v711 = vpop.permute.xlu0 %710
          %712 = vrot.lane.b32.xlu0 %v664, 96
          %v713 = vpop.permute.xlu0 %712
          %714 = vrot.lane.b32.xlu0 %v666, 96
          %v715 = vpop.permute.xlu0 %714
          %716 = vrot.lane.b32.xlu0 %v668, 96
          %v717 = vpop.permute.xlu0 %716
          %718 = vrot.lane.b32.xlu0 %v670, 96
          %v719 = vpop.permute.xlu0 %718
          %720 = vrot.lane.b32.xlu0 %v672, 96
          %v721 = vpop.permute.xlu0 %720
          %722 = vrot.lane.b32.xlu0 %v674, 96
          %v723 = vpop.permute.xlu0 %722
          %740 = vrot.lane.b32.xlu0 %v644, 64
          %v741 = vpop.permute.xlu0 %740
          %742 = vrot.lane.b32.xlu0 %v646, 64
          %v743 = vpop.permute.xlu0 %742
          %744 = vrot.lane.b32.xlu0 %v648, 64
          %v745 = vpop.permute.xlu0 %744
          %746 = vrot.lane.b32.xlu0 %v650, 64
          %v747 = vpop.permute.xlu0 %746
          %748 = vrot.lane.b32.xlu0 %v652, 64
          %v749 = vpop.permute.xlu0 %748
          %750 = vrot.lane.b32.xlu0 %v654, 64
          %v751 = vpop.permute.xlu0 %750
          %752 = vrot.lane.b32.xlu0 %v656, 64
          %v753 = vpop.permute.xlu0 %752
          %754 = vrot.lane.b32.xlu0 %v658, 64
          %v755 = vpop.permute.xlu0 %754
          %756 = vrot.lane.b32.xlu0 %v660, 64
          %v757 = vpop.permute.xlu0 %756
          %758 = vrot.lane.b32.xlu0 %v662, 64
          %v759 = vpop.permute.xlu0 %758
          %760 = vrot.lane.b32.xlu0 %v664, 64
          %v761 = vpop.permute.xlu0 %760
          %762 = vrot.lane.b32.xlu0 %v666, 64
          %v763 = vpop.permute.xlu0 %762
          %764 = vrot.lane.b32.xlu0 %v668, 64
          %v765 = vpop.permute.xlu0 %764
          %766 = vrot.lane.b32.xlu0 %v670, 64
          %v767 = vpop.permute.xlu0 %766
          %768 = vrot.lane.b32.xlu0 %v672, 64
          %v769 = vpop.permute.xlu0 %768
          %770 = vrot.lane.b32.xlu0 %v674, 64
          %v771 = vpop.permute.xlu0 %770
          %788 = vrot.lane.b32.xlu0 %v644, 32
          %v789 = vpop.permute.xlu0 %788
          %790 = vrot.lane.b32.xlu0 %v646, 32
          %v791 = vpop.permute.xlu0 %790
          %792 = vrot.lane.b32.xlu0 %v648, 32
          %v793 = vpop.permute.xlu0 %792
          %794 = vrot.lane.b32.xlu0 %v650, 32
          %v795 = vpop.permute.xlu0 %794
          %796 = vrot.lane.b32.xlu0 %v652, 32
          %v797 = vpop.permute.xlu0 %796
          %798 = vrot.lane.b32.xlu0 %v654, 32
          %v799 = vpop.permute.xlu0 %798
          %800 = vrot.lane.b32.xlu0 %v656, 32
          %v801 = vpop.permute.xlu0 %800
          %802 = vrot.lane.b32.xlu0 %v658, 32
          %v803 = vpop.permute.xlu0 %802
          %804 = vrot.lane.b32.xlu0 %v660, 32
          %v805 = vpop.permute.xlu0 %804
          %806 = vrot.lane.b32.xlu0 %v662, 32
          %v807 = vpop.permute.xlu0 %806
          %808 = vrot.lane.b32.xlu0 %v664, 32
          %v809 = vpop.permute.xlu0 %808
          %810 = vrot.lane.b32.xlu0 %v666, 32
          %v811 = vpop.permute.xlu0 %810
          %812 = vrot.lane.b32.xlu0 %v668, 32
          %v813 = vpop.permute.xlu0 %812
          %814 = vrot.lane.b32.xlu0 %v670, 32
          %v815 = vpop.permute.xlu0 %814
          %816 = vrot.lane.b32.xlu0 %v672, 32
          %v817 = vpop.permute.xlu0 %816
          %818 = vrot.lane.b32.xlu0 %v674, 32
          %v819 = vpop.permute.xlu0 %818
          %vm836 = vcmask 261120
          %837 = vst.msk [vmem:[#allocation2] sm:$0xff] %vm836, %v644
          %838 = vst.msk [vmem:[#allocation2 + $0x8] sm:$0xff] %vm836, %v646
          %839 = vst.msk [vmem:[#allocation2 + $0x10] sm:$0xff] %vm836, %v648
          %840 = vst.msk [vmem:[#allocation2 + $0x18] sm:$0xff] %vm836, %v650
          %841 = vst.msk [vmem:[#allocation2 + $0x20] sm:$0xff] %vm836, %v652
          %842 = vst.msk [vmem:[#allocation2 + $0x28] sm:$0xff] %vm836, %v654
          %843 = vst.msk [vmem:[#allocation2 + $0x30] sm:$0xff] %vm836, %v656
          %844 = vst.msk [vmem:[#allocation2 + $0x38] sm:$0xff] %vm836, %v658
          %845 = vst.msk [vmem:[#allocation2 + $0x40] sm:$0xff] %vm836, %v660
          %846 = vst.msk [vmem:[#allocation2 + $0x48] sm:$0xff] %vm836, %v662
          %847 = vst.msk [vmem:[#allocation2 + $0x50] sm:$0xff] %vm836, %v664
          %848 = vst.msk [vmem:[#allocation2 + $0x58] sm:$0xff] %vm836, %v666
          %849 = vst.msk [vmem:[#allocation2 + $0x60] sm:$0xff] %vm836, %v668
          %850 = vst.msk [vmem:[#allocation2 + $0x68] sm:$0xff] %vm836, %v670
          %851 = vst.msk [vmem:[#allocation2 + $0x70] sm:$0xff] %vm836, %v672
          %852 = vst.msk [vmem:[#allocation2 + $0x78] sm:$0xff] %vm836, %v674
          %853 = vst.msk [vmem:[#allocation2 + $0x80] sm:$0xff] %vm836, %v693
          %854 = vst.msk [vmem:[#allocation2 + $0x88] sm:$0xff] %vm836, %v695
          %855 = vst.msk [vmem:[#allocation2 + $0x90] sm:$0xff] %vm836, %v697
          %856 = vst.msk [vmem:[#allocation2 + $0x98] sm:$0xff] %vm836, %v699
          %857 = vst.msk [vmem:[#allocation2 + $0xa0] sm:$0xff] %vm836, %v701
          %858 = vst.msk [vmem:[#allocation2 + $0xa8] sm:$0xff] %vm836, %v703
          %859 = vst.msk [vmem:[#allocation2 + $0xb0] sm:$0xff] %vm836, %v705
          %860 = vst.msk [vmem:[#allocation2 + $0xb8] sm:$0xff] %vm836, %v707
          %861 = vst.msk [vmem:[#allocation2 + $0xc0] sm:$0xff] %vm836, %v709
          %862 = vst.msk [vmem:[#allocation2 + $0xc8] sm:$0xff] %vm836, %v711
          %863 = vst.msk [vmem:[#allocation2 + $0xd0] sm:$0xff] %vm836, %v713
          %864 = vst.msk [vmem:[#allocation2 + $0xd8] sm:$0xff] %vm836, %v715
          %865 = vst.msk [vmem:[#allocation2 + $0xe0] sm:$0xff] %vm836, %v717
          %866 = vst.msk [vmem:[#allocation2 + $0xe8] sm:$0xff] %vm836, %v719
          %867 = vst.msk [vmem:[#allocation2 + $0xf0] sm:$0xff] %vm836, %v721
          %868 = vst.msk [vmem:[#allocation2 + $0xf8] sm:$0xff] %vm836, %v723
          %869 = vst.msk [vmem:[#allocation2 + $0x100] sm:$0xff] %vm836, %v741
          %870 = vst.msk [vmem:[#allocation2 + $0x108] sm:$0xff] %vm836, %v743
          %871 = vst.msk [vmem:[#allocation2 + $0x110] sm:$0xff] %vm836, %v745
          %872 = vst.msk [vmem:[#allocation2 + $0x118] sm:$0xff] %vm836, %v747
          %873 = vst.msk [vmem:[#allocation2 + $0x120] sm:$0xff] %vm836, %v749
          %874 = vst.msk [vmem:[#allocation2 + $0x128] sm:$0xff] %vm836, %v751
          %875 = vst.msk [vmem:[#allocation2 + $0x130] sm:$0xff] %vm836, %v753
          %876 = vst.msk [vmem:[#allocation2 + $0x138] sm:$0xff] %vm836, %v755
          %877 = vst.msk [vmem:[#allocation2 + $0x140] sm:$0xff] %vm836, %v757
          %878 = vst.msk [vmem:[#allocation2 + $0x148] sm:$0xff] %vm836, %v759
          %879 = vst.msk [vmem:[#allocation2 + $0x150] sm:$0xff] %vm836, %v761
          %880 = vst.msk [vmem:[#allocation2 + $0x158] sm:$0xff] %vm836, %v763
          %881 = vst.msk [vmem:[#allocation2 + $0x160] sm:$0xff] %vm836, %v765
          %882 = vst.msk [vmem:[#allocation2 + $0x168] sm:$0xff] %vm836, %v767
          %883 = vst.msk [vmem:[#allocation2 + $0x170] sm:$0xff] %vm836, %v769
          %884 = vst.msk [vmem:[#allocation2 + $0x178] sm:$0xff] %vm836, %v771
          %885 = vst.msk [vmem:[#allocation2 + $0x180] sm:$0xff] %vm836, %v789
          %886 = vst.msk [vmem:[#allocation2 + $0x188] sm:$0xff] %vm836, %v791
          %887 = vst.msk [vmem:[#allocation2 + $0x190] sm:$0xff] %vm836, %v793
          %888 = vst.msk [vmem:[#allocation2 + $0x198] sm:$0xff] %vm836, %v795
          %889 = vst.msk [vmem:[#allocation2 + $0x1a0] sm:$0xff] %vm836, %v797
          %890 = vst.msk [vmem:[#allocation2 + $0x1a8] sm:$0xff] %vm836, %v799
          %891 = vst.msk [vmem:[#allocation2 + $0x1b0] sm:$0xff] %vm836, %v801
          %892 = vst.msk [vmem:[#allocation2 + $0x1b8] sm:$0xff] %vm836, %v803
          %893 = vst.msk [vmem:[#allocation2 + $0x1c0] sm:$0xff] %vm836, %v805
          %894 = vst.msk [vmem:[#allocation2 + $0x1c8] sm:$0xff] %vm836, %v807
          %895 = vst.msk [vmem:[#allocation2 + $0x1d0] sm:$0xff] %vm836, %v809
          %896 = vst.msk [vmem:[#allocation2 + $0x1d8] sm:$0xff] %vm836, %v811
          %897 = vst.msk [vmem:[#allocation2 + $0x1e0] sm:$0xff] %vm836, %v813
          %898 = vst.msk [vmem:[#allocation2 + $0x1e8] sm:$0xff] %vm836, %v815
          %899 = vst.msk [vmem:[#allocation2 + $0x1f0] sm:$0xff] %vm836, %v817
          %900 = vst.msk [vmem:[#allocation2 + $0x1f8] sm:$0xff] %vm836, %v819
          %917 = vrot.lane.b32.xlu0 %v645, 96
          %v918 = vpop.permute.xlu0 %917
          %919 = vrot.lane.b32.xlu0 %v647, 96
          %v920 = vpop.permute.xlu0 %919
          %921 = vrot.lane.b32.xlu0 %v649, 96
          %v922 = vpop.permute.xlu0 %921
          %923 = vrot.lane.b32.xlu0 %v651, 96
          %v924 = vpop.permute.xlu0 %923
          %925 = vrot.lane.b32.xlu0 %v653, 96
          %v926 = vpop.permute.xlu0 %925
          %927 = vrot.lane.b32.xlu0 %v655, 96
          %v928 = vpop.permute.xlu0 %927
          %929 = vrot.lane.b32.xlu0 %v657, 96
          %v930 = vpop.permute.xlu0 %929
          %931 = vrot.lane.b32.xlu0 %v659, 96
          %v932 = vpop.permute.xlu0 %931
          %933 = vrot.lane.b32.xlu0 %v661, 96
          %v934 = vpop.permute.xlu0 %933
          %935 = vrot.lane.b32.xlu0 %v663, 96
          %v936 = vpop.permute.xlu0 %935
          %937 = vrot.lane.b32.xlu0 %v665, 96
          %v938 = vpop.permute.xlu0 %937
          %939 = vrot.lane.b32.xlu0 %v667, 96
          %v940 = vpop.permute.xlu0 %939
          %941 = vrot.lane.b32.xlu0 %v669, 96
          %v942 = vpop.permute.xlu0 %941
          %943 = vrot.lane.b32.xlu0 %v671, 96
          %v944 = vpop.permute.xlu0 %943
          %945 = vrot.lane.b32.xlu0 %v673, 96
          %v946 = vpop.permute.xlu0 %945
          %947 = vrot.lane.b32.xlu0 %v675, 96
          %v948 = vpop.permute.xlu0 %947
          %965 = vrot.lane.b32.xlu0 %v645, 64
          %v966 = vpop.permute.xlu0 %965
          %967 = vrot.lane.b32.xlu0 %v647, 64
          %v968 = vpop.permute.xlu0 %967
          %969 = vrot.lane.b32.xlu0 %v649, 64
          %v970 = vpop.permute.xlu0 %969
          %971 = vrot.lane.b32.xlu0 %v651, 64
          %v972 = vpop.permute.xlu0 %971
          %973 = vrot.lane.b32.xlu0 %v653, 64
          %v974 = vpop.permute.xlu0 %973
          %975 = vrot.lane.b32.xlu0 %v655, 64
          %v976 = vpop.permute.xlu0 %975
          %977 = vrot.lane.b32.xlu0 %v657, 64
          %v978 = vpop.permute.xlu0 %977
          %979 = vrot.lane.b32.xlu0 %v659, 64
          %v980 = vpop.permute.xlu0 %979
          %981 = vrot.lane.b32.xlu0 %v661, 64
          %v982 = vpop.permute.xlu0 %981
          %983 = vrot.lane.b32.xlu0 %v663, 64
          %v984 = vpop.permute.xlu0 %983
          %985 = vrot.lane.b32.xlu0 %v665, 64
          %v986 = vpop.permute.xlu0 %985
          %987 = vrot.lane.b32.xlu0 %v667, 64
          %v988 = vpop.permute.xlu0 %987
          %989 = vrot.lane.b32.xlu0 %v669, 64
          %v990 = vpop.permute.xlu0 %989
          %991 = vrot.lane.b32.xlu0 %v671, 64
          %v992 = vpop.permute.xlu0 %991
          %993 = vrot.lane.b32.xlu0 %v673, 64
          %v994 = vpop.permute.xlu0 %993
          %995 = vrot.lane.b32.xlu0 %v675, 64
          %v996 = vpop.permute.xlu0 %995
          %1013 = vrot.lane.b32.xlu0 %v645, 32
          %v1014 = vpop.permute.xlu0 %1013
          %1015 = vrot.lane.b32.xlu0 %v647, 32
          %v1016 = vpop.permute.xlu0 %1015
          %1017 = vrot.lane.b32.xlu0 %v649, 32
          %v1018 = vpop.permute.xlu0 %1017
          %1019 = vrot.lane.b32.xlu0 %v651, 32
          %v1020 = vpop.permute.xlu0 %1019
          %1021 = vrot.lane.b32.xlu0 %v653, 32
          %v1022 = vpop.permute.xlu0 %1021
          %1023 = vrot.lane.b32.xlu0 %v655, 32
          %v1024 = vpop.permute.xlu0 %1023
          %1025 = vrot.lane.b32.xlu0 %v657, 32
          %v1026 = vpop.permute.xlu0 %1025
          %1027 = vrot.lane.b32.xlu0 %v659, 32
          %v1028 = vpop.permute.xlu0 %1027
          %1029 = vrot.lane.b32.xlu0 %v661, 32
          %v1030 = vpop.permute.xlu0 %1029
          %1031 = vrot.lane.b32.xlu0 %v663, 32
          %v1032 = vpop.permute.xlu0 %1031
          %1033 = vrot.lane.b32.xlu0 %v665, 32
          %v1034 = vpop.permute.xlu0 %1033
          %1035 = vrot.lane.b32.xlu0 %v667, 32
          %v1036 = vpop.permute.xlu0 %1035
          %1037 = vrot.lane.b32.xlu0 %v669, 32
          %v1038 = vpop.permute.xlu0 %1037
          %1039 = vrot.lane.b32.xlu0 %v671, 32
          %v1040 = vpop.permute.xlu0 %1039
          %1041 = vrot.lane.b32.xlu0 %v673, 32
          %v1042 = vpop.permute.xlu0 %1041
          %1043 = vrot.lane.b32.xlu0 %v675, 32
          %v1044 = vpop.permute.xlu0 %1043
          %1061 = vst.msk [vmem:[#allocation3] sm:$0xff] %vm836, %v645
          %1062 = vst.msk [vmem:[#allocation3 + $0x8] sm:$0xff] %vm836, %v647
          %1063 = vst.msk [vmem:[#allocation3 + $0x10] sm:$0xff] %vm836, %v649
          %1064 = vst.msk [vmem:[#allocation3 + $0x18] sm:$0xff] %vm836, %v651
          %1065 = vst.msk [vmem:[#allocation3 + $0x20] sm:$0xff] %vm836, %v653
          %1066 = vst.msk [vmem:[#allocation3 + $0x28] sm:$0xff] %vm836, %v655
          %1067 = vst.msk [vmem:[#allocation3 + $0x30] sm:$0xff] %vm836, %v657
          %1068 = vst.msk [vmem:[#allocation3 + $0x38] sm:$0xff] %vm836, %v659
          %1069 = vst.msk [vmem:[#allocation3 + $0x40] sm:$0xff] %vm836, %v661
          %1070 = vst.msk [vmem:[#allocation3 + $0x48] sm:$0xff] %vm836, %v663
          %1071 = vst.msk [vmem:[#allocation3 + $0x50] sm:$0xff] %vm836, %v665
          %1072 = vst.msk [vmem:[#allocation3 + $0x58] sm:$0xff] %vm836, %v667
          %1073 = vst.msk [vmem:[#allocation3 + $0x60] sm:$0xff] %vm836, %v669
          %1074 = vst.msk [vmem:[#allocation3 + $0x68] sm:$0xff] %vm836, %v671
          %1075 = vst.msk [vmem:[#allocation3 + $0x70] sm:$0xff] %vm836, %v673
          %1076 = vst.msk [vmem:[#allocation3 + $0x78] sm:$0xff] %vm836, %v675
          %1077 = vst.msk [vmem:[#allocation3 + $0x80] sm:$0xff] %vm836, %v918
          %1078 = vst.msk [vmem:[#allocation3 + $0x88] sm:$0xff] %vm836, %v920
          %1079 = vst.msk [vmem:[#allocation3 + $0x90] sm:$0xff] %vm836, %v922
          %1080 = vst.msk [vmem:[#allocation3 + $0x98] sm:$0xff] %vm836, %v924
          %1081 = vst.msk [vmem:[#allocation3 + $0xa0] sm:$0xff] %vm836, %v926
          %1082 = vst.msk [vmem:[#allocation3 + $0xa8] sm:$0xff] %vm836, %v928
          %1083 = vst.msk [vmem:[#allocation3 + $0xb0] sm:$0xff] %vm836, %v930
          %1084 = vst.msk [vmem:[#allocation3 + $0xb8] sm:$0xff] %vm836, %v932
          %1085 = vst.msk [vmem:[#allocation3 + $0xc0] sm:$0xff] %vm836, %v934
          %1086 = vst.msk [vmem:[#allocation3 + $0xc8] sm:$0xff] %vm836, %v936
          %1087 = vst.msk [vmem:[#allocation3 + $0xd0] sm:$0xff] %vm836, %v938
          %1088 = vst.msk [vmem:[#allocation3 + $0xd8] sm:$0xff] %vm836, %v940
          %1089 = vst.msk [vmem:[#allocation3 + $0xe0] sm:$0xff] %vm836, %v942
          %1090 = vst.msk [vmem:[#allocation3 + $0xe8] sm:$0xff] %vm836, %v944
          %1091 = vst.msk [vmem:[#allocation3 + $0xf0] sm:$0xff] %vm836, %v946
          %1092 = vst.msk [vmem:[#allocation3 + $0xf8] sm:$0xff] %vm836, %v948
          %1093 = vst.msk [vmem:[#allocation3 + $0x100] sm:$0xff] %vm836, %v966
          %1094 = vst.msk [vmem:[#allocation3 + $0x108] sm:$0xff] %vm836, %v968
          %1095 = vst.msk [vmem:[#allocation3 + $0x110] sm:$0xff] %vm836, %v970
          %1096 = vst.msk [vmem:[#allocation3 + $0x118] sm:$0xff] %vm836, %v972
          %1097 = vst.msk [vmem:[#allocation3 + $0x120] sm:$0xff] %vm836, %v974
          %1098 = vst.msk [vmem:[#allocation3 + $0x128] sm:$0xff] %vm836, %v976
          %1099 = vst.msk [vmem:[#allocation3 + $0x130] sm:$0xff] %vm836, %v978
          %1100 = vst.msk [vmem:[#allocation3 + $0x138] sm:$0xff] %vm836, %v980
          %1101 = vst.msk [vmem:[#allocation3 + $0x140] sm:$0xff] %vm836, %v982
          %1102 = vst.msk [vmem:[#allocation3 + $0x148] sm:$0xff] %vm836, %v984
          %1103 = vst.msk [vmem:[#allocation3 + $0x150] sm:$0xff] %vm836, %v986
          %1104 = vst.msk [vmem:[#allocation3 + $0x158] sm:$0xff] %vm836, %v988
          %1105 = vst.msk [vmem:[#allocation3 + $0x160] sm:$0xff] %vm836, %v990
          %1106 = vst.msk [vmem:[#allocation3 + $0x168] sm:$0xff] %vm836, %v992
          %1107 = vst.msk [vmem:[#allocation3 + $0x170] sm:$0xff] %vm836, %v994
          %1108 = vst.msk [vmem:[#allocation3 + $0x178] sm:$0xff] %vm836, %v996
          %1109 = vst.msk [vmem:[#allocation3 + $0x180] sm:$0xff] %vm836, %v1014
          %1110 = vst.msk [vmem:[#allocation3 + $0x188] sm:$0xff] %vm836, %v1016
          %1111 = vst.msk [vmem:[#allocation3 + $0x190] sm:$0xff] %vm836, %v1018
          %1112 = vst.msk [vmem:[#allocation3 + $0x198] sm:$0xff] %vm836, %v1020
          %1113 = vst.msk [vmem:[#allocation3 + $0x1a0] sm:$0xff] %vm836, %v1022
          %1114 = vst.msk [vmem:[#allocation3 + $0x1a8] sm:$0xff] %vm836, %v1024
          %1115 = vst.msk [vmem:[#allocation3 + $0x1b0] sm:$0xff] %vm836, %v1026
          %1116 = vst.msk [vmem:[#allocation3 + $0x1b8] sm:$0xff] %vm836, %v1028
          %1117 = vst.msk [vmem:[#allocation3 + $0x1c0] sm:$0xff] %vm836, %v1030
          %1118 = vst.msk [vmem:[#allocation3 + $0x1c8] sm:$0xff] %vm836, %v1032
          %1119 = vst.msk [vmem:[#allocation3 + $0x1d0] sm:$0xff] %vm836, %v1034
          %1120 = vst.msk [vmem:[#allocation3 + $0x1d8] sm:$0xff] %vm836, %v1036
          %1121 = vst.msk [vmem:[#allocation3 + $0x1e0] sm:$0xff] %vm836, %v1038
          %1122 = vst.msk [vmem:[#allocation3 + $0x1e8] sm:$0xff] %vm836, %v1040
          %1123 = vst.msk [vmem:[#allocation3 + $0x1f0] sm:$0xff] %vm836, %v1042
          %1124 = vst.msk [vmem:[#allocation3 + $0x1f8] sm:$0xff] %vm836, %v1044
        $region60: #{tpu_custom_call.1} parent=39 // pred_fallthru
          _
        %s1125 = smul.u32 %s29, 128
        %s1126 = scalar_lea.vmem %s262, %s1125 [#allocation4]
        %v1127 = vld [vmem:[%s1126] sm:$0xff]
        %v1128 = vld [vmem:[%s1126 + $0x8] sm:$0xff]
        %v1129 = vld [vmem:[%s1126 + $0x10] sm:$0xff]
        %v1130 = vld [vmem:[%s1126 + $0x18] sm:$0xff]
        %v1131 = vld [vmem:[%s1126 + $0x20] sm:$0xff]
        %v1132 = vld [vmem:[%s1126 + $0x28] sm:$0xff]
        %v1133 = vld [vmem:[%s1126 + $0x30] sm:$0xff]
        %v1134 = vld [vmem:[%s1126 + $0x38] sm:$0xff]
        %v1135 = vld [vmem:[%s1126 + $0x40] sm:$0xff]
        %v1136 = vld [vmem:[%s1126 + $0x48] sm:$0xff]
        %v1137 = vld [vmem:[%s1126 + $0x50] sm:$0xff]
        %v1138 = vld [vmem:[%s1126 + $0x58] sm:$0xff]
        %v1139 = vld [vmem:[%s1126 + $0x60] sm:$0xff]
        %v1140 = vld [vmem:[%s1126 + $0x68] sm:$0xff]
        %v1141 = vld [vmem:[%s1126 + $0x70] sm:$0xff]
        %v1142 = vld [vmem:[%s1126 + $0x78] sm:$0xff]
        %v1143 = vpack.c.bf16 %v1128, %v1127
        %v1144 = vpack.c.bf16 %v1130, %v1129
        %v1145 = vpack.c.bf16 %v1132, %v1131
        %v1146 = vpack.c.bf16 %v1134, %v1133
        %v1147 = vpack.c.bf16 %v1136, %v1135
        %v1148 = vpack.c.bf16 %v1138, %v1137
        %v1149 = vpack.c.bf16 %v1140, %v1139
        %v1150 = vpack.c.bf16 %v1142, %v1141
        %v1151 = vld [vmem:[#allocation7] sm:$0xf]
        %v1152 = vld [vmem:[#allocation7 + $0x4] sm:$0xf]
        %v1153 = vld [vmem:[#allocation7 + $0x8] sm:$0xf]
        %v1154 = vld [vmem:[#allocation7 + $0xc] sm:$0xf]
        %v1155 = vld [vmem:[#allocation7 + $0x10] sm:$0xf]
        %v1156 = vld [vmem:[#allocation7 + $0x14] sm:$0xf]
        %v1157 = vld [vmem:[#allocation7 + $0x18] sm:$0xf]
        %v1158 = vld [vmem:[#allocation7 + $0x1c] sm:$0xf]
        %v1159 = vld [vmem:[#allocation7 + $0x20] sm:$0xf]
        %v1160 = vld [vmem:[#allocation7 + $0x24] sm:$0xf]
        %v1161 = vld [vmem:[#allocation7 + $0x28] sm:$0xf]
        %v1162 = vld [vmem:[#allocation7 + $0x2c] sm:$0xf]
        %v1163 = vld [vmem:[#allocation7 + $0x30] sm:$0xf]
        %v1164 = vld [vmem:[#allocation7 + $0x34] sm:$0xf]
        %v1165 = vld [vmem:[#allocation7 + $0x38] sm:$0xf]
        %v1166 = vld [vmem:[#allocation7 + $0x3c] sm:$0xf]
        %v1183 = vunpack.c.l.b16 %v1151
        %v1184 = vunpack.c.l.b16 %v1152
        %v1185 = vunpack.c.l.b16 %v1153
        %v1186 = vunpack.c.l.b16 %v1154
        %v1187 = vunpack.c.l.b16 %v1155
        %v1188 = vunpack.c.l.b16 %v1156
        %v1189 = vunpack.c.l.b16 %v1157
        %v1190 = vunpack.c.l.b16 %v1158
        %v1191 = vunpack.c.l.b16 %v1159
        %v1192 = vunpack.c.l.b16 %v1160
        %v1193 = vunpack.c.l.b16 %v1161
        %v1194 = vunpack.c.l.b16 %v1162
        %v1195 = vunpack.c.l.b16 %v1163
        %v1196 = vunpack.c.l.b16 %v1164
        %v1197 = vunpack.c.l.b16 %v1165
        %v1198 = vunpack.c.l.b16 %v1166
        %v1199 = vpack.c.b16 %v1184, %v1183
        %v1200 = vpack.c.b16 %v1186, %v1185
        %v1201 = vpack.c.b16 %v1188, %v1187
        %v1202 = vpack.c.b16 %v1190, %v1189
        %v1203 = vpack.c.b16 %v1192, %v1191
        %v1204 = vpack.c.b16 %v1194, %v1193
        %v1205 = vpack.c.b16 %v1196, %v1195
        %v1206 = vpack.c.b16 %v1198, %v1197
        %1215 = vmatprep.subr.bf16.mxu0 0
        %1216 = vmatpush1.bf16.msra.mxu0 %v1199
        %1217 = vmatprep.subr.bf16.mxu0 0
        %1218 = vmatpush1.bf16.msra.mxu0 %v1200
        %1219 = vmatprep.subr.bf16.mxu0 0
        %1220 = vmatpush1.bf16.msra.mxu0 %v1201
        %1221 = vmatprep.subr.bf16.mxu0 0
        %1222 = vmatpush1.bf16.msra.mxu0 %v1202
        %1223 = vmatprep.subr.bf16.mxu0 0
        %1224 = vmatpush1.bf16.msra.mxu0 %v1203
        %1225 = vmatprep.subr.bf16.mxu0 0
        %1226 = vmatpush1.bf16.msra.mxu0 %v1204
        %1227 = vmatprep.subr.bf16.mxu0 0
        %1228 = vmatpush1.bf16.msra.mxu0 %v1205
        %1229 = vmatprep.subr.bf16.mxu0 0
        %1230 = vmatpush1.bf16.msra.mxu0 %v1206
        %1231 = vmatprep.subr.bf16.mxu0 0
        %1232 = vmatpush1.bf16.msra.mxu0 0
        %1233 = vmatprep.subr.bf16.mxu0 0
        %1234 = vmatpush1.bf16.msra.mxu0 0
        %1235 = vmatprep.subr.bf16.mxu0 0
        %1236 = vmatpush1.bf16.msra.mxu0 0
        %1237 = vmatprep.subr.bf16.mxu0 0
        %1238 = vmatpush1.bf16.msra.mxu0 0
        %1239 = vmatprep.subr.bf16.mxu0 0
        %1240 = vmatpush1.bf16.msra.mxu0 0
        %1241 = vmatprep.subr.bf16.mxu0 0
        %1242 = vmatpush1.bf16.msra.mxu0 0
        %1243 = vmatprep.subr.bf16.mxu0 0
        %1244 = vmatpush1.bf16.msra.mxu0 0
        %1245 = vmatprep.subr.bf16.mxu0 0
        %1246 = vmatpush1.bf16.msra.mxu0 0
        %1247 = vmatprep.mubr.bf16.mxu0 0
        %1248 = vmatmul.mubr.bf16.gmra.mrb[0].mxu0 %v1143
        %v1249 = vpop.f32.mrb[0].mxu0
        %v1250 = vadd.f32 0.0, %v1249
        %v1251 = vpop.f32.mrb[0].mxu0
        %v1252 = vpop.f32.mrb[0].mxu0
        %v1253 = vadd.f32 0.0, %v1252
        %v1254 = vpop.f32.mrb[0].mxu0
        %1255 = vmatprep.mubr.bf16.mxu0 0
        %1256 = vmatmul.mubr.bf16.gmra.mrb[0].mxu0 %v1144
        %v1257 = vpop.f32.mrb[0].mxu0
        %v1258 = vadd.f32 0.0, %v1257
        %v1259 = vpop.f32.mrb[0].mxu0
        %v1260 = vpop.f32.mrb[0].mxu0
        %v1261 = vadd.f32 0.0, %v1260
        %v1262 = vpop.f32.mrb[0].mxu0
        %1263 = vmatprep.mubr.bf16.mxu0 0
        %1264 = vmatmul.mubr.bf16.gmra.mrb[0].mxu0 %v1145
        %v1265 = vpop.f32.mrb[0].mxu0
        %v1266 = vadd.f32 0.0, %v1265
        %v1267 = vpop.f32.mrb[0].mxu0
        %v1268 = vpop.f32.mrb[0].mxu0
        %v1269 = vadd.f32 0.0, %v1268
        %v1270 = vpop.f32.mrb[0].mxu0
        %1271 = vmatprep.mubr.bf16.mxu0 0
        %1272 = vmatmul.mubr.bf16.gmra.mrb[0].mxu0 %v1146
        %v1273 = vpop.f32.mrb[0].mxu0
        %v1274 = vadd.f32 0.0, %v1273
        %v1275 = vpop.f32.mrb[0].mxu0
        %v1276 = vpop.f32.mrb[0].mxu0
        %v1277 = vadd.f32 0.0, %v1276
        %v1278 = vpop.f32.mrb[0].mxu0
        %1279 = vmatprep.mubr.bf16.mxu0 0
        %1280 = vmatmul.mubr.bf16.gmra.mrb[0].mxu0 %v1147
        %v1281 = vpop.f32.mrb[0].mxu0
        %v1282 = vadd.f32 0.0, %v1281
        %v1283 = vpop.f32.mrb[0].mxu0
        %v1284 = vpop.f32.mrb[0].mxu0
        %v1285 = vadd.f32 0.0, %v1284
        %v1286 = vpop.f32.mrb[0].mxu0
        %1287 = vmatprep.mubr.bf16.mxu0 0
        %1288 = vmatmul.mubr.bf16.gmra.mrb[0].mxu0 %v1148
        %v1289 = vpop.f32.mrb[0].mxu0
        %v1290 = vadd.f32 0.0, %v1289
        %v1291 = vpop.f32.mrb[0].mxu0
        %v1292 = vpop.f32.mrb[0].mxu0
        %v1293 = vadd.f32 0.0, %v1292
        %v1294 = vpop.f32.mrb[0].mxu0
        %1295 = vmatprep.mubr.bf16.mxu0 0
        %1296 = vmatmul.mubr.bf16.gmra.mrb[0].mxu0 %v1149
        %v1297 = vpop.f32.mrb[0].mxu0
        %v1298 = vadd.f32 0.0, %v1297
        %v1299 = vpop.f32.mrb[0].mxu0
        %v1300 = vpop.f32.mrb[0].mxu0
        %v1301 = vadd.f32 0.0, %v1300
        %v1302 = vpop.f32.mrb[0].mxu0
        %1303 = vmatprep.mubr.bf16.mxu0 0
        %1304 = vmatmul.mubr.bf16.gmra.mrb[0].mxu0 %v1150
        %v1305 = vpop.f32.mrb[0].mxu0
        %v1306 = vadd.f32 0.0, %v1305
        %v1307 = vpop.f32.mrb[0].mxu0
        %v1308 = vpop.f32.mrb[0].mxu0
        %v1309 = vadd.f32 0.0, %v1308
        %v1310 = vpop.f32.mrb[0].mxu0
        %1311 = vdwg.mxu0
        %v1312 = vmul.f32 %v1250, 0.17677669
        %v1313 = vmul.f32 %v1253, 0.17677669
        %v1314 = vmul.f32 %v1258, 0.17677669
        %v1315 = vmul.f32 %v1261, 0.17677669
        %v1316 = vmul.f32 %v1266, 0.17677669
        %v1317 = vmul.f32 %v1269, 0.17677669
        %v1318 = vmul.f32 %v1274, 0.17677669
        %v1319 = vmul.f32 %v1277, 0.17677669
        %v1320 = vmul.f32 %v1282, 0.17677669
        %v1321 = vmul.f32 %v1285, 0.17677669
        %v1322 = vmul.f32 %v1290, 0.17677669
        %v1323 = vmul.f32 %v1293, 0.17677669
        %v1324 = vmul.f32 %v1298, 0.17677669
        %v1325 = vmul.f32 %v1301, 0.17677669
        %v1326 = vmul.f32 %v1306, 0.17677669
        %v1327 = vmul.f32 %v1309, 0.17677669
        %v1328 = vpack.c.bf16 %v1313, %v1312
        %v1329 = vpack.c.bf16 %v1315, %v1314
        %v1330 = vpack.c.bf16 %v1317, %v1316
        %v1331 = vpack.c.bf16 %v1319, %v1318
        %v1332 = vpack.c.bf16 %v1321, %v1320
        %v1333 = vpack.c.bf16 %v1323, %v1322
        %v1334 = vpack.c.bf16 %v1325, %v1324
        %v1335 = vpack.c.bf16 %v1327, %v1326
        %1344 = vrot.lane.b32.xlu0 %v1328, 96
        %v1345 = vpop.permute.xlu0 %1344
        %1346 = vrot.lane.b32.xlu0 %v1329, 96
        %v1347 = vpop.permute.xlu0 %1346
        %1348 = vrot.lane.b32.xlu0 %v1330, 96
        %v1349 = vpop.permute.xlu0 %1348
        %1350 = vrot.lane.b32.xlu0 %v1331, 96
        %v1351 = vpop.permute.xlu0 %1350
        %1352 = vrot.lane.b32.xlu0 %v1332, 96
        %v1353 = vpop.permute.xlu0 %1352
        %1354 = vrot.lane.b32.xlu0 %v1333, 96
        %v1355 = vpop.permute.xlu0 %1354
        %1356 = vrot.lane.b32.xlu0 %v1334, 96
        %v1357 = vpop.permute.xlu0 %1356
        %1358 = vrot.lane.b32.xlu0 %v1335, 96
        %v1359 = vpop.permute.xlu0 %1358
        %1360 = vrot.lane.b32.xlu0 %v1328, 64
        %v1361 = vpop.permute.xlu0 %1360
        %1362 = vrot.lane.b32.xlu0 %v1329, 64
        %v1363 = vpop.permute.xlu0 %1362
        %1364 = vrot.lane.b32.xlu0 %v1330, 64
        %v1365 = vpop.permute.xlu0 %1364
        %1366 = vrot.lane.b32.xlu0 %v1331, 64
        %v1367 = vpop.permute.xlu0 %1366
        %1368 = vrot.lane.b32.xlu0 %v1332, 64
        %v1369 = vpop.permute.xlu0 %1368
        %1370 = vrot.lane.b32.xlu0 %v1333, 64
        %v1371 = vpop.permute.xlu0 %1370
        %1372 = vrot.lane.b32.xlu0 %v1334, 64
        %v1373 = vpop.permute.xlu0 %1372
        %1374 = vrot.lane.b32.xlu0 %v1335, 64
        %v1375 = vpop.permute.xlu0 %1374
        %1376 = vrot.lane.b32.xlu0 %v1328, 32
        %v1377 = vpop.permute.xlu0 %1376
        %1378 = vrot.lane.b32.xlu0 %v1329, 32
        %v1379 = vpop.permute.xlu0 %1378
        %1380 = vrot.lane.b32.xlu0 %v1330, 32
        %v1381 = vpop.permute.xlu0 %1380
        %1382 = vrot.lane.b32.xlu0 %v1331, 32
        %v1383 = vpop.permute.xlu0 %1382
        %1384 = vrot.lane.b32.xlu0 %v1332, 32
        %v1385 = vpop.permute.xlu0 %1384
        %1386 = vrot.lane.b32.xlu0 %v1333, 32
        %v1387 = vpop.permute.xlu0 %1386
        %1388 = vrot.lane.b32.xlu0 %v1334, 32
        %v1389 = vpop.permute.xlu0 %1388
        %1390 = vrot.lane.b32.xlu0 %v1335, 32
        %v1391 = vpop.permute.xlu0 %1390
        %v1392 = vld [vmem:[#allocation2] sm:$0xff]
        %v1393 = vld [vmem:[#allocation2 + $0x8] sm:$0xff]
        %v1394 = vld [vmem:[#allocation2 + $0x10] sm:$0xff]
        %v1395 = vld [vmem:[#allocation2 + $0x18] sm:$0xff]
        %v1396 = vld [vmem:[#allocation2 + $0x20] sm:$0xff]
        %v1397 = vld [vmem:[#allocation2 + $0x28] sm:$0xff]
        %v1398 = vld [vmem:[#allocation2 + $0x30] sm:$0xff]
        %v1399 = vld [vmem:[#allocation2 + $0x38] sm:$0xff]
        %v1400 = vld [vmem:[#allocation2 + $0x40] sm:$0xff]
        %v1401 = vld [vmem:[#allocation2 + $0x48] sm:$0xff]
        %v1402 = vld [vmem:[#allocation2 + $0x50] sm:$0xff]
        %v1403 = vld [vmem:[#allocation2 + $0x58] sm:$0xff]
        %v1404 = vld [vmem:[#allocation2 + $0x60] sm:$0xff]
        %v1405 = vld [vmem:[#allocation2 + $0x68] sm:$0xff]
        %v1406 = vld [vmem:[#allocation2 + $0x70] sm:$0xff]
        %v1407 = vld [vmem:[#allocation2 + $0x78] sm:$0xff]
        %v1408 = vld [vmem:[#allocation2 + $0x80] sm:$0xff]
        %v1409 = vld [vmem:[#allocation2 + $0x88] sm:$0xff]
        %v1410 = vld [vmem:[#allocation2 + $0x90] sm:$0xff]
        %v1411 = vld [vmem:[#allocation2 + $0x98] sm:$0xff]
        %v1412 = vld [vmem:[#allocation2 + $0xa0] sm:$0xff]
        %v1413 = vld [vmem:[#allocation2 + $0xa8] sm:$0xff]
        %v1414 = vld [vmem:[#allocation2 + $0xb0] sm:$0xff]
        %v1415 = vld [vmem:[#allocation2 + $0xb8] sm:$0xff]
        %v1416 = vld [vmem:[#allocation2 + $0xc0] sm:$0xff]
        %v1417 = vld [vmem:[#allocation2 + $0xc8] sm:$0xff]
        %v1418 = vld [vmem:[#allocation2 + $0xd0] sm:$0xff]
        %v1419 = vld [vmem:[#allocation2 + $0xd8] sm:$0xff]
        %v1420 = vld [vmem:[#allocation2 + $0xe0] sm:$0xff]
        %v1421 = vld [vmem:[#allocation2 + $0xe8] sm:$0xff]
        %v1422 = vld [vmem:[#allocation2 + $0xf0] sm:$0xff]
        %v1423 = vld [vmem:[#allocation2 + $0xf8] sm:$0xff]
        %v1424 = vld [vmem:[#allocation2 + $0x100] sm:$0xff]
        %v1425 = vld [vmem:[#allocation2 + $0x108] sm:$0xff]
        %v1426 = vld [vmem:[#allocation2 + $0x110] sm:$0xff]
        %v1427 = vld [vmem:[#allocation2 + $0x118] sm:$0xff]
        %v1428 = vld [vmem:[#allocation2 + $0x120] sm:$0xff]
        %v1429 = vld [vmem:[#allocation2 + $0x128] sm:$0xff]
        %v1430 = vld [vmem:[#allocation2 + $0x130] sm:$0xff]
        %v1431 = vld [vmem:[#allocation2 + $0x138] sm:$0xff]
        %v1432 = vld [vmem:[#allocation2 + $0x140] sm:$0xff]
        %v1433 = vld [vmem:[#allocation2 + $0x148] sm:$0xff]
        %v1434 = vld [vmem:[#allocation2 + $0x150] sm:$0xff]
        %v1435 = vld [vmem:[#allocation2 + $0x158] sm:$0xff]
        %v1436 = vld [vmem:[#allocation2 + $0x160] sm:$0xff]
        %v1437 = vld [vmem:[#allocation2 + $0x168] sm:$0xff]
        %v1438 = vld [vmem:[#allocation2 + $0x170] sm:$0xff]
        %v1439 = vld [vmem:[#allocation2 + $0x178] sm:$0xff]
        %v1440 = vld [vmem:[#allocation2 + $0x180] sm:$0xff]
        %v1441 = vld [vmem:[#allocation2 + $0x188] sm:$0xff]
        %v1442 = vld [vmem:[#allocation2 + $0x190] sm:$0xff]
        %v1443 = vld [vmem:[#allocation2 + $0x198] sm:$0xff]
        %v1444 = vld [vmem:[#allocation2 + $0x1a0] sm:$0xff]
        %v1445 = vld [vmem:[#allocation2 + $0x1a8] sm:$0xff]
        %v1446 = vld [vmem:[#allocation2 + $0x1b0] sm:$0xff]
        %v1447 = vld [vmem:[#allocation2 + $0x1b8] sm:$0xff]
        %v1448 = vld [vmem:[#allocation2 + $0x1c0] sm:$0xff]
        %v1449 = vld [vmem:[#allocation2 + $0x1c8] sm:$0xff]
        %v1450 = vld [vmem:[#allocation2 + $0x1d0] sm:$0xff]
        %v1451 = vld [vmem:[#allocation2 + $0x1d8] sm:$0xff]
        %v1452 = vld [vmem:[#allocation2 + $0x1e0] sm:$0xff]
        %v1453 = vld [vmem:[#allocation2 + $0x1e8] sm:$0xff]
        %v1454 = vld [vmem:[#allocation2 + $0x1f0] sm:$0xff]
        %v1455 = vld [vmem:[#allocation2 + $0x1f8] sm:$0xff]
        %v1456 = vld [vmem:[#allocation3] sm:$0xff]
        %v1457 = vld [vmem:[#allocation3 + $0x8] sm:$0xff]
        %v1458 = vld [vmem:[#allocation3 + $0x10] sm:$0xff]
        %v1459 = vld [vmem:[#allocation3 + $0x18] sm:$0xff]
        %v1460 = vld [vmem:[#allocation3 + $0x20] sm:$0xff]
        %v1461 = vld [vmem:[#allocation3 + $0x28] sm:$0xff]
        %v1462 = vld [vmem:[#allocation3 + $0x30] sm:$0xff]
        %v1463 = vld [vmem:[#allocation3 + $0x38] sm:$0xff]
        %v1464 = vld [vmem:[#allocation3 + $0x40] sm:$0xff]
        %v1465 = vld [vmem:[#allocation3 + $0x48] sm:$0xff]
        %v1466 = vld [vmem:[#allocation3 + $0x50] sm:$0xff]
        %v1467 = vld [vmem:[#allocation3 + $0x58] sm:$0xff]
        %v1468 = vld [vmem:[#allocation3 + $0x60] sm:$0xff]
        %v1469 = vld [vmem:[#allocation3 + $0x68] sm:$0xff]
        %v1470 = vld [vmem:[#allocation3 + $0x70] sm:$0xff]
        %v1471 = vld [vmem:[#allocation3 + $0x78] sm:$0xff]
        %v1472 = vld [vmem:[#allocation3 + $0x80] sm:$0xff]
        %v1473 = vld [vmem:[#allocation3 + $0x88] sm:$0xff]
        %v1474 = vld [vmem:[#allocation3 + $0x90] sm:$0xff]
        %v1475 = vld [vmem:[#allocation3 + $0x98] sm:$0xff]
        %v1476 = vld [vmem:[#allocation3 + $0xa0] sm:$0xff]
        %v1477 = vld [vmem:[#allocation3 + $0xa8] sm:$0xff]
        %v1478 = vld [vmem:[#allocation3 + $0xb0] sm:$0xff]
        %v1479 = vld [vmem:[#allocation3 + $0xb8] sm:$0xff]
        %v1480 = vld [vmem:[#allocation3 + $0xc0] sm:$0xff]
        %v1481 = vld [vmem:[#allocation3 + $0xc8] sm:$0xff]
        %v1482 = vld [vmem:[#allocation3 + $0xd0] sm:$0xff]
        %v1483 = vld [vmem:[#allocation3 + $0xd8] sm:$0xff]
        %v1484 = vld [vmem:[#allocation3 + $0xe0] sm:$0xff]
        %v1485 = vld [vmem:[#allocation3 + $0xe8] sm:$0xff]
        %v1486 = vld [vmem:[#allocation3 + $0xf0] sm:$0xff]
        %v1487 = vld [vmem:[#allocation3 + $0xf8] sm:$0xff]
        %v1488 = vld [vmem:[#allocation3 + $0x100] sm:$0xff]
        %v1489 = vld [vmem:[#allocation3 + $0x108] sm:$0xff]
        %v1490 = vld [vmem:[#allocation3 + $0x110] sm:$0xff]
        %v1491 = vld [vmem:[#allocation3 + $0x118] sm:$0xff]
        %v1492 = vld [vmem:[#allocation3 + $0x120] sm:$0xff]
        %v1493 = vld [vmem:[#allocation3 + $0x128] sm:$0xff]
        %v1494 = vld [vmem:[#allocation3 + $0x130] sm:$0xff]
        %v1495 = vld [vmem:[#allocation3 + $0x138] sm:$0xff]
        %v1496 = vld [vmem:[#allocation3 + $0x140] sm:$0xff]
        %v1497 = vld [vmem:[#allocation3 + $0x148] sm:$0xff]
        %v1498 = vld [vmem:[#allocation3 + $0x150] sm:$0xff]
        %v1499 = vld [vmem:[#allocation3 + $0x158] sm:$0xff]
        %v1500 = vld [vmem:[#allocation3 + $0x160] sm:$0xff]
        %v1501 = vld [vmem:[#allocation3 + $0x168] sm:$0xff]
        %v1502 = vld [vmem:[#allocation3 + $0x170] sm:$0xff]
        %v1503 = vld [vmem:[#allocation3 + $0x178] sm:$0xff]
        %v1504 = vld [vmem:[#allocation3 + $0x180] sm:$0xff]
        %v1505 = vld [vmem:[#allocation3 + $0x188] sm:$0xff]
        %v1506 = vld [vmem:[#allocation3 + $0x190] sm:$0xff]
        %v1507 = vld [vmem:[#allocation3 + $0x198] sm:$0xff]
        %v1508 = vld [vmem:[#allocation3 + $0x1a0] sm:$0xff]
        %v1509 = vld [vmem:[#allocation3 + $0x1a8] sm:$0xff]
        %v1510 = vld [vmem:[#allocation3 + $0x1b0] sm:$0xff]
        %v1511 = vld [vmem:[#allocation3 + $0x1b8] sm:$0xff]
        %v1512 = vld [vmem:[#allocation3 + $0x1c0] sm:$0xff]
        %v1513 = vld [vmem:[#allocation3 + $0x1c8] sm:$0xff]
        %v1514 = vld [vmem:[#allocation3 + $0x1d0] sm:$0xff]
        %v1515 = vld [vmem:[#allocation3 + $0x1d8] sm:$0xff]
        %v1516 = vld [vmem:[#allocation3 + $0x1e0] sm:$0xff]
        %v1517 = vld [vmem:[#allocation3 + $0x1e8] sm:$0xff]
        %v1518 = vld [vmem:[#allocation3 + $0x1f0] sm:$0xff]
        %v1519 = vld [vmem:[#allocation3 + $0x1f8] sm:$0xff]
        %vm1520 = vcmask 261120
        %v1522 = vsel %vm1520, %v1328, 0
        %v1525 = vsel %vm1520, %v1329, 0
        %v1528 = vsel %vm1520, %v1330, 0
        %v1531 = vsel %vm1520, %v1331, 0
        %v1534 = vsel %vm1520, %v1332, 0
        %v1537 = vsel %vm1520, %v1333, 0
        %v1540 = vsel %vm1520, %v1334, 0
        %v1543 = vsel %vm1520, %v1335, 0
        %v1546 = vsel %vm1520, %v1392, 0
        %v1549 = vsel %vm1520, %v1393, 0
        %v1552 = vsel %vm1520, %v1394, 0
        %v1555 = vsel %vm1520, %v1395, 0
        %v1558 = vsel %vm1520, %v1396, 0
        %v1561 = vsel %vm1520, %v1397, 0
        %v1564 = vsel %vm1520, %v1398, 0
        %v1567 = vsel %vm1520, %v1399, 0
        %v1570 = vsel %vm1520, %v1400, 0
        %v1573 = vsel %vm1520, %v1401, 0
        %v1576 = vsel %vm1520, %v1402, 0
        %v1579 = vsel %vm1520, %v1403, 0
        %v1582 = vsel %vm1520, %v1404, 0
        %v1585 = vsel %vm1520, %v1405, 0
        %v1588 = vsel %vm1520, %v1406, 0
        %v1591 = vsel %vm1520, %v1407, 0
        %1593 = vmatprep.subr.bf16.mxu0 0
        %1594 = vmatpush1.bf16.xpose.msra.mxu0 %v1546
        %1595 = vmatprep.subr.bf16.mxu0 0
        %1596 = vmatpush1.bf16.xpose.msra.mxu0 %v1549
        %1597 = vmatprep.subr.bf16.mxu0 0
        %1598 = vmatpush1.bf16.xpose.msra.mxu0 %v1552
        %1599 = vmatprep.subr.bf16.mxu0 0
        %1600 = vmatpush1.bf16.xpose.msra.mxu0 %v1555
        %1601 = vmatprep.subr.bf16.mxu0 0
        %1602 = vmatpush1.bf16.xpose.msra.mxu0 %v1558
        %1603 = vmatprep.subr.bf16.mxu0 0
        %1604 = vmatpush1.bf16.xpose.msra.mxu0 %v1561
        %1605 = vmatprep.subr.bf16.mxu0 0
        %1606 = vmatpush1.bf16.xpose.msra.mxu0 %v1564
        %1607 = vmatprep.subr.bf16.mxu0 0
        %1608 = vmatpush1.bf16.xpose.msra.mxu0 %v1567
        %1609 = vmatprep.subr.bf16.mxu0 0
        %1610 = vmatpush1.bf16.xpose.msra.mxu0 %v1570
        %1611 = vmatprep.subr.bf16.mxu0 0
        %1612 = vmatpush1.bf16.xpose.msra.mxu0 %v1573
        %1613 = vmatprep.subr.bf16.mxu0 0
        %1614 = vmatpush1.bf16.xpose.msra.mxu0 %v1576
        %1615 = vmatprep.subr.bf16.mxu0 0
        %1616 = vmatpush1.bf16.xpose.msra.mxu0 %v1579
        %1617 = vmatprep.subr.bf16.mxu0 0
        %1618 = vmatpush1.bf16.xpose.msra.mxu0 %v1582
        %1619 = vmatprep.subr.bf16.mxu0 0
        %1620 = vmatpush1.bf16.xpose.msra.mxu0 %v1585
        %1621 = vmatprep.subr.bf16.mxu0 0
        %1622 = vmatpush1.bf16.xpose.msra.mxu0 %v1588
        %1623 = vmatprep.subr.bf16.mxu0 0
        %1624 = vmatpush1.bf16.xpose.msra.mxu0 %v1591
        %1625 = vmatprep.mubr.bf16.mxu0 0
        %1626 = vmatmul.mubr.bf16.gmra.mrb[0].mxu0 %v1522
        %v1627 = vpop.f32.mrb[0].mxu0
        %v1628 = vadd.f32 0.0, %v1627
        %v1629 = vpop.f32.mrb[0].mxu0
        %v1630 = vadd.f32 0.0, %v1629
        %v1631 = vpop.f32.mrb[0].mxu0
        %v1632 = vadd.f32 0.0, %v1631
        %v1633 = vpop.f32.mrb[0].mxu0
        %v1634 = vadd.f32 0.0, %v1633
        %1635 = vmatprep.mubr.bf16.mxu0 0
        %1636 = vmatmul.mubr.bf16.gmra.mrb[0].mxu0 %v1525
        %v1637 = vpop.f32.mrb[0].mxu0
        %v1638 = vadd.f32 0.0, %v1637
        %v1639 = vpop.f32.mrb[0].mxu0
        %v1640 = vadd.f32 0.0, %v1639
        %v1641 = vpop.f32.mrb[0].mxu0
        %v1642 = vadd.f32 0.0, %v1641
        %v1643 = vpop.f32.mrb[0].mxu0
        %v1644 = vadd.f32 0.0, %v1643
        %1645 = vmatprep.mubr.bf16.mxu0 0
        %1646 = vmatmul.mubr.bf16.gmra.mrb[0].mxu0 %v1528
        %v1647 = vpop.f32.mrb[0].mxu0
        %v1648 = vadd.f32 0.0, %v1647
        %v1649 = vpop.f32.mrb[0].mxu0
        %v1650 = vadd.f32 0.0, %v1649
        %v1651 = vpop.f32.mrb[0].mxu0
        %v1652 = vadd.f32 0.0, %v1651
        %v1653 = vpop.f32.mrb[0].mxu0
        %v1654 = vadd.f32 0.0, %v1653
        %1655 = vmatprep.mubr.bf16.mxu0 0
        %1656 = vmatmul.mubr.bf16.gmra.mrb[0].mxu0 %v1531
        %v1657 = vpop.f32.mrb[0].mxu0
        %v1658 = vadd.f32 0.0, %v1657
        %v1659 = vpop.f32.mrb[0].mxu0
        %v1660 = vadd.f32 0.0, %v1659
        %v1661 = vpop.f32.mrb[0].mxu0
        %v1662 = vadd.f32 0.0, %v1661
        %v1663 = vpop.f32.mrb[0].mxu0
        %v1664 = vadd.f32 0.0, %v1663
        %1665 = vmatprep.mubr.bf16.mxu0 0
        %1666 = vmatmul.mubr.bf16.gmra.mrb[0].mxu0 %v1534
        %v1667 = vpop.f32.mrb[0].mxu0
        %v1668 = vadd.f32 0.0, %v1667
        %v1669 = vpop.f32.mrb[0].mxu0
        %v1670 = vadd.f32 0.0, %v1669
        %v1671 = vpop.f32.mrb[0].mxu0
        %v1672 = vadd.f32 0.0, %v1671
        %v1673 = vpop.f32.mrb[0].mxu0
        %v1674 = vadd.f32 0.0, %v1673
        %1675 = vmatprep.mubr.bf16.mxu0 0
        %1676 = vmatmul.mubr.bf16.gmra.mrb[0].mxu0 %v1537
        %v1677 = vpop.f32.mrb[0].mxu0
        %v1678 = vadd.f32 0.0, %v1677
        %v1679 = vpop.f32.mrb[0].mxu0
        %v1680 = vadd.f32 0.0, %v1679
        %v1681 = vpop.f32.mrb[0].mxu0
        %v1682 = vadd.f32 0.0, %v1681
        %v1683 = vpop.f32.mrb[0].mxu0
        %v1684 = vadd.f32 0.0, %v1683
        %1685 = vmatprep.mubr.bf16.mxu0 0
        %1686 = vmatmul.mubr.bf16.gmra.mrb[0].mxu0 %v1540
        %v1687 = vpop.f32.mrb[0].mxu0
        %v1688 = vadd.f32 0.0, %v1687
        %v1689 = vpop.f32.mrb[0].mxu0
        %v1690 = vadd.f32 0.0, %v1689
        %v1691 = vpop.f32.mrb[0].mxu0
        %v1692 = vadd.f32 0.0, %v1691
        %v1693 = vpop.f32.mrb[0].mxu0
        %v1694 = vadd.f32 0.0, %v1693
        %1695 = vmatprep.mubr.bf16.mxu0 0
        %1696 = vmatmul.mubr.bf16.gmra.mrb[0].mxu0 %v1543
        %v1697 = vpop.f32.mrb[0].mxu0
        %v1698 = vadd.f32 0.0, %v1697
        %v1699 = vpop.f32.mrb[0].mxu0
        %v1700 = vadd.f32 0.0, %v1699
        %v1701 = vpop.f32.mrb[0].mxu0
        %v1702 = vadd.f32 0.0, %v1701
        %v1703 = vpop.f32.mrb[0].mxu0
        %v1704 = vadd.f32 0.0, %v1703
        %1705 = vdwg.mxu0
        %v1707 = vsel %vm1520, %v1345, 0
        %v1710 = vsel %vm1520, %v1347, 0
        %v1713 = vsel %vm1520, %v1349, 0
        %v1716 = vsel %vm1520, %v1351, 0
        %v1719 = vsel %vm1520, %v1353, 0
        %v1722 = vsel %vm1520, %v1355, 0
        %v1725 = vsel %vm1520, %v1357, 0
        %v1728 = vsel %vm1520, %v1359, 0
        %v1731 = vsel %vm1520, %v1408, 0
        %v1734 = vsel %vm1520, %v1409, 0
        %v1737 = vsel %vm1520, %v1410, 0
        %v1740 = vsel %vm1520, %v1411, 0
        %v1743 = vsel %vm1520, %v1412, 0
        %v1746 = vsel %vm1520, %v1413, 0
        %v1749 = vsel %vm1520, %v1414, 0
        %v1752 = vsel %vm1520, %v1415, 0
        %v1755 = vsel %vm1520, %v1416, 0
        %v1758 = vsel %vm1520, %v1417, 0
        %v1761 = vsel %vm1520, %v1418, 0
        %v1764 = vsel %vm1520, %v1419, 0
        %v1767 = vsel %vm1520, %v1420, 0
        %v1770 = vsel %vm1520, %v1421, 0
        %v1773 = vsel %vm1520, %v1422, 0
        %v1776 = vsel %vm1520, %v1423, 0
        %1778 = vmatprep.subr.bf16.mxu0 0
        %1779 = vmatpush1.bf16.xpose.msra.mxu0 %v1731
        %1780 = vmatprep.subr.bf16.mxu0 0
        %1781 = vmatpush1.bf16.xpose.msra.mxu0 %v1734
        %1782 = vmatprep.subr.bf16.mxu0 0
        %1783 = vmatpush1.bf16.xpose.msra.mxu0 %v1737
        %1784 = vmatprep.subr.bf16.mxu0 0
        %1785 = vmatpush1.bf16.xpose.msra.mxu0 %v1740
        %1786 = vmatprep.subr.bf16.mxu0 0
        %1787 = vmatpush1.bf16.xpose.msra.mxu0 %v1743
        %1788 = vmatprep.subr.bf16.mxu0 0
        %1789 = vmatpush1.bf16.xpose.msra.mxu0 %v1746
        %1790 = vmatprep.subr.bf16.mxu0 0
        %1791 = vmatpush1.bf16.xpose.msra.mxu0 %v1749
        %1792 = vmatprep.subr.bf16.mxu0 0
        %1793 = vmatpush1.bf16.xpose.msra.mxu0 %v1752
        %1794 = vmatprep.subr.bf16.mxu0 0
        %1795 = vmatpush1.bf16.xpose.msra.mxu0 %v1755
        %1796 = vmatprep.subr.bf16.mxu0 0
        %1797 = vmatpush1.bf16.xpose.msra.mxu0 %v1758
        %1798 = vmatprep.subr.bf16.mxu0 0
        %1799 = vmatpush1.bf16.xpose.msra.mxu0 %v1761
        %1800 = vmatprep.subr.bf16.mxu0 0
        %1801 = vmatpush1.bf16.xpose.msra.mxu0 %v1764
        %1802 = vmatprep.subr.bf16.mxu0 0
        %1803 = vmatpush1.bf16.xpose.msra.mxu0 %v1767
        %1804 = vmatprep.subr.bf16.mxu0 0
        %1805 = vmatpush1.bf16.xpose.msra.mxu0 %v1770
        %1806 = vmatprep.subr.bf16.mxu0 0
        %1807 = vmatpush1.bf16.xpose.msra.mxu0 %v1773
        %1808 = vmatprep.subr.bf16.mxu0 0
        %1809 = vmatpush1.bf16.xpose.msra.mxu0 %v1776
        %1810 = vmatprep.mubr.bf16.mxu0 0
        %1811 = vmatmul.mubr.bf16.gmra.mrb[0].mxu0 %v1707
        %v1812 = vpop.f32.mrb[0].mxu0
        %v1813 = vadd.f32 0.0, %v1812
        %v1814 = vpop.f32.mrb[0].mxu0
        %v1815 = vadd.f32 0.0, %v1814
        %v1816 = vpop.f32.mrb[0].mxu0
        %v1817 = vadd.f32 0.0, %v1816
        %v1818 = vpop.f32.mrb[0].mxu0
        %v1819 = vadd.f32 0.0, %v1818
        %1820 = vmatprep.mubr.bf16.mxu0 0
        %1821 = vmatmul.mubr.bf16.gmra.mrb[0].mxu0 %v1710
        %v1822 = vpop.f32.mrb[0].mxu0
        %v1823 = vadd.f32 0.0, %v1822
        %v1824 = vpop.f32.mrb[0].mxu0
        %v1825 = vadd.f32 0.0, %v1824
        %v1826 = vpop.f32.mrb[0].mxu0
        %v1827 = vadd.f32 0.0, %v1826
        %v1828 = vpop.f32.mrb[0].mxu0
        %v1829 = vadd.f32 0.0, %v1828
        %1830 = vmatprep.mubr.bf16.mxu0 0
        %1831 = vmatmul.mubr.bf16.gmra.mrb[0].mxu0 %v1713
        %v1832 = vpop.f32.mrb[0].mxu0
        %v1833 = vadd.f32 0.0, %v1832
        %v1834 = vpop.f32.mrb[0].mxu0
        %v1835 = vadd.f32 0.0, %v1834
        %v1836 = vpop.f32.mrb[0].mxu0
        %v1837 = vadd.f32 0.0, %v1836
        %v1838 = vpop.f32.mrb[0].mxu0
        %v1839 = vadd.f32 0.0, %v1838
        %1840 = vmatprep.mubr.bf16.mxu0 0
        %1841 = vmatmul.mubr.bf16.gmra.mrb[0].mxu0 %v1716
        %v1842 = vpop.f32.mrb[0].mxu0
        %v1843 = vadd.f32 0.0, %v1842
        %v1844 = vpop.f32.mrb[0].mxu0
        %v1845 = vadd.f32 0.0, %v1844
        %v1846 = vpop.f32.mrb[0].mxu0
        %v1847 = vadd.f32 0.0, %v1846
        %v1848 = vpop.f32.mrb[0].mxu0
        %v1849 = vadd.f32 0.0, %v1848
        %1850 = vmatprep.mubr.bf16.mxu0 0
        %1851 = vmatmul.mubr.bf16.gmra.mrb[0].mxu0 %v1719
        %v1852 = vpop.f32.mrb[0].mxu0
        %v1853 = vadd.f32 0.0, %v1852
        %v1854 = vpop.f32.mrb[0].mxu0
        %v1855 = vadd.f32 0.0, %v1854
        %v1856 = vpop.f32.mrb[0].mxu0
        %v1857 = vadd.f32 0.0, %v1856
        %v1858 = vpop.f32.mrb[0].mxu0
        %v1859 = vadd.f32 0.0, %v1858
        %1860 = vmatprep.mubr.bf16.mxu0 0
        %1861 = vmatmul.mubr.bf16.gmra.mrb[0].mxu0 %v1722
        %v1862 = vpop.f32.mrb[0].mxu0
        %v1863 = vadd.f32 0.0, %v1862
        %v1864 = vpop.f32.mrb[0].mxu0
        %v1865 = vadd.f32 0.0, %v1864
        %v1866 = vpop.f32.mrb[0].mxu0
        %v1867 = vadd.f32 0.0, %v1866
        %v1868 = vpop.f32.mrb[0].mxu0
        %v1869 = vadd.f32 0.0, %v1868
        %1870 = vmatprep.mubr.bf16.mxu0 0
        %1871 = vmatmul.mubr.bf16.gmra.mrb[0].mxu0 %v1725
        %v1872 = vpop.f32.mrb[0].mxu0
        %v1873 = vadd.f32 0.0, %v1872
        %v1874 = vpop.f32.mrb[0].mxu0
        %v1875 = vadd.f32 0.0, %v1874
        %v1876 = vpop.f32.mrb[0].mxu0
        %v1877 = vadd.f32 0.0, %v1876
        %v1878 = vpop.f32.mrb[0].mxu0
        %v1879 = vadd.f32 0.0, %v1878
        %1880 = vmatprep.mubr.bf16.mxu0 0
        %1881 = vmatmul.mubr.bf16.gmra.mrb[0].mxu0 %v1728
        %v1882 = vpop.f32.mrb[0].mxu0
        %v1883 = vadd.f32 0.0, %v1882
        %v1884 = vpop.f32.mrb[0].mxu0
        %v1885 = vadd.f32 0.0, %v1884
        %v1886 = vpop.f32.mrb[0].mxu0
        %v1887 = vadd.f32 0.0, %v1886
        %v1888 = vpop.f32.mrb[0].mxu0
        %v1889 = vadd.f32 0.0, %v1888
        %1890 = vdwg.mxu0
        %v1892 = vsel %vm1520, %v1361, 0
        %v1895 = vsel %vm1520, %v1363, 0
        %v1898 = vsel %vm1520, %v1365, 0
        %v1901 = vsel %vm1520, %v1367, 0
        %v1904 = vsel %vm1520, %v1369, 0
        %v1907 = vsel %vm1520, %v1371, 0
        %v1910 = vsel %vm1520, %v1373, 0
        %v1913 = vsel %vm1520, %v1375, 0
        %v1916 = vsel %vm1520, %v1424, 0
        %v1919 = vsel %vm1520, %v1425, 0
        %v1922 = vsel %vm1520, %v1426, 0
        %v1925 = vsel %vm1520, %v1427, 0
        %v1928 = vsel %vm1520, %v1428, 0
        %v1931 = vsel %vm1520, %v1429, 0
        %v1934 = vsel %vm1520, %v1430, 0
        %v1937 = vsel %vm1520, %v1431, 0
        %v1940 = vsel %vm1520, %v1432, 0
        %v1943 = vsel %vm1520, %v1433, 0
        %v1946 = vsel %vm1520, %v1434, 0
        %v1949 = vsel %vm1520, %v1435, 0
        %v1952 = vsel %vm1520, %v1436, 0
        %v1955 = vsel %vm1520, %v1437, 0
        %v1958 = vsel %vm1520, %v1438, 0
        %v1961 = vsel %vm1520, %v1439, 0
        %1963 = vmatprep.subr.bf16.mxu0 0
        %1964 = vmatpush1.bf16.xpose.msra.mxu0 %v1916
        %1965 = vmatprep.subr.bf16.mxu0 0
        %1966 = vmatpush1.bf16.xpose.msra.mxu0 %v1919
        %1967 = vmatprep.subr.bf16.mxu0 0
        %1968 = vmatpush1.bf16.xpose.msra.mxu0 %v1922
        %1969 = vmatprep.subr.bf16.mxu0 0
        %1970 = vmatpush1.bf16.xpose.msra.mxu0 %v1925
        %1971 = vmatprep.subr.bf16.mxu0 0
        %1972 = vmatpush1.bf16.xpose.msra.mxu0 %v1928
        %1973 = vmatprep.subr.bf16.mxu0 0
        %1974 = vmatpush1.bf16.xpose.msra.mxu0 %v1931
        %1975 = vmatprep.subr.bf16.mxu0 0
        %1976 = vmatpush1.bf16.xpose.msra.mxu0 %v1934
        %1977 = vmatprep.subr.bf16.mxu0 0
        %1978 = vmatpush1.bf16.xpose.msra.mxu0 %v1937
        %1979 = vmatprep.subr.bf16.mxu0 0
        %1980 = vmatpush1.bf16.xpose.msra.mxu0 %v1940
        %1981 = vmatprep.subr.bf16.mxu0 0
        %1982 = vmatpush1.bf16.xpose.msra.mxu0 %v1943
        %1983 = vmatprep.subr.bf16.mxu0 0
        %1984 = vmatpush1.bf16.xpose.msra.mxu0 %v1946
        %1985 = vmatprep.subr.bf16.mxu0 0
        %1986 = vmatpush1.bf16.xpose.msra.mxu0 %v1949
        %1987 = vmatprep.subr.bf16.mxu0 0
        %1988 = vmatpush1.bf16.xpose.msra.mxu0 %v1952
        %1989 = vmatprep.subr.bf16.mxu0 0
        %1990 = vmatpush1.bf16.xpose.msra.mxu0 %v1955
        %1991 = vmatprep.subr.bf16.mxu0 0
        %1992 = vmatpush1.bf16.xpose.msra.mxu0 %v1958
        %1993 = vmatprep.subr.bf16.mxu0 0
        %1994 = vmatpush1.bf16.xpose.msra.mxu0 %v1961
        %1995 = vmatprep.mubr.bf16.mxu0 0
        %1996 = vmatmul.mubr.bf16.gmra.mrb[0].mxu0 %v1892
        %v1997 = vpop.f32.mrb[0].mxu0
        %v1998 = vadd.f32 0.0, %v1997
        %v1999 = vpop.f32.mrb[0].mxu0
        %v2000 = vadd.f32 0.0, %v1999
        %v2001 = vpop.f32.mrb[0].mxu0
        %v2002 = vadd.f32 0.0, %v2001
        %v2003 = vpop.f32.mrb[0].mxu0
        %v2004 = vadd.f32 0.0, %v2003
        %2005 = vmatprep.mubr.bf16.mxu0 0
        %2006 = vmatmul.mubr.bf16.gmra.mrb[0].mxu0 %v1895
        %v2007 = vpop.f32.mrb[0].mxu0
        %v2008 = vadd.f32 0.0, %v2007
        %v2009 = vpop.f32.mrb[0].mxu0
        %v2010 = vadd.f32 0.0, %v2009
        %v2011 = vpop.f32.mrb[0].mxu0
        %v2012 = vadd.f32 0.0, %v2011
        %v2013 = vpop.f32.mrb[0].mxu0
        %v2014 = vadd.f32 0.0, %v2013
        %2015 = vmatprep.mubr.bf16.mxu0 0
        %2016 = vmatmul.mubr.bf16.gmra.mrb[0].mxu0 %v1898
        %v2017 = vpop.f32.mrb[0].mxu0
        %v2018 = vadd.f32 0.0, %v2017
        %v2019 = vpop.f32.mrb[0].mxu0
        %v2020 = vadd.f32 0.0, %v2019
        %v2021 = vpop.f32.mrb[0].mxu0
        %v2022 = vadd.f32 0.0, %v2021
        %v2023 = vpop.f32.mrb[0].mxu0
        %v2024 = vadd.f32 0.0, %v2023
        %2025 = vmatprep.mubr.bf16.mxu0 0
        %2026 = vmatmul.mubr.bf16.gmra.mrb[0].mxu0 %v1901
        %v2027 = vpop.f32.mrb[0].mxu0
        %v2028 = vadd.f32 0.0, %v2027
        %v2029 = vpop.f32.mrb[0].mxu0
        %v2030 = vadd.f32 0.0, %v2029
        %v2031 = vpop.f32.mrb[0].mxu0
        %v2032 = vadd.f32 0.0, %v2031
        %v2033 = vpop.f32.mrb[0].mxu0
        %v2034 = vadd.f32 0.0, %v2033
        %2035 = vmatprep.mubr.bf16.mxu0 0
        %2036 = vmatmul.mubr.bf16.gmra.mrb[0].mxu0 %v1904
        %v2037 = vpop.f32.mrb[0].mxu0
        %v2038 = vadd.f32 0.0, %v2037
        %v2039 = vpop.f32.mrb[0].mxu0
        %v2040 = vadd.f32 0.0, %v2039
        %v2041 = vpop.f32.mrb[0].mxu0
        %v2042 = vadd.f32 0.0, %v2041
        %v2043 = vpop.f32.mrb[0].mxu0
        %v2044 = vadd.f32 0.0, %v2043
        %2045 = vmatprep.mubr.bf16.mxu0 0
        %2046 = vmatmul.mubr.bf16.gmra.mrb[0].mxu0 %v1907
        %v2047 = vpop.f32.mrb[0].mxu0
        %v2048 = vadd.f32 0.0, %v2047
        %v2049 = vpop.f32.mrb[0].mxu0
        %v2050 = vadd.f32 0.0, %v2049
        %v2051 = vpop.f32.mrb[0].mxu0
        %v2052 = vadd.f32 0.0, %v2051
        %v2053 = vpop.f32.mrb[0].mxu0
        %v2054 = vadd.f32 0.0, %v2053
        %2055 = vmatprep.mubr.bf16.mxu0 0
        %2056 = vmatmul.mubr.bf16.gmra.mrb[0].mxu0 %v1910
        %v2057 = vpop.f32.mrb[0].mxu0
        %v2058 = vadd.f32 0.0, %v2057
        %v2059 = vpop.f32.mrb[0].mxu0
        %v2060 = vadd.f32 0.0, %v2059
        %v2061 = vpop.f32.mrb[0].mxu0
        %v2062 = vadd.f32 0.0, %v2061
        %v2063 = vpop.f32.mrb[0].mxu0
        %v2064 = vadd.f32 0.0, %v2063
        %2065 = vmatprep.mubr.bf16.mxu0 0
        %2066 = vmatmul.mubr.bf16.gmra.mrb[0].mxu0 %v1913
        %v2067 = vpop.f32.mrb[0].mxu0
        %v2068 = vadd.f32 0.0, %v2067
        %v2069 = vpop.f32.mrb[0].mxu0
        %v2070 = vadd.f32 0.0, %v2069
        %v2071 = vpop.f32.mrb[0].mxu0
        %v2072 = vadd.f32 0.0, %v2071
        %v2073 = vpop.f32.mrb[0].mxu0
        %v2074 = vadd.f32 0.0, %v2073
        %2075 = vdwg.mxu0
        %v2077 = vsel %vm1520, %v1377, 0
        %v2080 = vsel %vm1520, %v1379, 0
        %v2083 = vsel %vm1520, %v1381, 0
        %v2086 = vsel %vm1520, %v1383, 0
        %v2089 = vsel %vm1520, %v1385, 0
        %v2092 = vsel %vm1520, %v1387, 0
        %v2095 = vsel %vm1520, %v1389, 0
        %v2098 = vsel %vm1520, %v1391, 0
        %v2101 = vsel %vm1520, %v1440, 0
        %v2104 = vsel %vm1520, %v1441, 0
        %v2107 = vsel %vm1520, %v1442, 0
        %v2110 = vsel %vm1520, %v1443, 0
        %v2113 = vsel %vm1520, %v1444, 0
        %v2116 = vsel %vm1520, %v1445, 0
        %v2119 = vsel %vm1520, %v1446, 0
        %v2122 = vsel %vm1520, %v1447, 0
        %v2125 = vsel %vm1520, %v1448, 0
        %v2128 = vsel %vm1520, %v1449, 0
        %v2131 = vsel %vm1520, %v1450, 0
        %v2134 = vsel %vm1520, %v1451, 0
        %v2137 = vsel %vm1520, %v1452, 0
        %v2140 = vsel %vm1520, %v1453, 0
        %v2143 = vsel %vm1520, %v1454, 0
        %v2146 = vsel %vm1520, %v1455, 0
        %2148 = vmatprep.subr.bf16.mxu0 0
        %2149 = vmatpush1.bf16.xpose.msra.mxu0 %v2101
        %2150 = vmatprep.subr.bf16.mxu0 0
        %2151 = vmatpush1.bf16.xpose.msra.mxu0 %v2104
        %2152 = vmatprep.subr.bf16.mxu0 0
        %2153 = vmatpush1.bf16.xpose.msra.mxu0 %v2107
        %2154 = vmatprep.subr.bf16.mxu0 0
        %2155 = vmatpush1.bf16.xpose.msra.mxu0 %v2110
        %2156 = vmatprep.subr.bf16.mxu0 0
        %2157 = vmatpush1.bf16.xpose.msra.mxu0 %v2113
        %2158 = vmatprep.subr.bf16.mxu0 0
        %2159 = vmatpush1.bf16.xpose.msra.mxu0 %v2116
        %2160 = vmatprep.subr.bf16.mxu0 0
        %2161 = vmatpush1.bf16.xpose.msra.mxu0 %v2119
        %2162 = vmatprep.subr.bf16.mxu0 0
        %2163 = vmatpush1.bf16.xpose.msra.mxu0 %v2122
        %2164 = vmatprep.subr.bf16.mxu0 0
        %2165 = vmatpush1.bf16.xpose.msra.mxu0 %v2125
        %2166 = vmatprep.subr.bf16.mxu0 0
        %2167 = vmatpush1.bf16.xpose.msra.mxu0 %v2128
        %2168 = vmatprep.subr.bf16.mxu0 0
        %2169 = vmatpush1.bf16.xpose.msra.mxu0 %v2131
        %2170 = vmatprep.subr.bf16.mxu0 0
        %2171 = vmatpush1.bf16.xpose.msra.mxu0 %v2134
        %2172 = vmatprep.subr.bf16.mxu0 0
        %2173 = vmatpush1.bf16.xpose.msra.mxu0 %v2137
        %2174 = vmatprep.subr.bf16.mxu0 0
        %2175 = vmatpush1.bf16.xpose.msra.mxu0 %v2140
        %2176 = vmatprep.subr.bf16.mxu0 0
        %2177 = vmatpush1.bf16.xpose.msra.mxu0 %v2143
        %2178 = vmatprep.subr.bf16.mxu0 0
        %2179 = vmatpush1.bf16.xpose.msra.mxu0 %v2146
        %2180 = vmatprep.mubr.bf16.mxu0 0
        %2181 = vmatmul.mubr.bf16.gmra.mrb[0].mxu0 %v2077
        %v2182 = vpop.f32.mrb[0].mxu0
        %v2183 = vadd.f32 0.0, %v2182
        %v2184 = vpop.f32.mrb[0].mxu0
        %v2185 = vadd.f32 0.0, %v2184
        %v2186 = vpop.f32.mrb[0].mxu0
        %v2187 = vadd.f32 0.0, %v2186
        %v2188 = vpop.f32.mrb[0].mxu0
        %v2189 = vadd.f32 0.0, %v2188
        %2190 = vmatprep.mubr.bf16.mxu0 0
        %2191 = vmatmul.mubr.bf16.gmra.mrb[0].mxu0 %v2080
        %v2192 = vpop.f32.mrb[0].mxu0
        %v2193 = vadd.f32 0.0, %v2192
        %v2194 = vpop.f32.mrb[0].mxu0
        %v2195 = vadd.f32 0.0, %v2194
        %v2196 = vpop.f32.mrb[0].mxu0
        %v2197 = vadd.f32 0.0, %v2196
        %v2198 = vpop.f32.mrb[0].mxu0
        %v2199 = vadd.f32 0.0, %v2198
        %2200 = vmatprep.mubr.bf16.mxu0 0
        %2201 = vmatmul.mubr.bf16.gmra.mrb[0].mxu0 %v2083
        %v2202 = vpop.f32.mrb[0].mxu0
        %v2203 = vadd.f32 0.0, %v2202
        %v2204 = vpop.f32.mrb[0].mxu0
        %v2205 = vadd.f32 0.0, %v2204
        %v2206 = vpop.f32.mrb[0].mxu0
        %v2207 = vadd.f32 0.0, %v2206
        %v2208 = vpop.f32.mrb[0].mxu0
        %v2209 = vadd.f32 0.0, %v2208
        %2210 = vmatprep.mubr.bf16.mxu0 0
        %2211 = vmatmul.mubr.bf16.gmra.mrb[0].mxu0 %v2086
        %v2212 = vpop.f32.mrb[0].mxu0
        %v2213 = vadd.f32 0.0, %v2212
        %v2214 = vpop.f32.mrb[0].mxu0
        %v2215 = vadd.f32 0.0, %v2214
        %v2216 = vpop.f32.mrb[0].mxu0
        %v2217 = vadd.f32 0.0, %v2216
        %v2218 = vpop.f32.mrb[0].mxu0
        %v2219 = vadd.f32 0.0, %v2218
        %2220 = vmatprep.mubr.bf16.mxu0 0
        %2221 = vmatmul.mubr.bf16.gmra.mrb[0].mxu0 %v2089
        %v2222 = vpop.f32.mrb[0].mxu0
        %v2223 = vadd.f32 0.0, %v2222
        %v2224 = vpop.f32.mrb[0].mxu0
        %v2225 = vadd.f32 0.0, %v2224
        %v2226 = vpop.f32.mrb[0].mxu0
        %v2227 = vadd.f32 0.0, %v2226
        %v2228 = vpop.f32.mrb[0].mxu0
        %v2229 = vadd.f32 0.0, %v2228
        %2230 = vmatprep.mubr.bf16.mxu0 0
        %2231 = vmatmul.mubr.bf16.gmra.mrb[0].mxu0 %v2092
        %v2232 = vpop.f32.mrb[0].mxu0
        %v2233 = vadd.f32 0.0, %v2232
        %v2234 = vpop.f32.mrb[0].mxu0
        %v2235 = vadd.f32 0.0, %v2234
        %v2236 = vpop.f32.mrb[0].mxu0
        %v2237 = vadd.f32 0.0, %v2236
        %v2238 = vpop.f32.mrb[0].mxu0
        %v2239 = vadd.f32 0.0, %v2238
        %2240 = vmatprep.mubr.bf16.mxu0 0
        %2241 = vmatmul.mubr.bf16.gmra.mrb[0].mxu0 %v2095
        %v2242 = vpop.f32.mrb[0].mxu0
        %v2243 = vadd.f32 0.0, %v2242
        %v2244 = vpop.f32.mrb[0].mxu0
        %v2245 = vadd.f32 0.0, %v2244
        %v2246 = vpop.f32.mrb[0].mxu0
        %v2247 = vadd.f32 0.0, %v2246
        %v2248 = vpop.f32.mrb[0].mxu0
        %v2249 = vadd.f32 0.0, %v2248
        %2250 = vmatprep.mubr.bf16.mxu0 0
        %2251 = vmatmul.mubr.bf16.gmra.mrb[0].mxu0 %v2098
        %v2252 = vpop.f32.mrb[0].mxu0
        %v2253 = vadd.f32 0.0, %v2252
        %v2254 = vpop.f32.mrb[0].mxu0
        %v2255 = vadd.f32 0.0, %v2254
        %v2256 = vpop.f32.mrb[0].mxu0
        %v2257 = vadd.f32 0.0, %v2256
        %v2258 = vpop.f32.mrb[0].mxu0
        %v2259 = vadd.f32 0.0, %v2258
        %2260 = vdwg.mxu0
        %v2261 = vmax.f32 %v1628, %v1630
        %2262 = vmax.xlane.f32.xlu0 %v2261
        %v2263 = vpop.xlane.xlu0 %2262
        %v2264 = vmax.f32 %v1632, %v1634
        %2265 = vmax.xlane.f32.xlu0 %v2264
        %v2266 = vpop.xlane.xlu0 %2265
        %v2267 = vmax.f32 %v1638, %v1640
        %2268 = vmax.xlane.f32.xlu0 %v2267
        %v2269 = vpop.xlane.xlu0 %2268
        %v2270 = vmax.f32 %v1642, %v1644
        %2271 = vmax.xlane.f32.xlu0 %v2270
        %v2272 = vpop.xlane.xlu0 %2271
        %v2273 = vmax.f32 %v1648, %v1650
        %2274 = vmax.xlane.f32.xlu0 %v2273
        %v2275 = vpop.xlane.xlu0 %2274
        %v2276 = vmax.f32 %v1652, %v1654
        %2277 = vmax.xlane.f32.xlu0 %v2276
        %v2278 = vpop.xlane.xlu0 %2277
        %v2279 = vmax.f32 %v1658, %v1660
        %2280 = vmax.xlane.f32.xlu0 %v2279
        %v2281 = vpop.xlane.xlu0 %2280
        %v2282 = vmax.f32 %v1662, %v1664
        %2283 = vmax.xlane.f32.xlu0 %v2282
        %v2284 = vpop.xlane.xlu0 %2283
        %v2285 = vmax.f32 %v1668, %v1670
        %2286 = vmax.xlane.f32.xlu0 %v2285
        %v2287 = vpop.xlane.xlu0 %2286
        %v2288 = vmax.f32 %v1672, %v1674
        %2289 = vmax.xlane.f32.xlu0 %v2288
        %v2290 = vpop.xlane.xlu0 %2289
        %v2291 = vmax.f32 %v1678, %v1680
        %2292 = vmax.xlane.f32.xlu0 %v2291
        %v2293 = vpop.xlane.xlu0 %2292
        %v2294 = vmax.f32 %v1682, %v1684
        %2295 = vmax.xlane.f32.xlu0 %v2294
        %v2296 = vpop.xlane.xlu0 %2295
        %v2297 = vmax.f32 %v1688, %v1690
        %2298 = vmax.xlane.f32.xlu0 %v2297
        %v2299 = vpop.xlane.xlu0 %2298
        %v2300 = vmax.f32 %v1692, %v1694
        %2301 = vmax.xlane.f32.xlu0 %v2300
        %v2302 = vpop.xlane.xlu0 %2301
        %v2303 = vmax.f32 %v1698, %v1700
        %2304 = vmax.xlane.f32.xlu0 %v2303
        %v2305 = vpop.xlane.xlu0 %2304
        %v2306 = vmax.f32 %v1702, %v1704
        %2307 = vmax.xlane.f32.xlu0 %v2306
        %v2308 = vpop.xlane.xlu0 %2307
        %v2309 = vmax.f32 %v1813, %v1815
        %2310 = vmax.xlane.f32.xlu0 %v2309
        %v2311 = vpop.xlane.xlu0 %2310
        %v2312 = vmax.f32 %v1817, %v1819
        %2313 = vmax.xlane.f32.xlu0 %v2312
        %v2314 = vpop.xlane.xlu0 %2313
        %v2315 = vmax.f32 %v1823, %v1825
        %2316 = vmax.xlane.f32.xlu0 %v2315
        %v2317 = vpop.xlane.xlu0 %2316
        %v2318 = vmax.f32 %v1827, %v1829
        %2319 = vmax.xlane.f32.xlu0 %v2318
        %v2320 = vpop.xlane.xlu0 %2319
        %v2321 = vmax.f32 %v1833, %v1835
        %2322 = vmax.xlane.f32.xlu0 %v2321
        %v2323 = vpop.xlane.xlu0 %2322
        %v2324 = vmax.f32 %v1837, %v1839
        %2325 = vmax.xlane.f32.xlu0 %v2324
        %v2326 = vpop.xlane.xlu0 %2325
        %v2327 = vmax.f32 %v1843, %v1845
        %2328 = vmax.xlane.f32.xlu0 %v2327
        %v2329 = vpop.xlane.xlu0 %2328
        %v2330 = vmax.f32 %v1847, %v1849
        %2331 = vmax.xlane.f32.xlu0 %v2330
        %v2332 = vpop.xlane.xlu0 %2331
        %v2333 = vmax.f32 %v1853, %v1855
        %2334 = vmax.xlane.f32.xlu0 %v2333
        %v2335 = vpop.xlane.xlu0 %2334
        %v2336 = vmax.f32 %v1857, %v1859
        %2337 = vmax.xlane.f32.xlu0 %v2336
        %v2338 = vpop.xlane.xlu0 %2337
        %v2339 = vmax.f32 %v1863, %v1865
        %2340 = vmax.xlane.f32.xlu0 %v2339
        %v2341 = vpop.xlane.xlu0 %2340
        %v2342 = vmax.f32 %v1867, %v1869
        %2343 = vmax.xlane.f32.xlu0 %v2342
        %v2344 = vpop.xlane.xlu0 %2343
        %v2345 = vmax.f32 %v1873, %v1875
        %2346 = vmax.xlane.f32.xlu0 %v2345
        %v2347 = vpop.xlane.xlu0 %2346
        %v2348 = vmax.f32 %v1877, %v1879
        %2349 = vmax.xlane.f32.xlu0 %v2348
        %v2350 = vpop.xlane.xlu0 %2349
        %v2351 = vmax.f32 %v1883, %v1885
        %2352 = vmax.xlane.f32.xlu0 %v2351
        %v2353 = vpop.xlane.xlu0 %2352
        %v2354 = vmax.f32 %v1887, %v1889
        %2355 = vmax.xlane.f32.xlu0 %v2354
        %v2356 = vpop.xlane.xlu0 %2355
        %v2357 = vmax.f32 %v1998, %v2000
        %2358 = vmax.xlane.f32.xlu0 %v2357
        %v2359 = vpop.xlane.xlu0 %2358
        %v2360 = vmax.f32 %v2002, %v2004
        %2361 = vmax.xlane.f32.xlu0 %v2360
        %v2362 = vpop.xlane.xlu0 %2361
        %v2363 = vmax.f32 %v2008, %v2010
        %2364 = vmax.xlane.f32.xlu0 %v2363
        %v2365 = vpop.xlane.xlu0 %2364
        %v2366 = vmax.f32 %v2012, %v2014
        %2367 = vmax.xlane.f32.xlu0 %v2366
        %v2368 = vpop.xlane.xlu0 %2367
        %v2369 = vmax.f32 %v2018, %v2020
        %2370 = vmax.xlane.f32.xlu0 %v2369
        %v2371 = vpop.xlane.xlu0 %2370
        %v2372 = vmax.f32 %v2022, %v2024
        %2373 = vmax.xlane.f32.xlu0 %v2372
        %v2374 = vpop.xlane.xlu0 %2373
        %v2375 = vmax.f32 %v2028, %v2030
        %2376 = vmax.xlane.f32.xlu0 %v2375
        %v2377 = vpop.xlane.xlu0 %2376
        %v2378 = vmax.f32 %v2032, %v2034
        %2379 = vmax.xlane.f32.xlu0 %v2378
        %v2380 = vpop.xlane.xlu0 %2379
        %v2381 = vmax.f32 %v2038, %v2040
        %2382 = vmax.xlane.f32.xlu0 %v2381
        %v2383 = vpop.xlane.xlu0 %2382
        %v2384 = vmax.f32 %v2042, %v2044
        %2385 = vmax.xlane.f32.xlu0 %v2384
        %v2386 = vpop.xlane.xlu0 %2385
        %v2387 = vmax.f32 %v2048, %v2050
        %2388 = vmax.xlane.f32.xlu0 %v2387
        %v2389 = vpop.xlane.xlu0 %2388
        %v2390 = vmax.f32 %v2052, %v2054
        %2391 = vmax.xlane.f32.xlu0 %v2390
        %v2392 = vpop.xlane.xlu0 %2391
        %v2393 = vmax.f32 %v2058, %v2060
        %2394 = vmax.xlane.f32.xlu0 %v2393
        %v2395 = vpop.xlane.xlu0 %2394
        %v2396 = vmax.f32 %v2062, %v2064
        %2397 = vmax.xlane.f32.xlu0 %v2396
        %v2398 = vpop.xlane.xlu0 %2397
        %v2399 = vmax.f32 %v2068, %v2070
        %2400 = vmax.xlane.f32.xlu0 %v2399
        %v2401 = vpop.xlane.xlu0 %2400
        %v2402 = vmax.f32 %v2072, %v2074
        %2403 = vmax.xlane.f32.xlu0 %v2402
        %v2404 = vpop.xlane.xlu0 %2403
        %v2405 = vmax.f32 %v2183, %v2185
        %2406 = vmax.xlane.f32.xlu0 %v2405
        %v2407 = vpop.xlane.xlu0 %2406
        %v2408 = vmax.f32 %v2187, %v2189
        %2409 = vmax.xlane.f32.xlu0 %v2408
        %v2410 = vpop.xlane.xlu0 %2409
        %v2411 = vmax.f32 %v2193, %v2195
        %2412 = vmax.xlane.f32.xlu0 %v2411
        %v2413 = vpop.xlane.xlu0 %2412
        %v2414 = vmax.f32 %v2197, %v2199
        %2415 = vmax.xlane.f32.xlu0 %v2414
        %v2416 = vpop.xlane.xlu0 %2415
        %v2417 = vmax.f32 %v2203, %v2205
        %2418 = vmax.xlane.f32.xlu0 %v2417
        %v2419 = vpop.xlane.xlu0 %2418
        %v2420 = vmax.f32 %v2207, %v2209
        %2421 = vmax.xlane.f32.xlu0 %v2420
        %v2422 = vpop.xlane.xlu0 %2421
        %v2423 = vmax.f32 %v2213, %v2215
        %2424 = vmax.xlane.f32.xlu0 %v2423
        %v2425 = vpop.xlane.xlu0 %2424
        %v2426 = vmax.f32 %v2217, %v2219
        %2427 = vmax.xlane.f32.xlu0 %v2426
        %v2428 = vpop.xlane.xlu0 %2427
        %v2429 = vmax.f32 %v2223, %v2225
        %2430 = vmax.xlane.f32.xlu0 %v2429
        %v2431 = vpop.xlane.xlu0 %2430
        %v2432 = vmax.f32 %v2227, %v2229
        %2433 = vmax.xlane.f32.xlu0 %v2432
        %v2434 = vpop.xlane.xlu0 %2433
        %v2435 = vmax.f32 %v2233, %v2235
        %2436 = vmax.xlane.f32.xlu0 %v2435
        %v2437 = vpop.xlane.xlu0 %2436
        %v2438 = vmax.f32 %v2237, %v2239
        %2439 = vmax.xlane.f32.xlu0 %v2438
        %v2440 = vpop.xlane.xlu0 %2439
        %v2441 = vmax.f32 %v2243, %v2245
        %2442 = vmax.xlane.f32.xlu0 %v2441
        %v2443 = vpop.xlane.xlu0 %2442
        %v2444 = vmax.f32 %v2247, %v2249
        %2445 = vmax.xlane.f32.xlu0 %v2444
        %v2446 = vpop.xlane.xlu0 %2445
        %v2447 = vmax.f32 %v2253, %v2255
        %2448 = vmax.xlane.f32.xlu0 %v2447
        %v2449 = vpop.xlane.xlu0 %2448
        %v2450 = vmax.f32 %v2257, %v2259
        %2451 = vmax.xlane.f32.xlu0 %v2450
        %v2452 = vpop.xlane.xlu0 %2451
        %v2453 = vsub.f32 %v1628, %v2263
        %v2454 = vsub.f32 %v1630, %v2263
        %v2455 = vsub.f32 %v1632, %v2266
        %v2456 = vsub.f32 %v1634, %v2266
        %v2457 = vsub.f32 %v1638, %v2269
        %v2458 = vsub.f32 %v1640, %v2269
        %v2459 = vsub.f32 %v1642, %v2272
        %v2460 = vsub.f32 %v1644, %v2272
        %v2461 = vsub.f32 %v1648, %v2275
        %v2462 = vsub.f32 %v1650, %v2275
        %v2463 = vsub.f32 %v1652, %v2278
        %v2464 = vsub.f32 %v1654, %v2278
        %v2465 = vsub.f32 %v1658, %v2281
        %v2466 = vsub.f32 %v1660, %v2281
        %v2467 = vsub.f32 %v1662, %v2284
        %v2468 = vsub.f32 %v1664, %v2284
        %v2469 = vsub.f32 %v1668, %v2287
        %v2470 = vsub.f32 %v1670, %v2287
        %v2471 = vsub.f32 %v1672, %v2290
        %v2472 = vsub.f32 %v1674, %v2290
        %v2473 = vsub.f32 %v1678, %v2293
        %v2474 = vsub.f32 %v1680, %v2293
        %v2475 = vsub.f32 %v1682, %v2296
        %v2476 = vsub.f32 %v1684, %v2296
        %v2477 = vsub.f32 %v1688, %v2299
        %v2478 = vsub.f32 %v1690, %v2299
        %v2479 = vsub.f32 %v1692, %v2302
        %v2480 = vsub.f32 %v1694, %v2302
        %v2481 = vsub.f32 %v1698, %v2305
        %v2482 = vsub.f32 %v1700, %v2305
        %v2483 = vsub.f32 %v1702, %v2308
        %v2484 = vsub.f32 %v1704, %v2308
        %v2485 = vsub.f32 %v1813, %v2311
        %v2486 = vsub.f32 %v1815, %v2311
        %v2487 = vsub.f32 %v1817, %v2314
        %v2488 = vsub.f32 %v1819, %v2314
        %v2489 = vsub.f32 %v1823, %v2317
        %v2490 = vsub.f32 %v1825, %v2317
        %v2491 = vsub.f32 %v1827, %v2320
        %v2492 = vsub.f32 %v1829, %v2320
        %v2493 = vsub.f32 %v1833, %v2323
        %v2494 = vsub.f32 %v1835, %v2323
        %v2495 = vsub.f32 %v1837, %v2326
        %v2496 = vsub.f32 %v1839, %v2326
        %v2497 = vsub.f32 %v1843, %v2329
        %v2498 = vsub.f32 %v1845, %v2329
        %v2499 = vsub.f32 %v1847, %v2332
        %v2500 = vsub.f32 %v1849, %v2332
        %v2501 = vsub.f32 %v1853, %v2335
        %v2502 = vsub.f32 %v1855, %v2335
        %v2503 = vsub.f32 %v1857, %v2338
        %v2504 = vsub.f32 %v1859, %v2338
        %v2505 = vsub.f32 %v1863, %v2341
        %v2506 = vsub.f32 %v1865, %v2341
        %v2507 = vsub.f32 %v1867, %v2344
        %v2508 = vsub.f32 %v1869, %v2344
        %v2509 = vsub.f32 %v1873, %v2347
        %v2510 = vsub.f32 %v1875, %v2347
        %v2511 = vsub.f32 %v1877, %v2350
        %v2512 = vsub.f32 %v1879, %v2350
        %v2513 = vsub.f32 %v1883, %v2353
        %v2514 = vsub.f32 %v1885, %v2353
        %v2515 = vsub.f32 %v1887, %v2356
        %v2516 = vsub.f32 %v1889, %v2356
        %v2517 = vsub.f32 %v1998, %v2359
        %v2518 = vsub.f32 %v2000, %v2359
        %v2519 = vsub.f32 %v2002, %v2362
        %v2520 = vsub.f32 %v2004, %v2362
        %v2521 = vsub.f32 %v2008, %v2365
        %v2522 = vsub.f32 %v2010, %v2365
        %v2523 = vsub.f32 %v2012, %v2368
        %v2524 = vsub.f32 %v2014, %v2368
        %v2525 = vsub.f32 %v2018, %v2371
        %v2526 = vsub.f32 %v2020, %v2371
        %v2527 = vsub.f32 %v2022, %v2374
        %v2528 = vsub.f32 %v2024, %v2374
        %v2529 = vsub.f32 %v2028, %v2377
        %v2530 = vsub.f32 %v2030, %v2377
        %v2531 = vsub.f32 %v2032, %v2380
        %v2532 = vsub.f32 %v2034, %v2380
        %v2533 = vsub.f32 %v2038, %v2383
        %v2534 = vsub.f32 %v2040, %v2383
        %v2535 = vsub.f32 %v2042, %v2386
        %v2536 = vsub.f32 %v2044, %v2386
        %v2537 = vsub.f32 %v2048, %v2389
        %v2538 = vsub.f32 %v2050, %v2389
        %v2539 = vsub.f32 %v2052, %v2392
        %v2540 = vsub.f32 %v2054, %v2392
        %v2541 = vsub.f32 %v2058, %v2395
        %v2542 = vsub.f32 %v2060, %v2395
        %v2543 = vsub.f32 %v2062, %v2398
        %v2544 = vsub.f32 %v2064, %v2398
        %v2545 = vsub.f32 %v2068, %v2401
        %v2546 = vsub.f32 %v2070, %v2401
        %v2547 = vsub.f32 %v2072, %v2404
        %v2548 = vsub.f32 %v2074, %v2404
        %v2549 = vsub.f32 %v2183, %v2407
        %v2550 = vsub.f32 %v2185, %v2407
        %v2551 = vsub.f32 %v2187, %v2410
        %v2552 = vsub.f32 %v2189, %v2410
        %v2553 = vsub.f32 %v2193, %v2413
        %v2554 = vsub.f32 %v2195, %v2413
        %v2555 = vsub.f32 %v2197, %v2416
        %v2556 = vsub.f32 %v2199, %v2416
        %v2557 = vsub.f32 %v2203, %v2419
        %v2558 = vsub.f32 %v2205, %v2419
        %v2559 = vsub.f32 %v2207, %v2422
        %v2560 = vsub.f32 %v2209, %v2422
        %v2561 = vsub.f32 %v2213, %v2425
        %v2562 = vsub.f32 %v2215, %v2425
        %v2563 = vsub.f32 %v2217, %v2428
        %v2564 = vsub.f32 %v2219, %v2428
        %v2565 = vsub.f32 %v2223, %v2431
        %v2566 = vsub.f32 %v2225, %v2431
        %v2567 = vsub.f32 %v2227, %v2434
        %v2568 = vsub.f32 %v2229, %v2434
        %v2569 = vsub.f32 %v2233, %v2437
        %v2570 = vsub.f32 %v2235, %v2437
        %v2571 = vsub.f32 %v2237, %v2440
        %v2572 = vsub.f32 %v2239, %v2440
        %v2573 = vsub.f32 %v2243, %v2443
        %v2574 = vsub.f32 %v2245, %v2443
        %v2575 = vsub.f32 %v2247, %v2446
        %v2576 = vsub.f32 %v2249, %v2446
        %v2577 = vsub.f32 %v2253, %v2449
        %v2578 = vsub.f32 %v2255, %v2449
        %v2579 = vsub.f32 %v2257, %v2452
        %v2580 = vsub.f32 %v2259, %v2452
        %v2581 = vmul.f32 %v2453, 1.442695
        %v2582 = vpow.pop %v2581
        %v2583 = vmul.f32 %v2454, 1.442695
        %v2584 = vpow.pop %v2583
        %v2585 = vmul.f32 %v2455, 1.442695
        %v2586 = vpow.pop %v2585
        %v2587 = vmul.f32 %v2456, 1.442695
        %v2588 = vpow.pop %v2587
        %v2589 = vmul.f32 %v2457, 1.442695
        %v2590 = vpow.pop %v2589
        %v2591 = vmul.f32 %v2458, 1.442695
        %v2592 = vpow.pop %v2591
        %v2593 = vmul.f32 %v2459, 1.442695
        %v2594 = vpow.pop %v2593
        %v2595 = vmul.f32 %v2460, 1.442695
        %v2596 = vpow.pop %v2595
        %v2597 = vmul.f32 %v2461, 1.442695
        %v2598 = vpow.pop %v2597
        %v2599 = vmul.f32 %v2462, 1.442695
        %v2600 = vpow.pop %v2599
        %v2601 = vmul.f32 %v2463, 1.442695
        %v2602 = vpow.pop %v2601
        %v2603 = vmul.f32 %v2464, 1.442695
        %v2604 = vpow.pop %v2603
        %v2605 = vmul.f32 %v2465, 1.442695
        %v2606 = vpow.pop %v2605
        %v2607 = vmul.f32 %v2466, 1.442695
        %v2608 = vpow.pop %v2607
        %v2609 = vmul.f32 %v2467, 1.442695
        %v2610 = vpow.pop %v2609
        %v2611 = vmul.f32 %v2468, 1.442695
        %v2612 = vpow.pop %v2611
        %v2613 = vmul.f32 %v2469, 1.442695
        %v2614 = vpow.pop %v2613
        %v2615 = vmul.f32 %v2470, 1.442695
        %v2616 = vpow.pop %v2615
        %v2617 = vmul.f32 %v2471, 1.442695
        %v2618 = vpow.pop %v2617
        %v2619 = vmul.f32 %v2472, 1.442695
        %v2620 = vpow.pop %v2619
        %v2621 = vmul.f32 %v2473, 1.442695
        %v2622 = vpow.pop %v2621
        %v2623 = vmul.f32 %v2474, 1.442695
        %v2624 = vpow.pop %v2623
        %v2625 = vmul.f32 %v2475, 1.442695
        %v2626 = vpow.pop %v2625
        %v2627 = vmul.f32 %v2476, 1.442695
        %v2628 = vpow.pop %v2627
        %v2629 = vmul.f32 %v2477, 1.442695
        %v2630 = vpow.pop %v2629
        %v2631 = vmul.f32 %v2478, 1.442695
        %v2632 = vpow.pop %v2631
        %v2633 = vmul.f32 %v2479, 1.442695
        %v2634 = vpow.pop %v2633
        %v2635 = vmul.f32 %v2480, 1.442695
        %v2636 = vpow.pop %v2635
        %v2637 = vmul.f32 %v2481, 1.442695
        %v2638 = vpow.pop %v2637
        %v2639 = vmul.f32 %v2482, 1.442695
        %v2640 = vpow.pop %v2639
        %v2641 = vmul.f32 %v2483, 1.442695
        %v2642 = vpow.pop %v2641
        %v2643 = vmul.f32 %v2484, 1.442695
        %v2644 = vpow.pop %v2643
        %v2645 = vmul.f32 %v2485, 1.442695
        %v2646 = vpow.pop %v2645
        %v2647 = vmul.f32 %v2486, 1.442695
        %v2648 = vpow.pop %v2647
        %v2649 = vmul.f32 %v2487, 1.442695
        %v2650 = vpow.pop %v2649
        %v2651 = vmul.f32 %v2488, 1.442695
        %v2652 = vpow.pop %v2651
        %v2653 = vmul.f32 %v2489, 1.442695
        %v2654 = vpow.pop %v2653
        %v2655 = vmul.f32 %v2490, 1.442695
        %v2656 = vpow.pop %v2655
        %v2657 = vmul.f32 %v2491, 1.442695
        %v2658 = vpow.pop %v2657
        %v2659 = vmul.f32 %v2492, 1.442695
        %v2660 = vpow.pop %v2659
        %v2661 = vmul.f32 %v2493, 1.442695
        %v2662 = vpow.pop %v2661
        %v2663 = vmul.f32 %v2494, 1.442695
        %v2664 = vpow.pop %v2663
        %v2665 = vmul.f32 %v2495, 1.442695
        %v2666 = vpow.pop %v2665
        %v2667 = vmul.f32 %v2496, 1.442695
        %v2668 = vpow.pop %v2667
        %v2669 = vmul.f32 %v2497, 1.442695
        %v2670 = vpow.pop %v2669
        %v2671 = vmul.f32 %v2498, 1.442695
        %v2672 = vpow.pop %v2671
        %v2673 = vmul.f32 %v2499, 1.442695
        %v2674 = vpow.pop %v2673
        %v2675 = vmul.f32 %v2500, 1.442695
        %v2676 = vpow.pop %v2675
        %v2677 = vmul.f32 %v2501, 1.442695
        %v2678 = vpow.pop %v2677
        %v2679 = vmul.f32 %v2502, 1.442695
        %v2680 = vpow.pop %v2679
        %v2681 = vmul.f32 %v2503, 1.442695
        %v2682 = vpow.pop %v2681
        %v2683 = vmul.f32 %v2504, 1.442695
        %v2684 = vpow.pop %v2683
        %v2685 = vmul.f32 %v2505, 1.442695
        %v2686 = vpow.pop %v2685
        %v2687 = vmul.f32 %v2506, 1.442695
        %v2688 = vpow.pop %v2687
        %v2689 = vmul.f32 %v2507, 1.442695
        %v2690 = vpow.pop %v2689
        %v2691 = vmul.f32 %v2508, 1.442695
        %v2692 = vpow.pop %v2691
        %v2693 = vmul.f32 %v2509, 1.442695
        %v2694 = vpow.pop %v2693
        %v2695 = vmul.f32 %v2510, 1.442695
        %v2696 = vpow.pop %v2695
        %v2697 = vmul.f32 %v2511, 1.442695
        %v2698 = vpow.pop %v2697
        %v2699 = vmul.f32 %v2512, 1.442695
        %v2700 = vpow.pop %v2699
        %v2701 = vmul.f32 %v2513, 1.442695
        %v2702 = vpow.pop %v2701
        %v2703 = vmul.f32 %v2514, 1.442695
        %v2704 = vpow.pop %v2703
        %v2705 = vmul.f32 %v2515, 1.442695
        %v2706 = vpow.pop %v2705
        %v2707 = vmul.f32 %v2516, 1.442695
        %v2708 = vpow.pop %v2707
        %v2709 = vmul.f32 %v2517, 1.442695
        %v2710 = vpow.pop %v2709
        %v2711 = vmul.f32 %v2518, 1.442695
        %v2712 = vpow.pop %v2711
        %v2713 = vmul.f32 %v2519, 1.442695
        %v2714 = vpow.pop %v2713
        %v2715 = vmul.f32 %v2520, 1.442695
        %v2716 = vpow.pop %v2715
        %v2717 = vmul.f32 %v2521, 1.442695
        %v2718 = vpow.pop %v2717
        %v2719 = vmul.f32 %v2522, 1.442695
        %v2720 = vpow.pop %v2719
        %v2721 = vmul.f32 %v2523, 1.442695
        %v2722 = vpow.pop %v2721
        %v2723 = vmul.f32 %v2524, 1.442695
        %v2724 = vpow.pop %v2723
        %v2725 = vmul.f32 %v2525, 1.442695
        %v2726 = vpow.pop %v2725
        %v2727 = vmul.f32 %v2526, 1.442695
        %v2728 = vpow.pop %v2727
        %v2729 = vmul.f32 %v2527, 1.442695
        %v2730 = vpow.pop %v2729
        %v2731 = vmul.f32 %v2528, 1.442695
        %v2732 = vpow.pop %v2731
        %v2733 = vmul.f32 %v2529, 1.442695
        %v2734 = vpow.pop %v2733
        %v2735 = vmul.f32 %v2530, 1.442695
        %v2736 = vpow.pop %v2735
        %v2737 = vmul.f32 %v2531, 1.442695
        %v2738 = vpow.pop %v2737
        %v2739 = vmul.f32 %v2532, 1.442695
        %v2740 = vpow.pop %v2739
        %v2741 = vmul.f32 %v2533, 1.442695
        %v2742 = vpow.pop %v2741
        %v2743 = vmul.f32 %v2534, 1.442695
        %v2744 = vpow.pop %v2743
        %v2745 = vmul.f32 %v2535, 1.442695
        %v2746 = vpow.pop %v2745
        %v2747 = vmul.f32 %v2536, 1.442695
        %v2748 = vpow.pop %v2747
        %v2749 = vmul.f32 %v2537, 1.442695
        %v2750 = vpow.pop %v2749
        %v2751 = vmul.f32 %v2538, 1.442695
        %v2752 = vpow.pop %v2751
        %v2753 = vmul.f32 %v2539, 1.442695
        %v2754 = vpow.pop %v2753
        %v2755 = vmul.f32 %v2540, 1.442695
        %v2756 = vpow.pop %v2755
        %v2757 = vmul.f32 %v2541, 1.442695
        %v2758 = vpow.pop %v2757
        %v2759 = vmul.f32 %v2542, 1.442695
        %v2760 = vpow.pop %v2759
        %v2761 = vmul.f32 %v2543, 1.442695
        %v2762 = vpow.pop %v2761
        %v2763 = vmul.f32 %v2544, 1.442695
        %v2764 = vpow.pop %v2763
        %v2765 = vmul.f32 %v2545, 1.442695
        %v2766 = vpow.pop %v2765
        %v2767 = vmul.f32 %v2546, 1.442695
        %v2768 = vpow.pop %v2767
        %v2769 = vmul.f32 %v2547, 1.442695
        %v2770 = vpow.pop %v2769
        %v2771 = vmul.f32 %v2548, 1.442695
        %v2772 = vpow.pop %v2771
        %v2773 = vmul.f32 %v2549, 1.442695
        %v2774 = vpow.pop %v2773
        %v2775 = vmul.f32 %v2550, 1.442695
        %v2776 = vpow.pop %v2775
        %v2777 = vmul.f32 %v2551, 1.442695
        %v2778 = vpow.pop %v2777
        %v2779 = vmul.f32 %v2552, 1.442695
        %v2780 = vpow.pop %v2779
        %v2781 = vmul.f32 %v2553, 1.442695
        %v2782 = vpow.pop %v2781
        %v2783 = vmul.f32 %v2554, 1.442695
        %v2784 = vpow.pop %v2783
        %v2785 = vmul.f32 %v2555, 1.442695
        %v2786 = vpow.pop %v2785
        %v2787 = vmul.f32 %v2556, 1.442695
        %v2788 = vpow.pop %v2787
        %v2789 = vmul.f32 %v2557, 1.442695
        %v2790 = vpow.pop %v2789
        %v2791 = vmul.f32 %v2558, 1.442695
        %v2792 = vpow.pop %v2791
        %v2793 = vmul.f32 %v2559, 1.442695
        %v2794 = vpow.pop %v2793
        %v2795 = vmul.f32 %v2560, 1.442695
        %v2796 = vpow.pop %v2795
        %v2797 = vmul.f32 %v2561, 1.442695
        %v2798 = vpow.pop %v2797
        %v2799 = vmul.f32 %v2562, 1.442695
        %v2800 = vpow.pop %v2799
        %v2801 = vmul.f32 %v2563, 1.442695
        %v2802 = vpow.pop %v2801
        %v2803 = vmul.f32 %v2564, 1.442695
        %v2804 = vpow.pop %v2803
        %v2805 = vmul.f32 %v2565, 1.442695
        %v2806 = vpow.pop %v2805
        %v2807 = vmul.f32 %v2566, 1.442695
        %v2808 = vpow.pop %v2807
        %v2809 = vmul.f32 %v2567, 1.442695
        %v2810 = vpow.pop %v2809
        %v2811 = vmul.f32 %v2568, 1.442695
        %v2812 = vpow.pop %v2811
        %v2813 = vmul.f32 %v2569, 1.442695
        %v2814 = vpow.pop %v2813
        %v2815 = vmul.f32 %v2570, 1.442695
        %v2816 = vpow.pop %v2815
        %v2817 = vmul.f32 %v2571, 1.442695
        %v2818 = vpow.pop %v2817
        %v2819 = vmul.f32 %v2572, 1.442695
        %v2820 = vpow.pop %v2819
        %v2821 = vmul.f32 %v2573, 1.442695
        %v2822 = vpow.pop %v2821
        %v2823 = vmul.f32 %v2574, 1.442695
        %v2824 = vpow.pop %v2823
        %v2825 = vmul.f32 %v2575, 1.442695
        %v2826 = vpow.pop %v2825
        %v2827 = vmul.f32 %v2576, 1.442695
        %v2828 = vpow.pop %v2827
        %v2829 = vmul.f32 %v2577, 1.442695
        %v2830 = vpow.pop %v2829
        %v2831 = vmul.f32 %v2578, 1.442695
        %v2832 = vpow.pop %v2831
        %v2833 = vmul.f32 %v2579, 1.442695
        %v2834 = vpow.pop %v2833
        %v2835 = vmul.f32 %v2580, 1.442695
        %v2836 = vpow.pop %v2835
        %v2837 = vadd.f32 %v2582, %v2584
        %2838 = vadd.xlane.f32.xlu0 %v2837
        %v2839 = vpop.xlane.xlu0 %2838
        %v2840 = vadd.f32 %v2586, %v2588
        %2841 = vadd.xlane.f32.xlu0 %v2840
        %v2842 = vpop.xlane.xlu0 %2841
        %v2843 = vadd.f32 %v2590, %v2592
        %2844 = vadd.xlane.f32.xlu0 %v2843
        %v2845 = vpop.xlane.xlu0 %2844
        %v2846 = vadd.f32 %v2594, %v2596
        %2847 = vadd.xlane.f32.xlu0 %v2846
        %v2848 = vpop.xlane.xlu0 %2847
        %v2849 = vadd.f32 %v2598, %v2600
        %2850 = vadd.xlane.f32.xlu0 %v2849
        %v2851 = vpop.xlane.xlu0 %2850
        %v2852 = vadd.f32 %v2602, %v2604
        %2853 = vadd.xlane.f32.xlu0 %v2852
        %v2854 = vpop.xlane.xlu0 %2853
        %v2855 = vadd.f32 %v2606, %v2608
        %2856 = vadd.xlane.f32.xlu0 %v2855
        %v2857 = vpop.xlane.xlu0 %2856
        %v2858 = vadd.f32 %v2610, %v2612
        %2859 = vadd.xlane.f32.xlu0 %v2858
        %v2860 = vpop.xlane.xlu0 %2859
        %v2861 = vadd.f32 %v2614, %v2616
        %2862 = vadd.xlane.f32.xlu0 %v2861
        %v2863 = vpop.xlane.xlu0 %2862
        %v2864 = vadd.f32 %v2618, %v2620
        %2865 = vadd.xlane.f32.xlu0 %v2864
        %v2866 = vpop.xlane.xlu0 %2865
        %v2867 = vadd.f32 %v2622, %v2624
        %2868 = vadd.xlane.f32.xlu0 %v2867
        %v2869 = vpop.xlane.xlu0 %2868
        %v2870 = vadd.f32 %v2626, %v2628
        %2871 = vadd.xlane.f32.xlu0 %v2870
        %v2872 = vpop.xlane.xlu0 %2871
        %v2873 = vadd.f32 %v2630, %v2632
        %2874 = vadd.xlane.f32.xlu0 %v2873
        %v2875 = vpop.xlane.xlu0 %2874
        %v2876 = vadd.f32 %v2634, %v2636
        %2877 = vadd.xlane.f32.xlu0 %v2876
        %v2878 = vpop.xlane.xlu0 %2877
        %v2879 = vadd.f32 %v2638, %v2640
        %2880 = vadd.xlane.f32.xlu0 %v2879
        %v2881 = vpop.xlane.xlu0 %2880
        %v2882 = vadd.f32 %v2642, %v2644
        %2883 = vadd.xlane.f32.xlu0 %v2882
        %v2884 = vpop.xlane.xlu0 %2883
        %v2885 = vadd.f32 %v2646, %v2648
        %2886 = vadd.xlane.f32.xlu0 %v2885
        %v2887 = vpop.xlane.xlu0 %2886
        %v2888 = vadd.f32 %v2650, %v2652
        %2889 = vadd.xlane.f32.xlu0 %v2888
        %v2890 = vpop.xlane.xlu0 %2889
        %v2891 = vadd.f32 %v2654, %v2656
        %2892 = vadd.xlane.f32.xlu0 %v2891
        %v2893 = vpop.xlane.xlu0 %2892
        %v2894 = vadd.f32 %v2658, %v2660
        %2895 = vadd.xlane.f32.xlu0 %v2894
        %v2896 = vpop.xlane.xlu0 %2895
        %v2897 = vadd.f32 %v2662, %v2664
        %2898 = vadd.xlane.f32.xlu0 %v2897
        %v2899 = vpop.xlane.xlu0 %2898
        %v2900 = vadd.f32 %v2666, %v2668
        %2901 = vadd.xlane.f32.xlu0 %v2900
        %v2902 = vpop.xlane.xlu0 %2901
        %v2903 = vadd.f32 %v2670, %v2672
        %2904 = vadd.xlane.f32.xlu0 %v2903
        %v2905 = vpop.xlane.xlu0 %2904
        %v2906 = vadd.f32 %v2674, %v2676
        %2907 = vadd.xlane.f32.xlu0 %v2906
        %v2908 = vpop.xlane.xlu0 %2907
        %v2909 = vadd.f32 %v2678, %v2680
        %2910 = vadd.xlane.f32.xlu0 %v2909
        %v2911 = vpop.xlane.xlu0 %2910
        %v2912 = vadd.f32 %v2682, %v2684
        %2913 = vadd.xlane.f32.xlu0 %v2912
        %v2914 = vpop.xlane.xlu0 %2913
        %v2915 = vadd.f32 %v2686, %v2688
        %2916 = vadd.xlane.f32.xlu0 %v2915
        %v2917 = vpop.xlane.xlu0 %2916
        %v2918 = vadd.f32 %v2690, %v2692
        %2919 = vadd.xlane.f32.xlu0 %v2918
        %v2920 = vpop.xlane.xlu0 %2919
        %v2921 = vadd.f32 %v2694, %v2696
        %2922 = vadd.xlane.f32.xlu0 %v2921
        %v2923 = vpop.xlane.xlu0 %2922
        %v2924 = vadd.f32 %v2698, %v2700
        %2925 = vadd.xlane.f32.xlu0 %v2924
        %v2926 = vpop.xlane.xlu0 %2925
        %v2927 = vadd.f32 %v2702, %v2704
        %2928 = vadd.xlane.f32.xlu0 %v2927
        %v2929 = vpop.xlane.xlu0 %2928
        %v2930 = vadd.f32 %v2706, %v2708
        %2931 = vadd.xlane.f32.xlu0 %v2930
        %v2932 = vpop.xlane.xlu0 %2931
        %v2933 = vadd.f32 %v2710, %v2712
        %2934 = vadd.xlane.f32.xlu0 %v2933
        %v2935 = vpop.xlane.xlu0 %2934
        %v2936 = vadd.f32 %v2714, %v2716
        %2937 = vadd.xlane.f32.xlu0 %v2936
        %v2938 = vpop.xlane.xlu0 %2937
        %v2939 = vadd.f32 %v2718, %v2720
        %2940 = vadd.xlane.f32.xlu0 %v2939
        %v2941 = vpop.xlane.xlu0 %2940
        %v2942 = vadd.f32 %v2722, %v2724
        %2943 = vadd.xlane.f32.xlu0 %v2942
        %v2944 = vpop.xlane.xlu0 %2943
        %v2945 = vadd.f32 %v2726, %v2728
        %2946 = vadd.xlane.f32.xlu0 %v2945
        %v2947 = vpop.xlane.xlu0 %2946
        %v2948 = vadd.f32 %v2730, %v2732
        %2949 = vadd.xlane.f32.xlu0 %v2948
        %v2950 = vpop.xlane.xlu0 %2949
        %v2951 = vadd.f32 %v2734, %v2736
        %2952 = vadd.xlane.f32.xlu0 %v2951
        %v2953 = vpop.xlane.xlu0 %2952
        %v2954 = vadd.f32 %v2738, %v2740
        %2955 = vadd.xlane.f32.xlu0 %v2954
        %v2956 = vpop.xlane.xlu0 %2955
        %v2957 = vadd.f32 %v2742, %v2744
        %2958 = vadd.xlane.f32.xlu0 %v2957
        %v2959 = vpop.xlane.xlu0 %2958
        %v2960 = vadd.f32 %v2746, %v2748
        %2961 = vadd.xlane.f32.xlu0 %v2960
        %v2962 = vpop.xlane.xlu0 %2961
        %v2963 = vadd.f32 %v2750, %v2752
        %2964 = vadd.xlane.f32.xlu0 %v2963
        %v2965 = vpop.xlane.xlu0 %2964
        %v2966 = vadd.f32 %v2754, %v2756
        %2967 = vadd.xlane.f32.xlu0 %v2966
        %v2968 = vpop.xlane.xlu0 %2967
        %v2969 = vadd.f32 %v2758, %v2760
        %2970 = vadd.xlane.f32.xlu0 %v2969
        %v2971 = vpop.xlane.xlu0 %2970
        %v2972 = vadd.f32 %v2762, %v2764
        %2973 = vadd.xlane.f32.xlu0 %v2972
        %v2974 = vpop.xlane.xlu0 %2973
        %v2975 = vadd.f32 %v2766, %v2768
        %2976 = vadd.xlane.f32.xlu0 %v2975
        %v2977 = vpop.xlane.xlu0 %2976
        %v2978 = vadd.f32 %v2770, %v2772
        %2979 = vadd.xlane.f32.xlu0 %v2978
        %v2980 = vpop.xlane.xlu0 %2979
        %v2981 = vadd.f32 %v2774, %v2776
        %2982 = vadd.xlane.f32.xlu0 %v2981
        %v2983 = vpop.xlane.xlu0 %2982
        %v2984 = vadd.f32 %v2778, %v2780
        %2985 = vadd.xlane.f32.xlu0 %v2984
        %v2986 = vpop.xlane.xlu0 %2985
        %v2987 = vadd.f32 %v2782, %v2784
        %2988 = vadd.xlane.f32.xlu0 %v2987
        %v2989 = vpop.xlane.xlu0 %2988
        %v2990 = vadd.f32 %v2786, %v2788
        %2991 = vadd.xlane.f32.xlu0 %v2990
        %v2992 = vpop.xlane.xlu0 %2991
        %v2993 = vadd.f32 %v2790, %v2792
        %2994 = vadd.xlane.f32.xlu0 %v2993
        %v2995 = vpop.xlane.xlu0 %2994
        %v2996 = vadd.f32 %v2794, %v2796
        %2997 = vadd.xlane.f32.xlu0 %v2996
        %v2998 = vpop.xlane.xlu0 %2997
        %v2999 = vadd.f32 %v2798, %v2800
        %3000 = vadd.xlane.f32.xlu0 %v2999
        %v3001 = vpop.xlane.xlu0 %3000
        %v3002 = vadd.f32 %v2802, %v2804
        %3003 = vadd.xlane.f32.xlu0 %v3002
        %v3004 = vpop.xlane.xlu0 %3003
        %v3005 = vadd.f32 %v2806, %v2808
        %3006 = vadd.xlane.f32.xlu0 %v3005
        %v3007 = vpop.xlane.xlu0 %3006
        %v3008 = vadd.f32 %v2810, %v2812
        %3009 = vadd.xlane.f32.xlu0 %v3008
        %v3010 = vpop.xlane.xlu0 %3009
        %v3011 = vadd.f32 %v2814, %v2816
        %3012 = vadd.xlane.f32.xlu0 %v3011
        %v3013 = vpop.xlane.xlu0 %3012
        %v3014 = vadd.f32 %v2818, %v2820
        %3015 = vadd.xlane.f32.xlu0 %v3014
        %v3016 = vpop.xlane.xlu0 %3015
        %v3017 = vadd.f32 %v2822, %v2824
        %3018 = vadd.xlane.f32.xlu0 %v3017
        %v3019 = vpop.xlane.xlu0 %3018
        %v3020 = vadd.f32 %v2826, %v2828
        %3021 = vadd.xlane.f32.xlu0 %v3020
        %v3022 = vpop.xlane.xlu0 %3021
        %v3023 = vadd.f32 %v2830, %v2832
        %3024 = vadd.xlane.f32.xlu0 %v3023
        %v3025 = vpop.xlane.xlu0 %3024
        %v3026 = vadd.f32 %v2834, %v2836
        %3027 = vadd.xlane.f32.xlu0 %v3026
        %v3028 = vpop.xlane.xlu0 %3027
        %v3029 = vrcp.pop %v2839
        %v3030 = vrcp.pop %v2842
        %v3031 = vrcp.pop %v2845
        %v3032 = vrcp.pop %v2848
        %v3033 = vrcp.pop %v2851
        %v3034 = vrcp.pop %v2854
        %v3035 = vrcp.pop %v2857
        %v3036 = vrcp.pop %v2860
        %v3037 = vrcp.pop %v2863
        %v3038 = vrcp.pop %v2866
        %v3039 = vrcp.pop %v2869
        %v3040 = vrcp.pop %v2872
        %v3041 = vrcp.pop %v2875
        %v3042 = vrcp.pop %v2878
        %v3043 = vrcp.pop %v2881
        %v3044 = vrcp.pop %v2884
        %v3045 = vrcp.pop %v2887
        %v3046 = vrcp.pop %v2890
        %v3047 = vrcp.pop %v2893
        %v3048 = vrcp.pop %v2896
        %v3049 = vrcp.pop %v2899
        %v3050 = vrcp.pop %v2902
        %v3051 = vrcp.pop %v2905
        %v3052 = vrcp.pop %v2908
        %v3053 = vrcp.pop %v2911
        %v3054 = vrcp.pop %v2914
        %v3055 = vrcp.pop %v2917
        %v3056 = vrcp.pop %v2920
        %v3057 = vrcp.pop %v2923
        %v3058 = vrcp.pop %v2926
        %v3059 = vrcp.pop %v2929
        %v3060 = vrcp.pop %v2932
        %v3061 = vrcp.pop %v2935
        %v3062 = vrcp.pop %v2938
        %v3063 = vrcp.pop %v2941
        %v3064 = vrcp.pop %v2944
        %v3065 = vrcp.pop %v2947
        %v3066 = vrcp.pop %v2950
        %v3067 = vrcp.pop %v2953
        %v3068 = vrcp.pop %v2956
        %v3069 = vrcp.pop %v2959
        %v3070 = vrcp.pop %v2962
        %v3071 = vrcp.pop %v2965
        %v3072 = vrcp.pop %v2968
        %v3073 = vrcp.pop %v2971
        %v3074 = vrcp.pop %v2974
        %v3075 = vrcp.pop %v2977
        %v3076 = vrcp.pop %v2980
        %v3077 = vrcp.pop %v2983
        %v3078 = vrcp.pop %v2986
        %v3079 = vrcp.pop %v2989
        %v3080 = vrcp.pop %v2992
        %v3081 = vrcp.pop %v2995
        %v3082 = vrcp.pop %v2998
        %v3083 = vrcp.pop %v3001
        %v3084 = vrcp.pop %v3004
        %v3085 = vrcp.pop %v3007
        %v3086 = vrcp.pop %v3010
        %v3087 = vrcp.pop %v3013
        %v3088 = vrcp.pop %v3016
        %v3089 = vrcp.pop %v3019
        %v3090 = vrcp.pop %v3022
        %v3091 = vrcp.pop %v3025
        %v3092 = vrcp.pop %v3028
        %v3093 = vmul.f32 %v2582, %v3029
        %v3094 = vmul.f32 %v2584, %v3029
        %v3095 = vmul.f32 %v2586, %v3030
        %v3096 = vmul.f32 %v2588, %v3030
        %v3097 = vmul.f32 %v2590, %v3031
        %v3098 = vmul.f32 %v2592, %v3031
        %v3099 = vmul.f32 %v2594, %v3032
        %v3100 = vmul.f32 %v2596, %v3032
        %v3101 = vmul.f32 %v2598, %v3033
        %v3102 = vmul.f32 %v2600, %v3033
        %v3103 = vmul.f32 %v2602, %v3034
        %v3104 = vmul.f32 %v2604, %v3034
        %v3105 = vmul.f32 %v2606, %v3035
        %v3106 = vmul.f32 %v2608, %v3035
        %v3107 = vmul.f32 %v2610, %v3036
        %v3108 = vmul.f32 %v2612, %v3036
        %v3109 = vmul.f32 %v2614, %v3037
        %v3110 = vmul.f32 %v2616, %v3037
        %v3111 = vmul.f32 %v2618, %v3038
        %v3112 = vmul.f32 %v2620, %v3038
        %v3113 = vmul.f32 %v2622, %v3039
        %v3114 = vmul.f32 %v2624, %v3039
        %v3115 = vmul.f32 %v2626, %v3040
        %v3116 = vmul.f32 %v2628, %v3040
        %v3117 = vmul.f32 %v2630, %v3041
        %v3118 = vmul.f32 %v2632, %v3041
        %v3119 = vmul.f32 %v2634, %v3042
        %v3120 = vmul.f32 %v2636, %v3042
        %v3121 = vmul.f32 %v2638, %v3043
        %v3122 = vmul.f32 %v2640, %v3043
        %v3123 = vmul.f32 %v2642, %v3044
        %v3124 = vmul.f32 %v2644, %v3044
        %v3125 = vmul.f32 %v2646, %v3045
        %v3126 = vmul.f32 %v2648, %v3045
        %v3127 = vmul.f32 %v2650, %v3046
        %v3128 = vmul.f32 %v2652, %v3046
        %v3129 = vmul.f32 %v2654, %v3047
        %v3130 = vmul.f32 %v2656, %v3047
        %v3131 = vmul.f32 %v2658, %v3048
        %v3132 = vmul.f32 %v2660, %v3048
        %v3133 = vmul.f32 %v2662, %v3049
        %v3134 = vmul.f32 %v2664, %v3049
        %v3135 = vmul.f32 %v2666, %v3050
        %v3136 = vmul.f32 %v2668, %v3050
        %v3137 = vmul.f32 %v2670, %v3051
        %v3138 = vmul.f32 %v2672, %v3051
        %v3139 = vmul.f32 %v2674, %v3052
        %v3140 = vmul.f32 %v2676, %v3052
        %v3141 = vmul.f32 %v2678, %v3053
        %v3142 = vmul.f32 %v2680, %v3053
        %v3143 = vmul.f32 %v2682, %v3054
        %v3144 = vmul.f32 %v2684, %v3054
        %v3145 = vmul.f32 %v2686, %v3055
        %v3146 = vmul.f32 %v2688, %v3055
        %v3147 = vmul.f32 %v2690, %v3056
        %v3148 = vmul.f32 %v2692, %v3056
        %v3149 = vmul.f32 %v2694, %v3057
        %v3150 = vmul.f32 %v2696, %v3057
        %v3151 = vmul.f32 %v2698, %v3058
        %v3152 = vmul.f32 %v2700, %v3058
        %v3153 = vmul.f32 %v2702, %v3059
        %v3154 = vmul.f32 %v2704, %v3059
        %v3155 = vmul.f32 %v2706, %v3060
        %v3156 = vmul.f32 %v2708, %v3060
        %v3157 = vmul.f32 %v2710, %v3061
        %v3158 = vmul.f32 %v2712, %v3061
        %v3159 = vmul.f32 %v2714, %v3062
        %v3160 = vmul.f32 %v2716, %v3062
        %v3161 = vmul.f32 %v2718, %v3063
        %v3162 = vmul.f32 %v2720, %v3063
        %v3163 = vmul.f32 %v2722, %v3064
        %v3164 = vmul.f32 %v2724, %v3064
        %v3165 = vmul.f32 %v2726, %v3065
        %v3166 = vmul.f32 %v2728, %v3065
        %v3167 = vmul.f32 %v2730, %v3066
        %v3168 = vmul.f32 %v2732, %v3066
        %v3169 = vmul.f32 %v2734, %v3067
        %v3170 = vmul.f32 %v2736, %v3067
        %v3171 = vmul.f32 %v2738, %v3068
        %v3172 = vmul.f32 %v2740, %v3068
        %v3173 = vmul.f32 %v2742, %v3069
        %v3174 = vmul.f32 %v2744, %v3069
        %v3175 = vmul.f32 %v2746, %v3070
        %v3176 = vmul.f32 %v2748, %v3070
        %v3177 = vmul.f32 %v2750, %v3071
        %v3178 = vmul.f32 %v2752, %v3071
        %v3179 = vmul.f32 %v2754, %v3072
        %v3180 = vmul.f32 %v2756, %v3072
        %v3181 = vmul.f32 %v2758, %v3073
        %v3182 = vmul.f32 %v2760, %v3073
        %v3183 = vmul.f32 %v2762, %v3074
        %v3184 = vmul.f32 %v2764, %v3074
        %v3185 = vmul.f32 %v2766, %v3075
        %v3186 = vmul.f32 %v2768, %v3075
        %v3187 = vmul.f32 %v2770, %v3076
        %v3188 = vmul.f32 %v2772, %v3076
        %v3189 = vmul.f32 %v2774, %v3077
        %v3190 = vmul.f32 %v2776, %v3077
        %v3191 = vmul.f32 %v2778, %v3078
        %v3192 = vmul.f32 %v2780, %v3078
        %v3193 = vmul.f32 %v2782, %v3079
        %v3194 = vmul.f32 %v2784, %v3079
        %v3195 = vmul.f32 %v2786, %v3080
        %v3196 = vmul.f32 %v2788, %v3080
        %v3197 = vmul.f32 %v2790, %v3081
        %v3198 = vmul.f32 %v2792, %v3081
        %v3199 = vmul.f32 %v2794, %v3082
        %v3200 = vmul.f32 %v2796, %v3082
        %v3201 = vmul.f32 %v2798, %v3083
        %v3202 = vmul.f32 %v2800, %v3083
        %v3203 = vmul.f32 %v2802, %v3084
        %v3204 = vmul.f32 %v2804, %v3084
        %v3205 = vmul.f32 %v2806, %v3085
        %v3206 = vmul.f32 %v2808, %v3085
        %v3207 = vmul.f32 %v2810, %v3086
        %v3208 = vmul.f32 %v2812, %v3086
        %v3209 = vmul.f32 %v2814, %v3087
        %v3210 = vmul.f32 %v2816, %v3087
        %v3211 = vmul.f32 %v2818, %v3088
        %v3212 = vmul.f32 %v2820, %v3088
        %v3213 = vmul.f32 %v2822, %v3089
        %v3214 = vmul.f32 %v2824, %v3089
        %v3215 = vmul.f32 %v2826, %v3090
        %v3216 = vmul.f32 %v2828, %v3090
        %v3217 = vmul.f32 %v2830, %v3091
        %v3218 = vmul.f32 %v2832, %v3091
        %v3219 = vmul.f32 %v2834, %v3092
        %v3220 = vmul.f32 %v2836, %v3092
        %v3221 = vpack.c.bf16 %v3095, %v3093
        %v3222 = vpack.c.bf16 %v3096, %v3094
        %v3223 = vpack.c.bf16 %v3099, %v3097
        %v3224 = vpack.c.bf16 %v3100, %v3098
        %v3225 = vpack.c.bf16 %v3103, %v3101
        %v3226 = vpack.c.bf16 %v3104, %v3102
        %v3227 = vpack.c.bf16 %v3107, %v3105
        %v3228 = vpack.c.bf16 %v3108, %v3106
        %v3229 = vpack.c.bf16 %v3111, %v3109
        %v3230 = vpack.c.bf16 %v3112, %v3110
        %v3231 = vpack.c.bf16 %v3115, %v3113
        %v3232 = vpack.c.bf16 %v3116, %v3114
        %v3233 = vpack.c.bf16 %v3119, %v3117
        %v3234 = vpack.c.bf16 %v3120, %v3118
        %v3235 = vpack.c.bf16 %v3123, %v3121
        %v3236 = vpack.c.bf16 %v3124, %v3122
        %v3237 = vpack.c.bf16 %v3127, %v3125
        %v3238 = vpack.c.bf16 %v3128, %v3126
        %v3239 = vpack.c.bf16 %v3131, %v3129
        %v3240 = vpack.c.bf16 %v3132, %v3130
        %v3241 = vpack.c.bf16 %v3135, %v3133
        %v3242 = vpack.c.bf16 %v3136, %v3134
        %v3243 = vpack.c.bf16 %v3139, %v3137
        %v3244 = vpack.c.bf16 %v3140, %v3138
        %v3245 = vpack.c.bf16 %v3143, %v3141
        %v3246 = vpack.c.bf16 %v3144, %v3142
        %v3247 = vpack.c.bf16 %v3147, %v3145
        %v3248 = vpack.c.bf16 %v3148, %v3146
        %v3249 = vpack.c.bf16 %v3151, %v3149
        %v3250 = vpack.c.bf16 %v3152, %v3150
        %v3251 = vpack.c.bf16 %v3155, %v3153
        %v3252 = vpack.c.bf16 %v3156, %v3154
        %v3253 = vpack.c.bf16 %v3159, %v3157
        %v3254 = vpack.c.bf16 %v3160, %v3158
        %v3255 = vpack.c.bf16 %v3163, %v3161
        %v3256 = vpack.c.bf16 %v3164, %v3162
        %v3257 = vpack.c.bf16 %v3167, %v3165
        %v3258 = vpack.c.bf16 %v3168, %v3166
        %v3259 = vpack.c.bf16 %v3171, %v3169
        %v3260 = vpack.c.bf16 %v3172, %v3170
        %v3261 = vpack.c.bf16 %v3175, %v3173
        %v3262 = vpack.c.bf16 %v3176, %v3174
        %v3263 = vpack.c.bf16 %v3179, %v3177
        %v3264 = vpack.c.bf16 %v3180, %v3178
        %v3265 = vpack.c.bf16 %v3183, %v3181
        %v3266 = vpack.c.bf16 %v3184, %v3182
        %v3267 = vpack.c.bf16 %v3187, %v3185
        %v3268 = vpack.c.bf16 %v3188, %v3186
        %v3269 = vpack.c.bf16 %v3191, %v3189
        %v3270 = vpack.c.bf16 %v3192, %v3190
        %v3271 = vpack.c.bf16 %v3195, %v3193
        %v3272 = vpack.c.bf16 %v3196, %v3194
        %v3273 = vpack.c.bf16 %v3199, %v3197
        %v3274 = vpack.c.bf16 %v3200, %v3198
        %v3275 = vpack.c.bf16 %v3203, %v3201
        %v3276 = vpack.c.bf16 %v3204, %v3202
        %v3277 = vpack.c.bf16 %v3207, %v3205
        %v3278 = vpack.c.bf16 %v3208, %v3206
        %v3279 = vpack.c.bf16 %v3211, %v3209
        %v3280 = vpack.c.bf16 %v3212, %v3210
        %v3281 = vpack.c.bf16 %v3215, %v3213
        %v3282 = vpack.c.bf16 %v3216, %v3214
        %v3283 = vpack.c.bf16 %v3219, %v3217
        %v3284 = vpack.c.bf16 %v3220, %v3218
        %3285 = vmatprep.subr.bf16.mxu0 0
        %3286 = vmatpush1.bf16.msra.mxu0 %v1456
        %3287 = vmatprep.subr.bf16.mxu0 0
        %3288 = vmatpush1.bf16.msra.mxu0 %v1457
        %3289 = vmatprep.subr.bf16.mxu0 0
        %3290 = vmatpush1.bf16.msra.mxu0 %v1458
        %3291 = vmatprep.subr.bf16.mxu0 0
        %3292 = vmatpush1.bf16.msra.mxu0 %v1459
        %3293 = vmatprep.subr.bf16.mxu0 0
        %3294 = vmatpush1.bf16.msra.mxu0 %v1460
        %3295 = vmatprep.subr.bf16.mxu0 0
        %3296 = vmatpush1.bf16.msra.mxu0 %v1461
        %3297 = vmatprep.subr.bf16.mxu0 0
        %3298 = vmatpush1.bf16.msra.mxu0 %v1462
        %3299 = vmatprep.subr.bf16.mxu0 0
        %3300 = vmatpush1.bf16.msra.mxu0 %v1463
        %3301 = vmatprep.subr.bf16.mxu0 0
        %3302 = vmatpush1.bf16.msra.mxu0 %v1464
        %3303 = vmatprep.subr.bf16.mxu0 0
        %3304 = vmatpush1.bf16.msra.mxu0 %v1465
        %3305 = vmatprep.subr.bf16.mxu0 0
        %3306 = vmatpush1.bf16.msra.mxu0 %v1466
        %3307 = vmatprep.subr.bf16.mxu0 0
        %3308 = vmatpush1.bf16.msra.mxu0 %v1467
        %3309 = vmatprep.subr.bf16.mxu0 0
        %3310 = vmatpush1.bf16.msra.mxu0 %v1468
        %3311 = vmatprep.subr.bf16.mxu0 0
        %3312 = vmatpush1.bf16.msra.mxu0 %v1469
        %3313 = vmatprep.subr.bf16.mxu0 0
        %3314 = vmatpush1.bf16.msra.mxu0 %v1470
        %3315 = vmatprep.subr.bf16.mxu0 0
        %3316 = vmatpush1.bf16.msra.mxu0 %v1471
        %3317 = vmatprep.mubr.bf16.mxu0 %v3222
        %3318 = vmatmul.mubr.bf16.gmra.mrb[0].mxu0 %v3221
        %v3319 = vpop.f32.mrb[0].mxu0
        %v3320 = vadd.f32 0.0, %v3319
        %v3321 = vpop.f32.mrb[0].mxu0
        %v3322 = vpop.f32.mrb[0].mxu0
        %v3323 = vadd.f32 0.0, %v3322
        %v3324 = vpop.f32.mrb[0].mxu0
        %3325 = vmatprep.mubr.bf16.mxu0 %v3224
        %3326 = vmatmul.mubr.bf16.gmra.mrb[0].mxu0 %v3223
        %v3327 = vpop.f32.mrb[0].mxu0
        %v3328 = vadd.f32 0.0, %v3327
        %v3329 = vpop.f32.mrb[0].mxu0
        %v3330 = vpop.f32.mrb[0].mxu0
        %v3331 = vadd.f32 0.0, %v3330
        %v3332 = vpop.f32.mrb[0].mxu0
        %3333 = vmatprep.mubr.bf16.mxu0 %v3226
        %3334 = vmatmul.mubr.bf16.gmra.mrb[0].mxu0 %v3225
        %v3335 = vpop.f32.mrb[0].mxu0
        %v3336 = vadd.f32 0.0, %v3335
        %v3337 = vpop.f32.mrb[0].mxu0
        %v3338 = vpop.f32.mrb[0].mxu0
        %v3339 = vadd.f32 0.0, %v3338
        %v3340 = vpop.f32.mrb[0].mxu0
        %3341 = vmatprep.mubr.bf16.mxu0 %v3228
        %3342 = vmatmul.mubr.bf16.gmra.mrb[0].mxu0 %v3227
        %v3343 = vpop.f32.mrb[0].mxu0
        %v3344 = vadd.f32 0.0, %v3343
        %v3345 = vpop.f32.mrb[0].mxu0
        %v3346 = vpop.f32.mrb[0].mxu0
        %v3347 = vadd.f32 0.0, %v3346
        %v3348 = vpop.f32.mrb[0].mxu0
        %3349 = vmatprep.mubr.bf16.mxu0 %v3230
        %3350 = vmatmul.mubr.bf16.gmra.mrb[0].mxu0 %v3229
        %v3351 = vpop.f32.mrb[0].mxu0
        %v3352 = vadd.f32 0.0, %v3351
        %v3353 = vpop.f32.mrb[0].mxu0
        %v3354 = vpop.f32.mrb[0].mxu0
        %v3355 = vadd.f32 0.0, %v3354
        %v3356 = vpop.f32.mrb[0].mxu0
        %3357 = vmatprep.mubr.bf16.mxu0 %v3232
        %3358 = vmatmul.mubr.bf16.gmra.mrb[0].mxu0 %v3231
        %v3359 = vpop.f32.mrb[0].mxu0
        %v3360 = vadd.f32 0.0, %v3359
        %v3361 = vpop.f32.mrb[0].mxu0
        %v3362 = vpop.f32.mrb[0].mxu0
        %v3363 = vadd.f32 0.0, %v3362
        %v3364 = vpop.f32.mrb[0].mxu0
        %3365 = vmatprep.mubr.bf16.mxu0 %v3234
        %3366 = vmatmul.mubr.bf16.gmra.mrb[0].mxu0 %v3233
        %v3367 = vpop.f32.mrb[0].mxu0
        %v3368 = vadd.f32 0.0, %v3367
        %v3369 = vpop.f32.mrb[0].mxu0
        %v3370 = vpop.f32.mrb[0].mxu0
        %v3371 = vadd.f32 0.0, %v3370
        %v3372 = vpop.f32.mrb[0].mxu0
        %3373 = vmatprep.mubr.bf16.mxu0 %v3236
        %3374 = vmatmul.mubr.bf16.gmra.mrb[0].mxu0 %v3235
        %v3375 = vpop.f32.mrb[0].mxu0
        %v3376 = vadd.f32 0.0, %v3375
        %v3377 = vpop.f32.mrb[0].mxu0
        %v3378 = vpop.f32.mrb[0].mxu0
        %v3379 = vadd.f32 0.0, %v3378
        %v3380 = vpop.f32.mrb[0].mxu0
        %3381 = vdwg.mxu0
        %3382 = vmatprep.subr.bf16.mxu0 0
        %3383 = vmatpush1.bf16.msra.mxu0 %v1472
        %3384 = vmatprep.subr.bf16.mxu0 0
        %3385 = vmatpush1.bf16.msra.mxu0 %v1473
        %3386 = vmatprep.subr.bf16.mxu0 0
        %3387 = vmatpush1.bf16.msra.mxu0 %v1474
        %3388 = vmatprep.subr.bf16.mxu0 0
        %3389 = vmatpush1.bf16.msra.mxu0 %v1475
        %3390 = vmatprep.subr.bf16.mxu0 0
        %3391 = vmatpush1.bf16.msra.mxu0 %v1476
        %3392 = vmatprep.subr.bf16.mxu0 0
        %3393 = vmatpush1.bf16.msra.mxu0 %v1477
        %3394 = vmatprep.subr.bf16.mxu0 0
        %3395 = vmatpush1.bf16.msra.mxu0 %v1478
        %3396 = vmatprep.subr.bf16.mxu0 0
        %3397 = vmatpush1.bf16.msra.mxu0 %v1479
        %3398 = vmatprep.subr.bf16.mxu0 0
        %3399 = vmatpush1.bf16.msra.mxu0 %v1480
        %3400 = vmatprep.subr.bf16.mxu0 0
        %3401 = vmatpush1.bf16.msra.mxu0 %v1481
        %3402 = vmatprep.subr.bf16.mxu0 0
        %3403 = vmatpush1.bf16.msra.mxu0 %v1482
        %3404 = vmatprep.subr.bf16.mxu0 0
        %3405 = vmatpush1.bf16.msra.mxu0 %v1483
        %3406 = vmatprep.subr.bf16.mxu0 0
        %3407 = vmatpush1.bf16.msra.mxu0 %v1484
        %3408 = vmatprep.subr.bf16.mxu0 0
        %3409 = vmatpush1.bf16.msra.mxu0 %v1485
        %3410 = vmatprep.subr.bf16.mxu0 0
        %3411 = vmatpush1.bf16.msra.mxu0 %v1486
        %3412 = vmatprep.subr.bf16.mxu0 0
        %3413 = vmatpush1.bf16.msra.mxu0 %v1487
        %3414 = vmatprep.mubr.bf16.mxu0 %v3238
        %3415 = vmatmul.mubr.bf16.gmra.mrb[0].mxu0 %v3237
        %v3416 = vpop.f32.mrb[0].mxu0
        %v3417 = vadd.f32 0.0, %v3416
        %v3418 = vpop.f32.mrb[0].mxu0
        %v3419 = vpop.f32.mrb[0].mxu0
        %v3420 = vadd.f32 0.0, %v3419
        %v3421 = vpop.f32.mrb[0].mxu0
        %3422 = vmatprep.mubr.bf16.mxu0 %v3240
        %3423 = vmatmul.mubr.bf16.gmra.mrb[0].mxu0 %v3239
        %v3424 = vpop.f32.mrb[0].mxu0
        %v3425 = vadd.f32 0.0, %v3424
        %v3426 = vpop.f32.mrb[0].mxu0
        %v3427 = vpop.f32.mrb[0].mxu0
        %v3428 = vadd.f32 0.0, %v3427
        %v3429 = vpop.f32.mrb[0].mxu0
        %3430 = vmatprep.mubr.bf16.mxu0 %v3242
        %3431 = vmatmul.mubr.bf16.gmra.mrb[0].mxu0 %v3241
        %v3432 = vpop.f32.mrb[0].mxu0
        %v3433 = vadd.f32 0.0, %v3432
        %v3434 = vpop.f32.mrb[0].mxu0
        %v3435 = vpop.f32.mrb[0].mxu0
        %v3436 = vadd.f32 0.0, %v3435
        %v3437 = vpop.f32.mrb[0].mxu0
        %3438 = vmatprep.mubr.bf16.mxu0 %v3244
        %3439 = vmatmul.mubr.bf16.gmra.mrb[0].mxu0 %v3243
        %v3440 = vpop.f32.mrb[0].mxu0
        %v3441 = vadd.f32 0.0, %v3440
        %v3442 = vpop.f32.mrb[0].mxu0
        %v3443 = vpop.f32.mrb[0].mxu0
        %v3444 = vadd.f32 0.0, %v3443
        %v3445 = vpop.f32.mrb[0].mxu0
        %3446 = vmatprep.mubr.bf16.mxu0 %v3246
        %3447 = vmatmul.mubr.bf16.gmra.mrb[0].mxu0 %v3245
        %v3448 = vpop.f32.mrb[0].mxu0
        %v3449 = vadd.f32 0.0, %v3448
        %v3450 = vpop.f32.mrb[0].mxu0
        %v3451 = vpop.f32.mrb[0].mxu0
        %v3452 = vadd.f32 0.0, %v3451
        %v3453 = vpop.f32.mrb[0].mxu0
        %3454 = vmatprep.mubr.bf16.mxu0 %v3248
        %3455 = vmatmul.mubr.bf16.gmra.mrb[0].mxu0 %v3247
        %v3456 = vpop.f32.mrb[0].mxu0
        %v3457 = vadd.f32 0.0, %v3456
        %v3458 = vpop.f32.mrb[0].mxu0
        %v3459 = vpop.f32.mrb[0].mxu0
        %v3460 = vadd.f32 0.0, %v3459
        %v3461 = vpop.f32.mrb[0].mxu0
        %3462 = vmatprep.mubr.bf16.mxu0 %v3250
        %3463 = vmatmul.mubr.bf16.gmra.mrb[0].mxu0 %v3249
        %v3464 = vpop.f32.mrb[0].mxu0
        %v3465 = vadd.f32 0.0, %v3464
        %v3466 = vpop.f32.mrb[0].mxu0
        %v3467 = vpop.f32.mrb[0].mxu0
        %v3468 = vadd.f32 0.0, %v3467
        %v3469 = vpop.f32.mrb[0].mxu0
        %3470 = vmatprep.mubr.bf16.mxu0 %v3252
        %3471 = vmatmul.mubr.bf16.gmra.mrb[0].mxu0 %v3251
        %v3472 = vpop.f32.mrb[0].mxu0
        %v3473 = vadd.f32 0.0, %v3472
        %v3474 = vpop.f32.mrb[0].mxu0
        %v3475 = vpop.f32.mrb[0].mxu0
        %v3476 = vadd.f32 0.0, %v3475
        %v3477 = vpop.f32.mrb[0].mxu0
        %3478 = vdwg.mxu0
        %3479 = vmatprep.subr.bf16.mxu0 0
        %3480 = vmatpush1.bf16.msra.mxu0 %v1488
        %3481 = vmatprep.subr.bf16.mxu0 0
        %3482 = vmatpush1.bf16.msra.mxu0 %v1489
        %3483 = vmatprep.subr.bf16.mxu0 0
        %3484 = vmatpush1.bf16.msra.mxu0 %v1490
        %3485 = vmatprep.subr.bf16.mxu0 0
        %3486 = vmatpush1.bf16.msra.mxu0 %v1491
        %3487 = vmatprep.subr.bf16.mxu0 0
        %3488 = vmatpush1.bf16.msra.mxu0 %v1492
        %3489 = vmatprep.subr.bf16.mxu0 0
        %3490 = vmatpush1.bf16.msra.mxu0 %v1493
        %3491 = vmatprep.subr.bf16.mxu0 0
        %3492 = vmatpush1.bf16.msra.mxu0 %v1494
        %3493 = vmatprep.subr.bf16.mxu0 0
        %3494 = vmatpush1.bf16.msra.mxu0 %v1495
        %3495 = vmatprep.subr.bf16.mxu0 0
        %3496 = vmatpush1.bf16.msra.mxu0 %v1496
        %3497 = vmatprep.subr.bf16.mxu0 0
        %3498 = vmatpush1.bf16.msra.mxu0 %v1497
        %3499 = vmatprep.subr.bf16.mxu0 0
        %3500 = vmatpush1.bf16.msra.mxu0 %v1498
        %3501 = vmatprep.subr.bf16.mxu0 0
        %3502 = vmatpush1.bf16.msra.mxu0 %v1499
        %3503 = vmatprep.subr.bf16.mxu0 0
        %3504 = vmatpush1.bf16.msra.mxu0 %v1500
        %3505 = vmatprep.subr.bf16.mxu0 0
        %3506 = vmatpush1.bf16.msra.mxu0 %v1501
        %3507 = vmatprep.subr.bf16.mxu0 0
        %3508 = vmatpush1.bf16.msra.mxu0 %v1502
        %3509 = vmatprep.subr.bf16.mxu0 0
        %3510 = vmatpush1.bf16.msra.mxu0 %v1503
        %3511 = vmatprep.mubr.bf16.mxu0 %v3254
        %3512 = vmatmul.mubr.bf16.gmra.mrb[0].mxu0 %v3253
        %v3513 = vpop.f32.mrb[0].mxu0
        %v3514 = vadd.f32 0.0, %v3513
        %v3515 = vpop.f32.mrb[0].mxu0
        %v3516 = vpop.f32.mrb[0].mxu0
        %v3517 = vadd.f32 0.0, %v3516
        %v3518 = vpop.f32.mrb[0].mxu0
        %3519 = vmatprep.mubr.bf16.mxu0 %v3256
        %3520 = vmatmul.mubr.bf16.gmra.mrb[0].mxu0 %v3255
        %v3521 = vpop.f32.mrb[0].mxu0
        %v3522 = vadd.f32 0.0, %v3521
        %v3523 = vpop.f32.mrb[0].mxu0
        %v3524 = vpop.f32.mrb[0].mxu0
        %v3525 = vadd.f32 0.0, %v3524
        %v3526 = vpop.f32.mrb[0].mxu0
        %3527 = vmatprep.mubr.bf16.mxu0 %v3258
        %3528 = vmatmul.mubr.bf16.gmra.mrb[0].mxu0 %v3257
        %v3529 = vpop.f32.mrb[0].mxu0
        %v3530 = vadd.f32 0.0, %v3529
        %v3531 = vpop.f32.mrb[0].mxu0
        %v3532 = vpop.f32.mrb[0].mxu0
        %v3533 = vadd.f32 0.0, %v3532
        %v3534 = vpop.f32.mrb[0].mxu0
        %3535 = vmatprep.mubr.bf16.mxu0 %v3260
        %3536 = vmatmul.mubr.bf16.gmra.mrb[0].mxu0 %v3259
        %v3537 = vpop.f32.mrb[0].mxu0
        %v3538 = vadd.f32 0.0, %v3537
        %v3539 = vpop.f32.mrb[0].mxu0
        %v3540 = vpop.f32.mrb[0].mxu0
        %v3541 = vadd.f32 0.0, %v3540
        %v3542 = vpop.f32.mrb[0].mxu0
        %3543 = vmatprep.mubr.bf16.mxu0 %v3262
        %3544 = vmatmul.mubr.bf16.gmra.mrb[0].mxu0 %v3261
        %v3545 = vpop.f32.mrb[0].mxu0
        %v3546 = vadd.f32 0.0, %v3545
        %v3547 = vpop.f32.mrb[0].mxu0
        %v3548 = vpop.f32.mrb[0].mxu0
        %v3549 = vadd.f32 0.0, %v3548
        %v3550 = vpop.f32.mrb[0].mxu0
        %3551 = vmatprep.mubr.bf16.mxu0 %v3264
        %3552 = vmatmul.mubr.bf16.gmra.mrb[0].mxu0 %v3263
        %v3553 = vpop.f32.mrb[0].mxu0
        %v3554 = vadd.f32 0.0, %v3553
        %v3555 = vpop.f32.mrb[0].mxu0
        %v3556 = vpop.f32.mrb[0].mxu0
        %v3557 = vadd.f32 0.0, %v3556
        %v3558 = vpop.f32.mrb[0].mxu0
        %3559 = vmatprep.mubr.bf16.mxu0 %v3266
        %3560 = vmatmul.mubr.bf16.gmra.mrb[0].mxu0 %v3265
        %v3561 = vpop.f32.mrb[0].mxu0
        %v3562 = vadd.f32 0.0, %v3561
        %v3563 = vpop.f32.mrb[0].mxu0
        %v3564 = vpop.f32.mrb[0].mxu0
        %v3565 = vadd.f32 0.0, %v3564
        %v3566 = vpop.f32.mrb[0].mxu0
        %3567 = vmatprep.mubr.bf16.mxu0 %v3268
        %3568 = vmatmul.mubr.bf16.gmra.mrb[0].mxu0 %v3267
        %v3569 = vpop.f32.mrb[0].mxu0
        %v3570 = vadd.f32 0.0, %v3569
        %v3571 = vpop.f32.mrb[0].mxu0
        %v3572 = vpop.f32.mrb[0].mxu0
        %v3573 = vadd.f32 0.0, %v3572
        %v3574 = vpop.f32.mrb[0].mxu0
        %3575 = vdwg.mxu0
        %3576 = vmatprep.subr.bf16.mxu0 0
        %3577 = vmatpush1.bf16.msra.mxu0 %v1504
        %3578 = vmatprep.subr.bf16.mxu0 0
        %3579 = vmatpush1.bf16.msra.mxu0 %v1505
        %3580 = vmatprep.subr.bf16.mxu0 0
        %3581 = vmatpush1.bf16.msra.mxu0 %v1506
        %3582 = vmatprep.subr.bf16.mxu0 0
        %3583 = vmatpush1.bf16.msra.mxu0 %v1507
        %3584 = vmatprep.subr.bf16.mxu0 0
        %3585 = vmatpush1.bf16.msra.mxu0 %v1508
        %3586 = vmatprep.subr.bf16.mxu0 0
        %3587 = vmatpush1.bf16.msra.mxu0 %v1509
        %3588 = vmatprep.subr.bf16.mxu0 0
        %3589 = vmatpush1.bf16.msra.mxu0 %v1510
        %3590 = vmatprep.subr.bf16.mxu0 0
        %3591 = vmatpush1.bf16.msra.mxu0 %v1511
        %3592 = vmatprep.subr.bf16.mxu0 0
        %3593 = vmatpush1.bf16.msra.mxu0 %v1512
        %3594 = vmatprep.subr.bf16.mxu0 0
        %3595 = vmatpush1.bf16.msra.mxu0 %v1513
        %3596 = vmatprep.subr.bf16.mxu0 0
        %3597 = vmatpush1.bf16.msra.mxu0 %v1514
        %3598 = vmatprep.subr.bf16.mxu0 0
        %3599 = vmatpush1.bf16.msra.mxu0 %v1515
        %3600 = vmatprep.subr.bf16.mxu0 0
        %3601 = vmatpush1.bf16.msra.mxu0 %v1516
        %3602 = vmatprep.subr.bf16.mxu0 0
        %3603 = vmatpush1.bf16.msra.mxu0 %v1517
        %3604 = vmatprep.subr.bf16.mxu0 0
        %3605 = vmatpush1.bf16.msra.mxu0 %v1518
        %3606 = vmatprep.subr.bf16.mxu0 0
        %3607 = vmatpush1.bf16.msra.mxu0 %v1519
        %3608 = vmatprep.mubr.bf16.mxu0 %v3270
        %3609 = vmatmul.mubr.bf16.gmra.mrb[0].mxu0 %v3269
        %v3610 = vpop.f32.mrb[0].mxu0
        %v3611 = vadd.f32 0.0, %v3610
        %v3612 = vpop.f32.mrb[0].mxu0
        %v3613 = vpop.f32.mrb[0].mxu0
        %v3614 = vadd.f32 0.0, %v3613
        %v3615 = vpop.f32.mrb[0].mxu0
        %3616 = vmatprep.mubr.bf16.mxu0 %v3272
        %3617 = vmatmul.mubr.bf16.gmra.mrb[0].mxu0 %v3271
        %v3618 = vpop.f32.mrb[0].mxu0
        %v3619 = vadd.f32 0.0, %v3618
        %v3620 = vpop.f32.mrb[0].mxu0
        %v3621 = vpop.f32.mrb[0].mxu0
        %v3622 = vadd.f32 0.0, %v3621
        %v3623 = vpop.f32.mrb[0].mxu0
        %3624 = vmatprep.mubr.bf16.mxu0 %v3274
        %3625 = vmatmul.mubr.bf16.gmra.mrb[0].mxu0 %v3273
        %v3626 = vpop.f32.mrb[0].mxu0
        %v3627 = vadd.f32 0.0, %v3626
        %v3628 = vpop.f32.mrb[0].mxu0
        %v3629 = vpop.f32.mrb[0].mxu0
        %v3630 = vadd.f32 0.0, %v3629
        %v3631 = vpop.f32.mrb[0].mxu0
        %3632 = vmatprep.mubr.bf16.mxu0 %v3276
        %3633 = vmatmul.mubr.bf16.gmra.mrb[0].mxu0 %v3275
        %v3634 = vpop.f32.mrb[0].mxu0
        %v3635 = vadd.f32 0.0, %v3634
        %v3636 = vpop.f32.mrb[0].mxu0
        %v3637 = vpop.f32.mrb[0].mxu0
        %v3638 = vadd.f32 0.0, %v3637
        %v3639 = vpop.f32.mrb[0].mxu0
        %3640 = vmatprep.mubr.bf16.mxu0 %v3278
        %3641 = vmatmul.mubr.bf16.gmra.mrb[0].mxu0 %v3277
        %v3642 = vpop.f32.mrb[0].mxu0
        %v3643 = vadd.f32 0.0, %v3642
        %v3644 = vpop.f32.mrb[0].mxu0
        %v3645 = vpop.f32.mrb[0].mxu0
        %v3646 = vadd.f32 0.0, %v3645
        %v3647 = vpop.f32.mrb[0].mxu0
        %3648 = vmatprep.mubr.bf16.mxu0 %v3280
        %3649 = vmatmul.mubr.bf16.gmra.mrb[0].mxu0 %v3279
        %v3650 = vpop.f32.mrb[0].mxu0
        %v3651 = vadd.f32 0.0, %v3650
        %v3652 = vpop.f32.mrb[0].mxu0
        %v3653 = vpop.f32.mrb[0].mxu0
        %v3654 = vadd.f32 0.0, %v3653
        %v3655 = vpop.f32.mrb[0].mxu0
        %3656 = vmatprep.mubr.bf16.mxu0 %v3282
        %3657 = vmatmul.mubr.bf16.gmra.mrb[0].mxu0 %v3281
        %v3658 = vpop.f32.mrb[0].mxu0
        %v3659 = vadd.f32 0.0, %v3658
        %v3660 = vpop.f32.mrb[0].mxu0
        %v3661 = vpop.f32.mrb[0].mxu0
        %v3662 = vadd.f32 0.0, %v3661
        %v3663 = vpop.f32.mrb[0].mxu0
        %3664 = vmatprep.mubr.bf16.mxu0 %v3284
        %3665 = vmatmul.mubr.bf16.gmra.mrb[0].mxu0 %v3283
        %v3666 = vpop.f32.mrb[0].mxu0
        %v3667 = vadd.f32 0.0, %v3666
        %v3668 = vpop.f32.mrb[0].mxu0
        %v3669 = vpop.f32.mrb[0].mxu0
        %v3670 = vadd.f32 0.0, %v3669
        %v3671 = vpop.f32.mrb[0].mxu0
        %3672 = vdwg.mxu0
        %v3673 = vpack.c.bf16 %v3323, %v3320
        %v3674 = vpack.c.bf16 %v3331, %v3328
        %v3675 = vpack.c.bf16 %v3339, %v3336
        %v3676 = vpack.c.bf16 %v3347, %v3344
        %v3677 = vpack.c.bf16 %v3355, %v3352
        %v3678 = vpack.c.bf16 %v3363, %v3360
        %v3679 = vpack.c.bf16 %v3371, %v3368
        %v3680 = vpack.c.bf16 %v3379, %v3376
        %v3681 = vpack.c.bf16 %v3420, %v3417
        %v3682 = vpack.c.bf16 %v3428, %v3425
        %v3683 = vpack.c.bf16 %v3436, %v3433
        %v3684 = vpack.c.bf16 %v3444, %v3441
        %v3685 = vpack.c.bf16 %v3452, %v3449
        %v3686 = vpack.c.bf16 %v3460, %v3457
        %v3687 = vpack.c.bf16 %v3468, %v3465
        %v3688 = vpack.c.bf16 %v3476, %v3473
        %v3689 = vpack.c.bf16 %v3517, %v3514
        %v3690 = vpack.c.bf16 %v3525, %v3522
        %v3691 = vpack.c.bf16 %v3533, %v3530
        %v3692 = vpack.c.bf16 %v3541, %v3538
        %v3693 = vpack.c.bf16 %v3549, %v3546
        %v3694 = vpack.c.bf16 %v3557, %v3554
        %v3695 = vpack.c.bf16 %v3565, %v3562
        %v3696 = vpack.c.bf16 %v3573, %v3570
        %v3697 = vpack.c.bf16 %v3614, %v3611
        %v3698 = vpack.c.bf16 %v3622, %v3619
        %v3699 = vpack.c.bf16 %v3630, %v3627
        %v3700 = vpack.c.bf16 %v3638, %v3635
        %v3701 = vpack.c.bf16 %v3646, %v3643
        %v3702 = vpack.c.bf16 %v3654, %v3651
        %v3703 = vpack.c.bf16 %v3662, %v3659
        %v3704 = vpack.c.bf16 %v3670, %v3667
        %3713 = vrot.lane.b32.xlu0 %v3681, 32
        %v3714 = vpop.permute.xlu0 %3713
        %3715 = vrot.lane.b32.xlu0 %v3682, 32
        %v3716 = vpop.permute.xlu0 %3715
        %3717 = vrot.lane.b32.xlu0 %v3683, 32
        %v3718 = vpop.permute.xlu0 %3717
        %3719 = vrot.lane.b32.xlu0 %v3684, 32
        %v3720 = vpop.permute.xlu0 %3719
        %3721 = vrot.lane.b32.xlu0 %v3685, 32
        %v3722 = vpop.permute.xlu0 %3721
        %3723 = vrot.lane.b32.xlu0 %v3686, 32
        %v3724 = vpop.permute.xlu0 %3723
        %3725 = vrot.lane.b32.xlu0 %v3687, 32
        %v3726 = vpop.permute.xlu0 %3725
        %3727 = vrot.lane.b32.xlu0 %v3688, 32
        %v3728 = vpop.permute.xlu0 %3727
        %3737 = vrot.lane.b32.xlu0 %v3689, 64
        %v3738 = vpop.permute.xlu0 %3737
        %3739 = vrot.lane.b32.xlu0 %v3690, 64
        %v3740 = vpop.permute.xlu0 %3739
        %3741 = vrot.lane.b32.xlu0 %v3691, 64
        %v3742 = vpop.permute.xlu0 %3741
        %3743 = vrot.lane.b32.xlu0 %v3692, 64
        %v3744 = vpop.permute.xlu0 %3743
        %3745 = vrot.lane.b32.xlu0 %v3693, 64
        %v3746 = vpop.permute.xlu0 %3745
        %3747 = vrot.lane.b32.xlu0 %v3694, 64
        %v3748 = vpop.permute.xlu0 %3747
        %3749 = vrot.lane.b32.xlu0 %v3695, 64
        %v3750 = vpop.permute.xlu0 %3749
        %3751 = vrot.lane.b32.xlu0 %v3696, 64
        %v3752 = vpop.permute.xlu0 %3751
        %3761 = vrot.lane.b32.xlu0 %v3697, 96
        %v3762 = vpop.permute.xlu0 %3761
        %3763 = vrot.lane.b32.xlu0 %v3698, 96
        %v3764 = vpop.permute.xlu0 %3763
        %3765 = vrot.lane.b32.xlu0 %v3699, 96
        %v3766 = vpop.permute.xlu0 %3765
        %3767 = vrot.lane.b32.xlu0 %v3700, 96
        %v3768 = vpop.permute.xlu0 %3767
        %3769 = vrot.lane.b32.xlu0 %v3701, 96
        %v3770 = vpop.permute.xlu0 %3769
        %3771 = vrot.lane.b32.xlu0 %v3702, 96
        %v3772 = vpop.permute.xlu0 %3771
        %3773 = vrot.lane.b32.xlu0 %v3703, 96
        %v3774 = vpop.permute.xlu0 %3773
        %3775 = vrot.lane.b32.xlu0 %v3704, 96
        %v3776 = vpop.permute.xlu0 %3775
        %v3779 = vsel %vm1520, %v3673, %v3714
        %v3782 = vsel %vm1520, %v3674, %v3716
        %v3785 = vsel %vm1520, %v3675, %v3718
        %v3788 = vsel %vm1520, %v3676, %v3720
        %v3791 = vsel %vm1520, %v3677, %v3722
        %v3794 = vsel %vm1520, %v3678, %v3724
        %v3797 = vsel %vm1520, %v3679, %v3726
        %v3800 = vsel %vm1520, %v3680, %v3728
        %vm3801 = vcmask 523264
        %v3803 = vsel %vm3801, %v3779, %v3738
        %v3805 = vsel %vm3801, %v3782, %v3740
        %v3807 = vsel %vm3801, %v3785, %v3742
        %v3809 = vsel %vm3801, %v3788, %v3744
        %v3811 = vsel %vm3801, %v3791, %v3746
        %v3813 = vsel %vm3801, %v3794, %v3748
        %v3815 = vsel %vm3801, %v3797, %v3750
        %v3817 = vsel %vm3801, %v3800, %v3752
        %vm3818 = vcmask 785408
        %v3820 = vsel %vm3818, %v3803, %v3762
        %v3823 = vsel %vm3818, %v3805, %v3764
        %v3826 = vsel %vm3818, %v3807, %v3766
        %v3829 = vsel %vm3818, %v3809, %v3768
        %v3832 = vsel %vm3818, %v3811, %v3770
        %v3835 = vsel %vm3818, %v3813, %v3772
        %v3838 = vsel %vm3818, %v3815, %v3774
        %v3841 = vsel %vm3818, %v3817, %v3776
        %v3843 = vld [vmem:[#allocation10] sm:$0xf]
        %v3844 = vld [vmem:[#allocation10 + $0x4] sm:$0xf]
        %v3845 = vld [vmem:[#allocation10 + $0x8] sm:$0xf]
        %v3846 = vld [vmem:[#allocation10 + $0xc] sm:$0xf]
        %v3847 = vld [vmem:[#allocation10 + $0x10] sm:$0xf]
        %v3848 = vld [vmem:[#allocation10 + $0x14] sm:$0xf]
        %v3849 = vld [vmem:[#allocation10 + $0x18] sm:$0xf]
        %v3850 = vld [vmem:[#allocation10 + $0x1c] sm:$0xf]
        %v3851 = vld [vmem:[#allocation10 + $0x20] sm:$0xf]
        %v3852 = vld [vmem:[#allocation10 + $0x24] sm:$0xf]
        %v3853 = vld [vmem:[#allocation10 + $0x28] sm:$0xf]
        %v3854 = vld [vmem:[#allocation10 + $0x2c] sm:$0xf]
        %v3855 = vld [vmem:[#allocation10 + $0x30] sm:$0xf]
        %v3856 = vld [vmem:[#allocation10 + $0x34] sm:$0xf]
        %v3857 = vld [vmem:[#allocation10 + $0x38] sm:$0xf]
        %v3858 = vld [vmem:[#allocation10 + $0x3c] sm:$0xf]
        %v3859 = vld [vmem:[%s4] sm:$0x1]
        %v3861 = vlaneseq
        %v3862 = vshrl.u32 %v3861, 7
        %v3863 = vsub.s32 0, %v3862
        %v3864 = vrot.slane %v3859, %v3863
        %v3882 = vunpack.c.l.b16 %v3843
        %v3883 = vunpack.c.l.b16 %v3844
        %v3884 = vunpack.c.l.b16 %v3845
        %v3885 = vunpack.c.l.b16 %v3846
        %v3886 = vunpack.c.l.b16 %v3847
        %v3887 = vunpack.c.l.b16 %v3848
        %v3888 = vunpack.c.l.b16 %v3849
        %v3889 = vunpack.c.l.b16 %v3850
        %v3890 = vunpack.c.l.b16 %v3851
        %v3891 = vunpack.c.l.b16 %v3852
        %v3892 = vunpack.c.l.b16 %v3853
        %v3893 = vunpack.c.l.b16 %v3854
        %v3894 = vunpack.c.l.b16 %v3855
        %v3895 = vunpack.c.l.b16 %v3856
        %v3896 = vunpack.c.l.b16 %v3857
        %v3897 = vunpack.c.l.b16 %v3858
        %v3898 = vpack.c.b16 %v3883, %v3882
        %v3899 = vpack.c.b16 %v3885, %v3884
        %v3900 = vpack.c.b16 %v3887, %v3886
        %v3901 = vpack.c.b16 %v3889, %v3888
        %v3902 = vpack.c.b16 %v3891, %v3890
        %v3903 = vpack.c.b16 %v3893, %v3892
        %v3904 = vpack.c.b16 %v3895, %v3894
        %v3905 = vpack.c.b16 %v3897, %v3896
        %3914 = vmatprep.subr.bf16.mxu0 0
        %3915 = vmatpush1.bf16.msra.mxu0 %v3898
        %3916 = vmatprep.subr.bf16.mxu0 0
        %3917 = vmatpush1.bf16.msra.mxu0 %v3899
        %3918 = vmatprep.subr.bf16.mxu0 0
        %3919 = vmatpush1.bf16.msra.mxu0 %v3900
        %3920 = vmatprep.subr.bf16.mxu0 0
        %3921 = vmatpush1.bf16.msra.mxu0 %v3901
        %3922 = vmatprep.subr.bf16.mxu0 0
        %3923 = vmatpush1.bf16.msra.mxu0 %v3902
        %3924 = vmatprep.subr.bf16.mxu0 0
        %3925 = vmatpush1.bf16.msra.mxu0 %v3903
        %3926 = vmatprep.subr.bf16.mxu0 0
        %3927 = vmatpush1.bf16.msra.mxu0 %v3904
        %3928 = vmatprep.subr.bf16.mxu0 0
        %3929 = vmatpush1.bf16.msra.mxu0 %v3905
        %3930 = vmatprep.subr.bf16.mxu0 0
        %3931 = vmatpush1.bf16.msra.mxu0 0
        %3932 = vmatprep.subr.bf16.mxu0 0
        %3933 = vmatpush1.bf16.msra.mxu0 0
        %3934 = vmatprep.subr.bf16.mxu0 0
        %3935 = vmatpush1.bf16.msra.mxu0 0
        %3936 = vmatprep.subr.bf16.mxu0 0
        %3937 = vmatpush1.bf16.msra.mxu0 0
        %3938 = vmatprep.subr.bf16.mxu0 0
        %3939 = vmatpush1.bf16.msra.mxu0 0
        %3940 = vmatprep.subr.bf16.mxu0 0
        %3941 = vmatpush1.bf16.msra.mxu0 0
        %3942 = vmatprep.subr.bf16.mxu0 0
        %3943 = vmatpush1.bf16.msra.mxu0 0
        %3944 = vmatprep.subr.bf16.mxu0 0
        %3945 = vmatpush1.bf16.msra.mxu0 0
        %3946 = vmatprep.mubr.bf16.mxu0 0
        %3947 = vmatmul.mubr.bf16.gmra.mrb[0].mxu0 %v3820
        %v3948 = vpop.f32.mrb[0].mxu0
        %v3949 = vadd.f32 %v3864, %v3948
        %v3950 = vpop.f32.mrb[0].mxu0
        %v3951 = vpop.f32.mrb[0].mxu0
        %v3952 = vadd.f32 %v3864, %v3951
        %v3953 = vpop.f32.mrb[0].mxu0
        %3954 = vmatprep.mubr.bf16.mxu0 0
        %3955 = vmatmul.mubr.bf16.gmra.mrb[0].mxu0 %v3823
        %v3956 = vpop.f32.mrb[0].mxu0
        %v3957 = vadd.f32 %v3864, %v3956
        %v3958 = vpop.f32.mrb[0].mxu0
        %v3959 = vpop.f32.mrb[0].mxu0
        %v3960 = vadd.f32 %v3864, %v3959
        %v3961 = vpop.f32.mrb[0].mxu0
        %3962 = vmatprep.mubr.bf16.mxu0 0
        %3963 = vmatmul.mubr.bf16.gmra.mrb[0].mxu0 %v3826
        %v3964 = vpop.f32.mrb[0].mxu0
        %v3965 = vadd.f32 %v3864, %v3964
        %v3966 = vpop.f32.mrb[0].mxu0
        %v3967 = vpop.f32.mrb[0].mxu0
        %v3968 = vadd.f32 %v3864, %v3967
        %v3969 = vpop.f32.mrb[0].mxu0
        %3970 = vmatprep.mubr.bf16.mxu0 0
        %3971 = vmatmul.mubr.bf16.gmra.mrb[0].mxu0 %v3829
        %v3972 = vpop.f32.mrb[0].mxu0
        %v3973 = vadd.f32 %v3864, %v3972
        %v3974 = vpop.f32.mrb[0].mxu0
        %v3975 = vpop.f32.mrb[0].mxu0
        %v3976 = vadd.f32 %v3864, %v3975
        %v3977 = vpop.f32.mrb[0].mxu0
        %3978 = vmatprep.mubr.bf16.mxu0 0
        %3979 = vmatmul.mubr.bf16.gmra.mrb[0].mxu0 %v3832
        %v3980 = vpop.f32.mrb[0].mxu0
        %v3981 = vadd.f32 %v3864, %v3980
        %v3982 = vpop.f32.mrb[0].mxu0
        %v3983 = vpop.f32.mrb[0].mxu0
        %v3984 = vadd.f32 %v3864, %v3983
        %v3985 = vpop.f32.mrb[0].mxu0
        %3986 = vmatprep.mubr.bf16.mxu0 0
        %3987 = vmatmul.mubr.bf16.gmra.mrb[0].mxu0 %v3835
        %v3988 = vpop.f32.mrb[0].mxu0
        %v3989 = vadd.f32 %v3864, %v3988
        %v3990 = vpop.f32.mrb[0].mxu0
        %v3991 = vpop.f32.mrb[0].mxu0
        %v3992 = vadd.f32 %v3864, %v3991
        %v3993 = vpop.f32.mrb[0].mxu0
        %3994 = vmatprep.mubr.bf16.mxu0 0
        %3995 = vmatmul.mubr.bf16.gmra.mrb[0].mxu0 %v3838
        %v3996 = vpop.f32.mrb[0].mxu0
        %v3997 = vadd.f32 %v3864, %v3996
        %v3998 = vpop.f32.mrb[0].mxu0
        %v3999 = vpop.f32.mrb[0].mxu0
        %v4000 = vadd.f32 %v3864, %v3999
        %v4001 = vpop.f32.mrb[0].mxu0
        %4002 = vmatprep.mubr.bf16.mxu0 0
        %4003 = vmatmul.mubr.bf16.gmra.mrb[0].mxu0 %v3841
        %v4004 = vpop.f32.mrb[0].mxu0
        %v4005 = vadd.f32 %v3864, %v4004
        %v4006 = vpop.f32.mrb[0].mxu0
        %v4007 = vpop.f32.mrb[0].mxu0
        %v4008 = vadd.f32 %v3864, %v4007
        %v4009 = vpop.f32.mrb[0].mxu0
        %4010 = vdwg.mxu0
        %4011 = vst [vmem:[%s300] sm:$0xff] %v3949
        %4012 = vst [vmem:[%s300 + $0x8] sm:$0xff] %v3952
        %4013 = vst [vmem:[%s300 + $0x10] sm:$0xff] %v3957
        %4014 = vst [vmem:[%s300 + $0x18] sm:$0xff] %v3960
        %4015 = vst [vmem:[%s300 + $0x20] sm:$0xff] %v3965
        %4016 = vst [vmem:[%s300 + $0x28] sm:$0xff] %v3968
        %4017 = vst [vmem:[%s300 + $0x30] sm:$0xff] %v3973
        %4018 = vst [vmem:[%s300 + $0x38] sm:$0xff] %v3976
        %4019 = vst [vmem:[%s300 + $0x40] sm:$0xff] %v3981
        %4020 = vst [vmem:[%s300 + $0x48] sm:$0xff] %v3984
        %4021 = vst [vmem:[%s300 + $0x50] sm:$0xff] %v3989
        %4022 = vst [vmem:[%s300 + $0x58] sm:$0xff] %v3992
        %4023 = vst [vmem:[%s300 + $0x60] sm:$0xff] %v3997
        %4024 = vst [vmem:[%s300 + $0x68] sm:$0xff] %v4000
        %4025 = vst [vmem:[%s300 + $0x70] sm:$0xff] %v4005
        %4026 = vst [vmem:[%s300 + $0x78] sm:$0xff] %v4008
        %s4027 = sand.u32 %s156, 1
        %s4028 = scalar_lea.sflag [#allocation6], %s4027
        %s4029 = sand.u32 %s156, 1
        %s4030 = smul.addr %s4029, 128
        %s4031 = scalar_lea.vmem [#allocation12], %s4030
        // Predicated region
        $region61: #{tpu_custom_call.1} parent=39 // pred_check
          %p4032 = pneg %p166
        $region62: #{tpu_custom_call.1} parent=39 // pred_check_branch
          %4034 = sbr.rel (%p4032) target = $region64
        $region63: #{tpu_custom_call.1} parent=39 // pred_region
          %s4035 = smul.u32 16, %s29
          %s4037 = ssub.s32 2048, 2048
          %4038 = vsyncadd %s4028, %s4037
          %s4039 = smul.addr %s28, 32
          %s4040 = sadd.s32 %s4035, %s4039
          %s4041 = smul.addr %s4040, 128
          %s4042 = scalar_lea.hbm %s5, %s4041
          %s4043 = sshll.u32 %s4031, 4
          %s4044 = int_to_ptr.vmem [resolvable:$true] %s4043
          %4049 = dma.vmem_to_hbm [thread:$0]  %s4044, 2048, %s4042, %s4028, 128, 128, 8
        $region64: #{tpu_custom_call.1} parent=39 // pred_fallthru
          _
      $region40: #{tpu_custom_call.1} parent=5 // pred_fallthru
        _
      %p4050 = scmp.le.s32.totalorder 2, %s19
      // Predicated region
      $region65: #{tpu_custom_call.1} parent=5 // pred_check
        %p4051 = pneg %p4050
      $region66: #{tpu_custom_call.1} parent=5 // pred_check_branch
        %4053 = sbr.rel (%p4051) target = $region68
      $region67: #{tpu_custom_call.1} parent=5 // pred_region
        %s4054 = ssub.s32 %s19, 2
        // Predicated region
        $region69: #{tpu_custom_call.1} parent=67 // pred_check
          %p4055 = pneg %p172
        $region70: #{tpu_custom_call.1} parent=67 // pred_check_branch
          %4057 = sbr.rel (%p4055) target = $region72
        $region71: #{tpu_custom_call.1} parent=67 // pred_region
          %s4058 = sand.u32 %s157, 1
          %s4059 = scalar_lea.sflag [#allocation6], %s4058
          %s4060 = sand.u32 %s157, 1
          %s4061 = smul.addr %s4060, 128
          %s4062 = scalar_lea.vmem [#allocation12], %s4061
          %4063 = dma.done %s4059, 2048
        $region72: #{tpu_custom_call.1} parent=67 // pred_fallthru
          _
      $region68: #{tpu_custom_call.1} parent=5 // pred_fallthru
        _
    $region6: #{tpu_custom_call.1} parent=1 // loop_footer
      %s23 = sadd.s32 1, %s19
    $region7: #{tpu_custom_call.1} parent=1 // loop_footer_branch
      %18 = sbr.rel target = $region3
    $region8: #{tpu_custom_call.1} parent=1 // loop_exit
      _
    %4064 = vsyncpa [#allocation5], 1
    %s4065 = scalar_lea.sflag [#allocation5], 1
    %4066 = vsyncpa %s4065, 1
    %4067 = vsyncpa [#allocation8], 1
    %4068 = vsyncpa [#allocation11], 1
    %4069 = vsyncpa [#allocation6], 1
    %s4070 = scalar_lea.sflag [#allocation6], 1
    %4071 = vsyncpa %s4070, 1

</llo_original>
